<compile_context>
chip_gen: v6e
topology: v6e:2x2x1
jax: 0.10.0
libtpu: 0.0.40
codegen_flags: <defaults>
</compile_context>

<pallas_src>
import functools

import jax
import jax.numpy as jnp
from jax import lax
from jax.experimental import pallas as pl
from jax.experimental.pallas import tpu as pltpu

EPS = 1e-5
LANES = 128


def _round_up(x, m):
    return (x + m - 1) // m * m


def _residual_block_kernel(x_ref, w1_ref, t1_ref, w2_ref, t2_ref, wp_ref, tp_ref,
                           o_ref, xpad_scr, mid_scr):
    _, H, W, Cpi = x_ref.shape
    Cpo = o_ref.shape[-1]

    def zero_halo(scr, c):
        # Zero only the 1-pixel halo ring. Re-done every grid step so the kernel is
        # megacore-safe (each TensorCore has its own scratch under "parallel").
        zrow = jnp.zeros((1, 1, W + 2, c), jnp.float32)
        zcol = jnp.zeros((1, H, 1, c), jnp.float32)
        scr[:, 0:1, :, :] = zrow
        scr[:, H + 1:H + 2, :, :] = zrow
        scr[:, 1:H + 1, 0:1, :] = zcol
        scr[:, 1:H + 1, W + 1:W + 2, :] = zcol

    def conv3x3(scr, w_ref):
        # im2col: single (H*W, 9*C) x (9*C, Cpo) matmul on the MXU, f32 accumulation.
        xp = scr[...]
        c = xp.shape[-1]
        taps = [xp[:, kh:kh + H, kw:kw + W, :] for kh in range(3) for kw in range(3)]
        patches = jnp.concatenate(taps, axis=-1).reshape(H * W, 9 * c)
        return jnp.dot(patches.astype(w_ref.dtype), w_ref[...],
                       preferred_element_type=jnp.float32)

    # ---- conv1 (BN1 scale pre-folded into w1) + shift + ReLU ------------------------
    zero_halo(xpad_scr, Cpi)
    xpad_scr[:, 1:H + 1, 1:W + 1, :] = x_ref[...]
    out1 = jnp.maximum(conv3x3(xpad_scr, w1_ref) + t1_ref[...], 0.0)

    # ---- conv2 (BN2 scale pre-folded into w2) + shift -------------------------------
    zero_halo(mid_scr, Cpo)
    mid_scr[:, 1:H + 1, 1:W + 1, :] = out1.reshape(1, H, W, Cpo)   # direct interior write
    out2 = conv3x3(mid_scr, w2_ref) + t2_ref[...]

    # ---- 1x1 projection (BNp scale pre-folded into wp) on the original input --------
    x_in = x_ref[...].reshape(H * W, Cpi)
    res = jnp.dot(x_in.astype(wp_ref.dtype), wp_ref[...],
                  preferred_element_type=jnp.float32) + tp_ref[...]

    # ---- residual add + final ReLU; Cpo is a multiple of 128 -> lane-dense store ----
    o_ref[...] = jnp.maximum(out2 + res, 0.0).reshape(1, H, W, Cpo)


def _bn_scale_shift(gamma, beta, mean, var, conv_bias):
    scale = gamma / jnp.sqrt(var + EPS)
    shift = beta + scale * (conv_bias - mean)
    return scale.astype(jnp.float32), shift.astype(jnp.float32)


@functools.partial(jax.jit, static_argnames=("matmul_dtype",))
def residual_block(x_nchw, p, *, matmul_dtype=jnp.float32):
    """ResidualBlock forward. x_nchw is (N, Cin, H, W), like the PyTorch module."""
    x = jnp.transpose(x_nchw, (0, 2, 3, 1)).astype(jnp.float32)          # -> NHWC
    N, H, W, Cin = x.shape
    Cout = p["w1"].shape[-1]
    Cpi = _round_up(Cin, LANES)
    Cpo = _round_up(Cout, LANES)

    s1, t1 = _bn_scale_shift(p["bn1_g"], p["bn1_b"], p["bn1_m"], p["bn1_v"], p["b1"])
    s2, t2 = _bn_scale_shift(p["bn2_g"], p["bn2_b"], p["bn2_m"], p["bn2_v"], p["b2"])

    def fold_pad_3x3(w, scale, cin, cpi):
        # fold BN scale over Cout, zero-pad channels, im2col layout (kh,kw,cin) x cout.
        wf = w.astype(jnp.float32) * scale[None, None, None, :]
        wf = jnp.pad(wf, ((0, 0), (0, 0), (0, cpi - cin), (0, Cpo - Cout)))
        return wf.reshape(9 * cpi, Cpo).astype(matmul_dtype)

    w1 = fold_pad_3x3(p["w1"], s1, Cin, Cpi)                             # (9*Cpi, Cpo)
    w2 = fold_pad_3x3(p["w2"], s2, Cout, Cpo)                            # (9*Cpo, Cpo)

    if p.get("wp", None) is not None:                                    # 1x1 projection
        sp, tp = _bn_scale_shift(p["bnp_g"], p["bnp_b"], p["bnp_m"], p["bnp_v"], p["bp"])
        wp = p["wp"].astype(jnp.float32) * sp[None, :]
    else:                                                                # identity skip
        wp = jnp.eye(Cin, dtype=jnp.float32)
        tp = jnp.zeros((Cout,), jnp.float32)
    wp = jnp.pad(wp, ((0, Cpi - Cin), (0, Cpo - Cout))).astype(matmul_dtype)

    pad_c = lambda t: jnp.pad(t, (0, Cpo - Cout)).reshape(1, Cpo)        # pad shifts w/ 0
    t1, t2, tp = pad_c(t1), pad_c(t2), pad_c(tp)

    x_p = jnp.pad(x, ((0, 0), (0, 0), (0, 0), (0, Cpi - Cin)))           # lane-dense input

    grid_spec = pltpu.PrefetchScalarGridSpec(
        num_scalar_prefetch=0,
        grid=(N,),                                                       # one image / step
        in_specs=[
            pl.BlockSpec((1, H, W, Cpi), lambda n: (n, 0, 0, 0)),
            pl.BlockSpec((9 * Cpi, Cpo), lambda n: (0, 0)),
            pl.BlockSpec((1, Cpo), lambda n: (0, 0)),
            pl.BlockSpec((9 * Cpo, Cpo), lambda n: (0, 0)),
            pl.BlockSpec((1, Cpo), lambda n: (0, 0)),
            pl.BlockSpec((Cpi, Cpo), lambda n: (0, 0)),
            pl.BlockSpec((1, Cpo), lambda n: (0, 0)),
        ],
        out_specs=pl.BlockSpec((1, H, W, Cpo), lambda n: (n, 0, 0, 0)),
        scratch_shapes=[
            pltpu.VMEM((1, H + 2, W + 2, Cpi), jnp.float32),             # padded input
            pltpu.VMEM((1, H + 2, W + 2, Cpo), jnp.float32),             # padded conv1 out
        ],
    )
    out_p = pl.pallas_call(
        _residual_block_kernel,
        out_shape=jax.ShapeDtypeStruct((N, H, W, Cpo), jnp.float32),
        grid_spec=grid_spec,
        compiler_params=pltpu.CompilerParams(
            dimension_semantics=("parallel",),      # batch axis -> both TCs on v7x
            vmem_limit_bytes=64 * 1024 * 1024),     # explicit, <= v7x physical VMEM
    )(x_p, w1, t1, w2, t2, wp, tp)

    out = out_p[..., :Cout]                                              # drop pad lanes
    return jnp.transpose(out, (0, 3, 1, 2))                              # -> NCHW


# ----------------------------- pure-JAX reference (f32) --------------------------------
def reference(x_nchw, p):
    x = jnp.transpose(x_nchw, (0, 2, 3, 1)).astype(jnp.float32)
    Cin, Cout = p["w1"].shape[2], p["w1"].shape[3]

    def conv(inp, w, b, pad):
        y = lax.conv_general_dilated(inp, w, (1, 1), pad,
                                     dimension_numbers=("NHWC", "HWIO", "NHWC"))
        return y + b.reshape(1, 1, 1, -1)

    def bn(y, g, b, m, v):
        return (y - m) / jnp.sqrt(v + EPS) * g + b

    out = conv(x, p["w1"], p["b1"], ((1, 1), (1, 1)))
    out = jnp.maximum(bn(out, p["bn1_g"], p["bn1_b"], p["bn1_m"], p["bn1_v"]), 0.0)
    out = conv(out, p["w2"], p["b2"], ((1, 1), (1, 1)))
    out = bn(out, p["bn2_g"], p["bn2_b"], p["bn2_m"], p["bn2_v"])
    res = conv(x, p["wp"].reshape(1, 1, Cin, Cout), p["bp"], ((0, 0), (0, 0)))
    res = bn(res, p["bnp_g"], p["bnp_b"], p["bnp_m"], p["bnp_v"])
    out = jnp.maximum(out + res, 0.0)
    return jnp.transpose(out, (0, 3, 1, 2))


def make_params(key, cin, cout):
    ks = jax.random.split(key, 16)
    u = lambda k, s, lo=-0.5, hi=0.5: jax.random.uniform(k, s, jnp.float32, lo, hi)
    return {
        "w1": u(ks[0], (3, 3, cin, cout)),
        "b1": u(ks[1], (cout,)),
        "bn1_g": u(ks[2], (cout,), 0.5, 1.5),
        "bn1_b": u(ks[3], (cout,)),
        "bn1_m": u(ks[4], (cout,)),
        "bn1_v": u(ks[5], (cout,), 0.5, 1.5),
        "w2": u(ks[6], (3, 3, cout, cout)),
        "b2": u(ks[7], (cout,)),
        "bn2_g": u(ks[8], (cout,), 0.5, 1.5),
        "bn2_b": u(ks[9], (cout,)),
        "bn2_m": u(ks[10], (cout,)),
        "bn2_v": u(ks[11], (cout,), 0.5, 1.5),
        "wp": u(ks[12], (cin, cout)),
        "bp": u(ks[13], (cout,)),
        "bnp_g": u(ks[14], (cout,), 0.5, 1.5),
        "bnp_b": u(ks[15], (cout,)),
        "bnp_m": jnp.linspace(-0.2, 0.2, cout, dtype=jnp.float32),
        "bnp_v": jnp.linspace(0.6, 1.4, cout, dtype=jnp.float32),
    }


if __name__ == "__main__":
    key = jax.random.PRNGKey(0)
    k_x, k_p = jax.random.split(key)
    N, Cin, Cout, H, W = 2, 4, 8, 16, 16
    x = jax.random.normal(k_x, (N, Cin, H, W), jnp.float32)   # NCHW, like PyTorch
    params = make_params(k_p, Cin, Cout)

    ref = jax.block_until_ready(reference(x, params))

    # f32 MXU operands: strict parity with the PyTorch-style reference.
    out = jax.block_until_ready(residual_block(x, params))
    assert out.shape == (N, Cout, H, W)
    assert jnp.allclose(out, ref, atol=1e-3, rtol=1e-3), float(jnp.abs(out - ref).max())

    # bf16 MXU operands (native MXU rate); loose tolerance is inherent to bf16 operands.
    out_bf16 = jax.block_until_ready(residual_block(x, params, matmul_dtype=jnp.bfloat16))
    assert out_bf16.shape == (N, Cout, H, W)
    assert jnp.allclose(out_bf16, ref, atol=5e-1, rtol=1e-1), \
        float(jnp.abs(out_bf16 - ref).max())

    print("KERNEL_OK")
</pallas_src>

<mosaic_0001>
module attributes {stable_mosaic.version = 11 : i64} {
  func.func @_residual_block_kernel(%arg0: i32, %arg1: memref<1x16x16x128xf32, #tpu.memory_space<vmem>>, %arg2: memref<1152x128xf32, #tpu.memory_space<vmem>>, %arg3: memref<1x128xf32, #tpu.memory_space<vmem>>, %arg4: memref<1152x128xf32, #tpu.memory_space<vmem>>, %arg5: memref<1x128xf32, #tpu.memory_space<vmem>>, %arg6: memref<128x128xf32, #tpu.memory_space<vmem>>, %arg7: memref<1x128xf32, #tpu.memory_space<vmem>>, %arg8: memref<1x16x16x128xf32, #tpu.memory_space<vmem>>, %arg9: memref<1x18x18x128xf32, #tpu.memory_space<vmem>>, %arg10: memref<1x18x18x128xf32, #tpu.memory_space<vmem>>) attributes {dimension_semantics = [#tpu.dimension_semantics<parallel>], iteration_bounds = array<i64: 2>, scalar_prefetch = 0 : i64, scratch_operands = 2 : i64, tpu.core_type = #tpu.core_type<tc>, window_params = [{transform_indices = @transform_0, window_bounds = array<i64: 1, 16, 16, 128>}, {pipeline_mode = #tpu.pipeline_mode<synchronous>, transform_indices = @transform_1, window_bounds = array<i64: 1152, 128>}, {pipeline_mode = #tpu.pipeline_mode<synchronous>, transform_indices = @transform_2, window_bounds = array<i64: 1, 128>}, {pipeline_mode = #tpu.pipeline_mode<synchronous>, transform_indices = @transform_3, window_bounds = array<i64: 1152, 128>}, {pipeline_mode = #tpu.pipeline_mode<synchronous>, transform_indices = @transform_4, window_bounds = array<i64: 1, 128>}, {pipeline_mode = #tpu.pipeline_mode<synchronous>, transform_indices = @transform_5, window_bounds = array<i64: 128, 128>}, {pipeline_mode = #tpu.pipeline_mode<synchronous>, transform_indices = @transform_6, window_bounds = array<i64: 1, 128>}, {transform_indices = @transform_7, window_bounds = array<i64: 1, 16, 16, 128>}]} {
    %cst = arith.constant 0.000000e+00 : f32
    %0 = vector.broadcast %cst : f32 to vector<1x1x18x128xf32>
    %cst_0 = arith.constant 0.000000e+00 : f32
    %1 = vector.broadcast %cst_0 : f32 to vector<1x16x1x128xf32>
    %c0 = arith.constant 0 : index
    %c0_1 = arith.constant 0 : index
    %c0_2 = arith.constant 0 : index
    %c0_3 = arith.constant 0 : index
    %2 = vector.load %arg9[%c0, %c0_1, %c0_2, %c0_3] : memref<1x18x18x128xf32, #tpu.memory_space<vmem>>, vector<1x1x18x128xf32>
    tpu.vector_store %arg9[%c0, %c0_1, %c0_2, %c0_3], %0 {strides = array<i32>} : memref<1x18x18x128xf32, #tpu.memory_space<vmem>>, vector<1x1x18x128xf32>,
    %c0_4 = arith.constant 0 : index
    %c17 = arith.constant 17 : index
    %c0_5 = arith.constant 0 : index
    %c0_6 = arith.constant 0 : index
    %3 = vector.load %arg9[%c0_4, %c17, %c0_5, %c0_6] : memref<1x18x18x128xf32, #tpu.memory_space<vmem>>, vector<1x1x18x128xf32>
    tpu.vector_store %arg9[%c0_4, %c17, %c0_5, %c0_6], %0 {strides = array<i32>} : memref<1x18x18x128xf32, #tpu.memory_space<vmem>>, vector<1x1x18x128xf32>,
    %c0_7 = arith.constant 0 : index
    %c1 = arith.constant 1 : index
    %c0_8 = arith.constant 0 : index
    %c0_9 = arith.constant 0 : index
    %4 = vector.load %arg9[%c0_7, %c1, %c0_8, %c0_9] : memref<1x18x18x128xf32, #tpu.memory_space<vmem>>, vector<1x16x1x128xf32>
    tpu.vector_store %arg9[%c0_7, %c1, %c0_8, %c0_9], %1 {strides = array<i32>} : memref<1x18x18x128xf32, #tpu.memory_space<vmem>>, vector<1x16x1x128xf32>,
    %c0_10 = arith.constant 0 : index
    %c1_11 = arith.constant 1 : index
    %c17_12 = arith.constant 17 : index
    %c0_13 = arith.constant 0 : index
    %5 = vector.load %arg9[%c0_10, %c1_11, %c17_12, %c0_13] : memref<1x18x18x128xf32, #tpu.memory_space<vmem>>, vector<1x16x1x128xf32>
    tpu.vector_store %arg9[%c0_10, %c1_11, %c17_12, %c0_13], %1 {strides = array<i32>} : memref<1x18x18x128xf32, #tpu.memory_space<vmem>>, vector<1x16x1x128xf32>,
    %c0_14 = arith.constant 0 : index
    %c0_15 = arith.constant 0 : index
    %c0_16 = arith.constant 0 : index
    %c0_17 = arith.constant 0 : index
    %6 = vector.load %arg1[%c0_14, %c0_15, %c0_16, %c0_17] : memref<1x16x16x128xf32, #tpu.memory_space<vmem>>, vector<1x16x16x128xf32>
    %c0_18 = arith.constant 0 : index
    %c1_19 = arith.constant 1 : index
    %c1_20 = arith.constant 1 : index
    %c0_21 = arith.constant 0 : index
    %7 = vector.load %arg9[%c0_18, %c1_19, %c1_20, %c0_21] : memref<1x18x18x128xf32, #tpu.memory_space<vmem>>, vector<1x16x16x128xf32>
    tpu.vector_store %arg9[%c0_18, %c1_19, %c1_20, %c0_21], %6 {strides = array<i32>} : memref<1x18x18x128xf32, #tpu.memory_space<vmem>>, vector<1x16x16x128xf32>,
    %c0_22 = arith.constant 0 : index
    %c0_23 = arith.constant 0 : index
    %c0_24 = arith.constant 0 : index
    %c0_25 = arith.constant 0 : index
    %8 = vector.load %arg9[%c0_22, %c0_23, %c0_24, %c0_25] : memref<1x18x18x128xf32, #tpu.memory_space<vmem>>, vector<1x18x18x128xf32>
    %9 = vector.extract_strided_slice %8 {offsets = [0, 0, 0, 0], sizes = [1, 16, 16, 128], strides = [1, 1, 1, 1]} : vector<1x18x18x128xf32> to vector<1x16x16x128xf32>
    %10 = vector.extract_strided_slice %8 {offsets = [0, 0, 1, 0], sizes = [1, 16, 16, 128], strides = [1, 1, 1, 1]} : vector<1x18x18x128xf32> to vector<1x16x16x128xf32>
    %11 = vector.extract_strided_slice %8 {offsets = [0, 0, 2, 0], sizes = [1, 16, 16, 128], strides = [1, 1, 1, 1]} : vector<1x18x18x128xf32> to vector<1x16x16x128xf32>
    %12 = vector.extract_strided_slice %8 {offsets = [0, 1, 0, 0], sizes = [1, 16, 16, 128], strides = [1, 1, 1, 1]} : vector<1x18x18x128xf32> to vector<1x16x16x128xf32>
    %13 = vector.extract_strided_slice %8 {offsets = [0, 1, 1, 0], sizes = [1, 16, 16, 128], strides = [1, 1, 1, 1]} : vector<1x18x18x128xf32> to vector<1x16x16x128xf32>
    %14 = vector.extract_strided_slice %8 {offsets = [0, 1, 2, 0], sizes = [1, 16, 16, 128], strides = [1, 1, 1, 1]} : vector<1x18x18x128xf32> to vector<1x16x16x128xf32>
    %15 = vector.extract_strided_slice %8 {offsets = [0, 2, 0, 0], sizes = [1, 16, 16, 128], strides = [1, 1, 1, 1]} : vector<1x18x18x128xf32> to vector<1x16x16x128xf32>
    %16 = vector.extract_strided_slice %8 {offsets = [0, 2, 1, 0], sizes = [1, 16, 16, 128], strides = [1, 1, 1, 1]} : vector<1x18x18x128xf32> to vector<1x16x16x128xf32>
    %17 = vector.extract_strided_slice %8 {offsets = [0, 2, 2, 0], sizes = [1, 16, 16, 128], strides = [1, 1, 1, 1]} : vector<1x18x18x128xf32> to vector<1x16x16x128xf32>
    %18 = tpu.concatenate %9, %10, %11, %12, %13, %14, %15, %16, %17 in 3 : vector<1x16x16x128xf32>, vector<1x16x16x128xf32>, vector<1x16x16x128xf32>, vector<1x16x16x128xf32>, vector<1x16x16x128xf32>, vector<1x16x16x128xf32>, vector<1x16x16x128xf32>, vector<1x16x16x128xf32>, vector<1x16x16x128xf32> -> vector<1x16x16x1152xf32>
    %19 = vector.shape_cast %18 : vector<1x16x16x1152xf32> to vector<256x1152xf32>
    %c0_26 = arith.constant 0 : index
    %c0_27 = arith.constant 0 : index
    %20 = vector.load %arg2[%c0_26, %c0_27] : memref<1152x128xf32, #tpu.memory_space<vmem>>, vector<1152x128xf32>
    %cst_28 = arith.constant dense<0.000000e+00> : vector<256x128xf32>
    %21 = tpu.matmul %19, %20, %cst_28 {dimension_numbers = #tpu.dot_dimension_numbers<[1], [0], [0], [1], [0, 0, 1, 1], [], []>} : vector<256x1152xf32>, vector<1152x128xf32>, vector<256x128xf32> -> vector<256x128xf32>
    %c0_29 = arith.constant 0 : index
    %c0_30 = arith.constant 0 : index
    %22 = vector.load %arg3[%c0_29, %c0_30] : memref<1x128xf32, #tpu.memory_space<vmem>>, vector<1x128xf32>
    %23 = vector.broadcast %22 : vector<1x128xf32> to vector<256x128xf32>
    %24 = arith.addf %21, %23 : vector<256x128xf32>
    %cst_31 = arith.constant 0.000000e+00 : f32
    %25 = vector.broadcast %cst_31 : f32 to vector<256x128xf32>
    %26 = arith.maximumf %24, %25 : vector<256x128xf32>
    %cst_32 = arith.constant 0.000000e+00 : f32
    %27 = vector.broadcast %cst_32 : f32 to vector<1x1x18x128xf32>
    %cst_33 = arith.constant 0.000000e+00 : f32
    %28 = vector.broadcast %cst_33 : f32 to vector<1x16x1x128xf32>
    %c0_34 = arith.constant 0 : index
    %c0_35 = arith.constant 0 : index
    %c0_36 = arith.constant 0 : index
    %c0_37 = arith.constant 0 : index
    %29 = vector.load %arg10[%c0_34, %c0_35, %c0_36, %c0_37] : memref<1x18x18x128xf32, #tpu.memory_space<vmem>>, vector<1x1x18x128xf32>
    tpu.vector_store %arg10[%c0_34, %c0_35, %c0_36, %c0_37], %27 {strides = array<i32>} : memref<1x18x18x128xf32, #tpu.memory_space<vmem>>, vector<1x1x18x128xf32>,
    %c0_38 = arith.constant 0 : index
    %c17_39 = arith.constant 17 : index
    %c0_40 = arith.constant 0 : index
    %c0_41 = arith.constant 0 : index
    %30 = vector.load %arg10[%c0_38, %c17_39, %c0_40, %c0_41] : memref<1x18x18x128xf32, #tpu.memory_space<vmem>>, vector<1x1x18x128xf32>
    tpu.vector_store %arg10[%c0_38, %c17_39, %c0_40, %c0_41], %27 {strides = array<i32>} : memref<1x18x18x128xf32, #tpu.memory_space<vmem>>, vector<1x1x18x128xf32>,
    %c0_42 = arith.constant 0 : index
    %c1_43 = arith.constant 1 : index
    %c0_44 = arith.constant 0 : index
    %c0_45 = arith.constant 0 : index
    %31 = vector.load %arg10[%c0_42, %c1_43, %c0_44, %c0_45] : memref<1x18x18x128xf32, #tpu.memory_space<vmem>>, vector<1x16x1x128xf32>
    tpu.vector_store %arg10[%c0_42, %c1_43, %c0_44, %c0_45], %28 {strides = array<i32>} : memref<1x18x18x128xf32, #tpu.memory_space<vmem>>, vector<1x16x1x128xf32>,
    %c0_46 = arith.constant 0 : index
    %c1_47 = arith.constant 1 : index
    %c17_48 = arith.constant 17 : index
    %c0_49 = arith.constant 0 : index
    %32 = vector.load %arg10[%c0_46, %c1_47, %c17_48, %c0_49] : memref<1x18x18x128xf32, #tpu.memory_space<vmem>>, vector<1x16x1x128xf32>
    tpu.vector_store %arg10[%c0_46, %c1_47, %c17_48, %c0_49], %28 {strides = array<i32>} : memref<1x18x18x128xf32, #tpu.memory_space<vmem>>, vector<1x16x1x128xf32>,
    %33 = vector.shape_cast %26 : vector<256x128xf32> to vector<1x16x16x128xf32>
    %c0_50 = arith.constant 0 : index
    %c1_51 = arith.constant 1 : index
    %c1_52 = arith.constant 1 : index
    %c0_53 = arith.constant 0 : index
    %34 = vector.load %arg10[%c0_50, %c1_51, %c1_52, %c0_53] : memref<1x18x18x128xf32, #tpu.memory_space<vmem>>, vector<1x16x16x128xf32>
    tpu.vector_store %arg10[%c0_50, %c1_51, %c1_52, %c0_53], %33 {strides = array<i32>} : memref<1x18x18x128xf32, #tpu.memory_space<vmem>>, vector<1x16x16x128xf32>,
    %c0_54 = arith.constant 0 : index
    %c0_55 = arith.constant 0 : index
    %c0_56 = arith.constant 0 : index
    %c0_57 = arith.constant 0 : index
    %35 = vector.load %arg10[%c0_54, %c0_55, %c0_56, %c0_57] : memref<1x18x18x128xf32, #tpu.memory_space<vmem>>, vector<1x18x18x128xf32>
    %36 = vector.extract_strided_slice %35 {offsets = [0, 0, 0, 0], sizes = [1, 16, 16, 128], strides = [1, 1, 1, 1]} : vector<1x18x18x128xf32> to vector<1x16x16x128xf32>
    %37 = vector.extract_strided_slice %35 {offsets = [0, 0, 1, 0], sizes = [1, 16, 16, 128], strides = [1, 1, 1, 1]} : vector<1x18x18x128xf32> to vector<1x16x16x128xf32>
    %38 = vector.extract_strided_slice %35 {offsets = [0, 0, 2, 0], sizes = [1, 16, 16, 128], strides = [1, 1, 1, 1]} : vector<1x18x18x128xf32> to vector<1x16x16x128xf32>
    %39 = vector.extract_strided_slice %35 {offsets = [0, 1, 0, 0], sizes = [1, 16, 16, 128], strides = [1, 1, 1, 1]} : vector<1x18x18x128xf32> to vector<1x16x16x128xf32>
    %40 = vector.extract_strided_slice %35 {offsets = [0, 1, 1, 0], sizes = [1, 16, 16, 128], strides = [1, 1, 1, 1]} : vector<1x18x18x128xf32> to vector<1x16x16x128xf32>
    %41 = vector.extract_strided_slice %35 {offsets = [0, 1, 2, 0], sizes = [1, 16, 16, 128], strides = [1, 1, 1, 1]} : vector<1x18x18x128xf32> to vector<1x16x16x128xf32>
    %42 = vector.extract_strided_slice %35 {offsets = [0, 2, 0, 0], sizes = [1, 16, 16, 128], strides = [1, 1, 1, 1]} : vector<1x18x18x128xf32> to vector<1x16x16x128xf32>
    %43 = vector.extract_strided_slice %35 {offsets = [0, 2, 1, 0], sizes = [1, 16, 16, 128], strides = [1, 1, 1, 1]} : vector<1x18x18x128xf32> to vector<1x16x16x128xf32>
    %44 = vector.extract_strided_slice %35 {offsets = [0, 2, 2, 0], sizes = [1, 16, 16, 128], strides = [1, 1, 1, 1]} : vector<1x18x18x128xf32> to vector<1x16x16x128xf32>
    %45 = tpu.concatenate %36, %37, %38, %39, %40, %41, %42, %43, %44 in 3 : vector<1x16x16x128xf32>, vector<1x16x16x128xf32>, vector<1x16x16x128xf32>, vector<1x16x16x128xf32>, vector<1x16x16x128xf32>, vector<1x16x16x128xf32>, vector<1x16x16x128xf32>, vector<1x16x16x128xf32>, vector<1x16x16x128xf32> -> vector<1x16x16x1152xf32>
    %46 = vector.shape_cast %45 : vector<1x16x16x1152xf32> to vector<256x1152xf32>
    %c0_58 = arith.constant 0 : index
    %c0_59 = arith.constant 0 : index
    %47 = vector.load %arg4[%c0_58, %c0_59] : memref<1152x128xf32, #tpu.memory_space<vmem>>, vector<1152x128xf32>
    %cst_60 = arith.constant dense<0.000000e+00> : vector<256x128xf32>
    %48 = tpu.matmul %46, %47, %cst_60 {dimension_numbers = #tpu.dot_dimension_numbers<[1], [0], [0], [1], [0, 0, 1, 1], [], []>} : vector<256x1152xf32>, vector<1152x128xf32>, vector<256x128xf32> -> vector<256x128xf32>
    %c0_61 = arith.constant 0 : index
    %c0_62 = arith.constant 0 : index
    %49 = vector.load %arg5[%c0_61, %c0_62] : memref<1x128xf32, #tpu.memory_space<vmem>>, vector<1x128xf32>
    %50 = vector.broadcast %49 : vector<1x128xf32> to vector<256x128xf32>
    %51 = arith.addf %48, %50 : vector<256x128xf32>
    %c0_63 = arith.constant 0 : index
    %c0_64 = arith.constant 0 : index
    %c0_65 = arith.constant 0 : index
    %c0_66 = arith.constant 0 : index
    %52 = vector.load %arg1[%c0_63, %c0_64, %c0_65, %c0_66] : memref<1x16x16x128xf32, #tpu.memory_space<vmem>>, vector<1x16x16x128xf32>
    %53 = vector.shape_cast %52 : vector<1x16x16x128xf32> to vector<256x128xf32>
    %c0_67 = arith.constant 0 : index
    %c0_68 = arith.constant 0 : index
    %54 = vector.load %arg6[%c0_67, %c0_68] : memref<128x128xf32, #tpu.memory_space<vmem>>, vector<128x128xf32>
    %cst_69 = arith.constant dense<0.000000e+00> : vector<256x128xf32>
    %55 = tpu.matmul %53, %54, %cst_69 {dimension_numbers = #tpu.dot_dimension_numbers<[1], [0], [0], [1], [0, 0, 1, 1], [], []>} : vector<256x128xf32>, vector<128x128xf32>, vector<256x128xf32> -> vector<256x128xf32>
    %c0_70 = arith.constant 0 : index
    %c0_71 = arith.constant 0 : index
    %56 = vector.load %arg7[%c0_70, %c0_71] : memref<1x128xf32, #tpu.memory_space<vmem>>, vector<1x128xf32>
    %57 = vector.broadcast %56 : vector<1x128xf32> to vector<256x128xf32>
    %58 = arith.addf %55, %57 : vector<256x128xf32>
    %59 = arith.addf %51, %58 : vector<256x128xf32>
    %cst_72 = arith.constant 0.000000e+00 : f32
    %60 = vector.broadcast %cst_72 : f32 to vector<256x128xf32>
    %61 = arith.maximumf %59, %60 : vector<256x128xf32>
    %62 = vector.shape_cast %61 : vector<256x128xf32> to vector<1x16x16x128xf32>
    %c0_73 = arith.constant 0 : index
    %c0_74 = arith.constant 0 : index
    %c0_75 = arith.constant 0 : index
    %c0_76 = arith.constant 0 : index
    %63 = vector.load %arg8[%c0_73, %c0_74, %c0_75, %c0_76] : memref<1x16x16x128xf32, #tpu.memory_space<vmem>>, vector<1x16x16x128xf32>
    tpu.vector_store %arg8[%c0_73, %c0_74, %c0_75, %c0_76], %62 {strides = array<i32>} : memref<1x16x16x128xf32, #tpu.memory_space<vmem>>, vector<1x16x16x128xf32>,
    return
  }
  func.func @transform_0(%arg0: i32) -> (i32, i32, i32, i32) {
    %c0_i32 = arith.constant 0 : i32
    %c0_i32_0 = arith.constant 0 : i32
    %c0_i32_1 = arith.constant 0 : i32
    %c0_i32_2 = arith.constant 0 : i32
    return %arg0, %c0_i32, %c0_i32_0, %c0_i32_1 : i32, i32, i32, i32
  }
  func.func @transform_1(%arg0: i32) -> (i32, i32) {
    %c0_i32 = arith.constant 0 : i32
    %c0_i32_0 = arith.constant 0 : i32
    %c0_i32_1 = arith.constant 0 : i32
    return %c0_i32, %c0_i32_0 : i32, i32
  }
  func.func @transform_2(%arg0: i32) -> (i32, i32) {
    %c0_i32 = arith.constant 0 : i32
    %c0_i32_0 = arith.constant 0 : i32
    %c0_i32_1 = arith.constant 0 : i32
    return %c0_i32, %c0_i32_0 : i32, i32
  }
  func.func @transform_3(%arg0: i32) -> (i32, i32) {
    %c0_i32 = arith.constant 0 : i32
    %c0_i32_0 = arith.constant 0 : i32
    %c0_i32_1 = arith.constant 0 : i32
    return %c0_i32, %c0_i32_0 : i32, i32
  }
  func.func @transform_4(%arg0: i32) -> (i32, i32) {
    %c0_i32 = arith.constant 0 : i32
    %c0_i32_0 = arith.constant 0 : i32
    %c0_i32_1 = arith.constant 0 : i32
    return %c0_i32, %c0_i32_0 : i32, i32
  }
  func.func @transform_5(%arg0: i32) -> (i32, i32) {
    %c0_i32 = arith.constant 0 : i32
    %c0_i32_0 = arith.constant 0 : i32
    %c0_i32_1 = arith.constant 0 : i32
    return %c0_i32, %c0_i32_0 : i32, i32
  }
  func.func @transform_6(%arg0: i32) -> (i32, i32) {
    %c0_i32 = arith.constant 0 : i32
    %c0_i32_0 = arith.constant 0 : i32
    %c0_i32_1 = arith.constant 0 : i32
    return %c0_i32, %c0_i32_0 : i32, i32
  }
  func.func @transform_7(%arg0: i32) -> (i32, i32, i32, i32) {
    %c0_i32 = arith.constant 0 : i32
    %c0_i32_0 = arith.constant 0 : i32
    %c0_i32_1 = arith.constant 0 : i32
    %c0_i32_2 = arith.constant 0 : i32
    return %arg0, %c0_i32, %c0_i32_0, %c0_i32_1 : i32, i32, i32, i32
  }
}

</mosaic_0001>

<llo_original>
// kernel: residual_block.1
$region0: #{residual_block.1}
  #allocation0 [shape = 'u32[]', space=smem, size = 0x4, offset = 0x4, fixed_abs, tag = 'smem constant byte address 0x4 - core index']
  #allocation1 [shape = 'u32[144,128]{1,0:T(1,128)}', space=vmem, size = 0x12000, scoped, tag = 'internal scratch']
  #allocation2 [shape = 'f32[1,18,18,128]{3,2,1,0:T(8,128)}', space=vmem, size = 0x36000, scoped, tag = 'scratch operand']
  #allocation3 [shape = 'f32[1,18,18,128]{3,2,1,0:T(8,128)}', space=vmem, size = 0x36000, scoped, tag = 'scratch operand']
  %s0 = inlined_call_operand.vmem [shape: f32[2,16,16,128], index: 0, kind: input, shape index: {}]
  %s1 = inlined_call_operand.vmem [shape: f32[1152,128], index: 1, kind: input, shape index: {}]
  %s2 = inlined_call_operand.vmem [shape: f32[1,128], index: 2, kind: input, shape index: {}]
  %s3 = inlined_call_operand.vmem [shape: f32[1152,128], index: 3, kind: input, shape index: {}]
  %s4 = inlined_call_operand.vmem [shape: f32[1,128], index: 4, kind: input, shape index: {}]
  %s5 = inlined_call_operand.vmem [shape: f32[128,128], index: 5, kind: input, shape index: {}]
  %s6 = inlined_call_operand.vmem [shape: f32[1,128], index: 6, kind: input, shape index: {}]
  %s7 = inlined_call_operand.vmem [shape: f32[2,16,16,128], index: 7, kind: output, shape index: {}]
  %s8 = sld [smem:[#allocation0]]
  $region61: #{residual_block.1} parent=0
    _
  %s10 = ssub.s32 1, %s8
  %s11 = scalar_select 0, %s10, %s8
  loop: start=0, step=1, limit=4
  $region2: #{residual_block.1} parent=0 // loop_pre_header
    _
  $region3: #{residual_block.1} parent=0 // loop_header
    %s13 = sphi 0, %s17
    %p14 = scmp.ge.s32.totalorder %s13, 4
    %s23 = sphi 0, %s25
    %s26 = sphi 0, %s23
    %s27 = sphi 0, %s26
    %s43 = sphi 0, %s27
    %s47 = sphi 0, %s47
    %s49 = sphi 0, %s47
    %s50 = sphi 0, %s49
    %s64 = sphi 0, %s50
    %s68 = sphi 0, %s68
    %s70 = sphi 0, %s68
    %s71 = sphi 0, %s70
    %s85 = sphi 0, %s71
    %s89 = sphi 0, %s89
    %s91 = sphi 0, %s89
    %s92 = sphi 0, %s91
    %s106 = sphi 0, %s92
    %s110 = sphi 0, %s110
    %s112 = sphi 0, %s110
    %s113 = sphi 0, %s112
    %s127 = sphi 0, %s113
    %s131 = sphi 0, %s131
    %s133 = sphi 0, %s131
    %s134 = sphi 0, %s133
    %s148 = sphi 0, %s134
    %s152 = sphi 0, %s152
    %s154 = sphi 0, %s152
    %s155 = sphi 0, %s154
    %s169 = sphi 0, %s155
    %s175 = sphi 0, %s177
    %s178 = sphi 0, %s175
    %s179 = sphi 0, %s178
    %s195 = sphi 0, %s179
  $region4: #{residual_block.1} parent=0 // loop_header_branch
    %16 = sbr.rel (%p14) target = $region8
  $region5: #{residual_block.1} parent=0 // loop_body
    %s18 = ssub.s32 %s13, 1
    %s19 = ssub.s32 %s13, 2
    %s20 = sadd.s32 %s13, 1
    %s21 = ssub.s32 %s13, %s20
    %p22 = scmp.eq.s32.totalorder %s21, 0
    %s24 = sadd.s32 %s23, 1
    %s25 = scalar_select %p22, %s23, %s24
    %p28 = pneg %p22
    %p29 = scmp.eq.s32.totalorder %s13, 1
    %p30 = por %p28, %p29
    %p31 = scmp.ne.s32.totalorder %s23, %s26
    %p32 = scmp.eq.s32.totalorder %s13, 0
    %p33 = por %p31, %p32
    %p34 = scmp.ne.s32.totalorder %s23, %s26
    %p35 = scmp.eq.s32.totalorder %s18, 1
    %p36 = por %p34, %p35
    %p37 = scmp.ne.s32.totalorder %s26, %s27
    %p38 = scmp.eq.s32.totalorder %s18, 0
    %p39 = por %p37, %p38
    %p40 = scmp.ne.s32.totalorder %s26, %s27
    %p41 = scmp.eq.s32.totalorder %s19, 1
    %p42 = por %p40, %p41
    %p44 = scmp.ne.s32.totalorder %s27, %s43
    %p45 = scmp.eq.s32.totalorder %s19, 0
    %p46 = por %p44, %p45
    %s48 = sadd.s32 %s47, 1
    %p51 = scmp.eq.s32.totalorder %s13, 1
    %p52 = scmp.ne.s32.totalorder %s47, %s49
    %p53 = scmp.eq.s32.totalorder %s13, 0
    %p54 = por %p52, %p53
    %p55 = scmp.ne.s32.totalorder %s47, %s49
    %p56 = scmp.eq.s32.totalorder %s18, 1
    %p57 = por %p55, %p56
    %p58 = scmp.ne.s32.totalorder %s49, %s50
    %p59 = scmp.eq.s32.totalorder %s18, 0
    %p60 = por %p58, %p59
    %p61 = scmp.ne.s32.totalorder %s49, %s50
    %p62 = scmp.eq.s32.totalorder %s19, 1
    %p63 = por %p61, %p62
    %p65 = scmp.ne.s32.totalorder %s50, %s64
    %p66 = scmp.eq.s32.totalorder %s19, 0
    %p67 = por %p65, %p66
    %s69 = sadd.s32 %s68, 1
    %p72 = scmp.eq.s32.totalorder %s13, 1
    %p73 = scmp.ne.s32.totalorder %s68, %s70
    %p74 = scmp.eq.s32.totalorder %s13, 0
    %p75 = por %p73, %p74
    %p76 = scmp.ne.s32.totalorder %s68, %s70
    %p77 = scmp.eq.s32.totalorder %s18, 1
    %p78 = por %p76, %p77
    %p79 = scmp.ne.s32.totalorder %s70, %s71
    %p80 = scmp.eq.s32.totalorder %s18, 0
    %p81 = por %p79, %p80
    %p82 = scmp.ne.s32.totalorder %s70, %s71
    %p83 = scmp.eq.s32.totalorder %s19, 1
    %p84 = por %p82, %p83
    %p86 = scmp.ne.s32.totalorder %s71, %s85
    %p87 = scmp.eq.s32.totalorder %s19, 0
    %p88 = por %p86, %p87
    %s90 = sadd.s32 %s89, 1
    %p93 = scmp.eq.s32.totalorder %s13, 1
    %p94 = scmp.ne.s32.totalorder %s89, %s91
    %p95 = scmp.eq.s32.totalorder %s13, 0
    %p96 = por %p94, %p95
    %p97 = scmp.ne.s32.totalorder %s89, %s91
    %p98 = scmp.eq.s32.totalorder %s18, 1
    %p99 = por %p97, %p98
    %p100 = scmp.ne.s32.totalorder %s91, %s92
    %p101 = scmp.eq.s32.totalorder %s18, 0
    %p102 = por %p100, %p101
    %p103 = scmp.ne.s32.totalorder %s91, %s92
    %p104 = scmp.eq.s32.totalorder %s19, 1
    %p105 = por %p103, %p104
    %p107 = scmp.ne.s32.totalorder %s92, %s106
    %p108 = scmp.eq.s32.totalorder %s19, 0
    %p109 = por %p107, %p108
    %s111 = sadd.s32 %s110, 1
    %p114 = scmp.eq.s32.totalorder %s13, 1
    %p115 = scmp.ne.s32.totalorder %s110, %s112
    %p116 = scmp.eq.s32.totalorder %s13, 0
    %p117 = por %p115, %p116
    %p118 = scmp.ne.s32.totalorder %s110, %s112
    %p119 = scmp.eq.s32.totalorder %s18, 1
    %p120 = por %p118, %p119
    %p121 = scmp.ne.s32.totalorder %s112, %s113
    %p122 = scmp.eq.s32.totalorder %s18, 0
    %p123 = por %p121, %p122
    %p124 = scmp.ne.s32.totalorder %s112, %s113
    %p125 = scmp.eq.s32.totalorder %s19, 1
    %p126 = por %p124, %p125
    %p128 = scmp.ne.s32.totalorder %s113, %s127
    %p129 = scmp.eq.s32.totalorder %s19, 0
    %p130 = por %p128, %p129
    %s132 = sadd.s32 %s131, 1
    %p135 = scmp.eq.s32.totalorder %s13, 1
    %p136 = scmp.ne.s32.totalorder %s131, %s133
    %p137 = scmp.eq.s32.totalorder %s13, 0
    %p138 = por %p136, %p137
    %p139 = scmp.ne.s32.totalorder %s131, %s133
    %p140 = scmp.eq.s32.totalorder %s18, 1
    %p141 = por %p139, %p140
    %p142 = scmp.ne.s32.totalorder %s133, %s134
    %p143 = scmp.eq.s32.totalorder %s18, 0
    %p144 = por %p142, %p143
    %p145 = scmp.ne.s32.totalorder %s133, %s134
    %p146 = scmp.eq.s32.totalorder %s19, 1
    %p147 = por %p145, %p146
    %p149 = scmp.ne.s32.totalorder %s134, %s148
    %p150 = scmp.eq.s32.totalorder %s19, 0
    %p151 = por %p149, %p150
    %s153 = sadd.s32 %s152, 1
    %p156 = scmp.eq.s32.totalorder %s13, 1
    %p157 = scmp.ne.s32.totalorder %s152, %s154
    %p158 = scmp.eq.s32.totalorder %s13, 0
    %p159 = por %p157, %p158
    %p160 = scmp.ne.s32.totalorder %s152, %s154
    %p161 = scmp.eq.s32.totalorder %s18, 1
    %p162 = por %p160, %p161
    %p163 = scmp.ne.s32.totalorder %s154, %s155
    %p164 = scmp.eq.s32.totalorder %s18, 0
    %p165 = por %p163, %p164
    %p166 = scmp.ne.s32.totalorder %s154, %s155
    %p167 = scmp.eq.s32.totalorder %s19, 1
    %p168 = por %p166, %p167
    %p170 = scmp.ne.s32.totalorder %s155, %s169
    %p171 = scmp.eq.s32.totalorder %s19, 0
    %p172 = por %p170, %p171
    %s173 = ssub.s32 %s13, %s20
    %p174 = scmp.eq.s32.totalorder %s173, 0
    %s176 = sadd.s32 %s175, 1
    %s177 = scalar_select %p174, %s175, %s176
    %p180 = pneg %p174
    %p181 = scmp.eq.s32.totalorder %s13, 1
    %p182 = por %p180, %p181
    %p183 = scmp.ne.s32.totalorder %s175, %s178
    %p184 = scmp.eq.s32.totalorder %s13, 0
    %p185 = por %p183, %p184
    %p186 = scmp.ne.s32.totalorder %s175, %s178
    %p187 = scmp.eq.s32.totalorder %s18, 1
    %p188 = por %p186, %p187
    %p189 = scmp.ne.s32.totalorder %s178, %s179
    %p190 = scmp.eq.s32.totalorder %s18, 0
    %p191 = por %p189, %p190
    %p192 = scmp.ne.s32.totalorder %s178, %s179
    %p193 = scmp.eq.s32.totalorder %s19, 1
    %p194 = por %p192, %p193
    %p196 = scmp.ne.s32.totalorder %s179, %s195
    %p197 = scmp.eq.s32.totalorder %s19, 0
    %p198 = por %p196, %p197
    %p199 = scmp.le.s32.totalorder 1, %s13
    %p200 = scmp.lt.s32.totalorder %s13, 3
    %p201 = pnand %p199, %p200
    %p202 = pneg %p201
    // Predicated region
    $region9: #{residual_block.1} parent=5 // pred_check
      _
    $region10: #{residual_block.1} parent=5 // pred_check_branch
      %204 = sbr.rel (%p201) target = $region12
    $region11: #{residual_block.1} parent=5 // pred_region
      %s205 = ssub.s32 %s13, 1
      // Predicated region
      $region13: #{residual_block.1} parent=11 // pred_check
        %p206 = pneg %p60
      $region14: #{residual_block.1} parent=11 // pred_check_branch
        %208 = sbr.rel (%p206) target = $region16
      $region15: #{residual_block.1} parent=11 // pred_region
        _
      $region16: #{residual_block.1} parent=11 // pred_fallthru
        _
      // Predicated region
      $region17: #{residual_block.1} parent=11 // pred_check
        %p209 = pneg %p81
      $region18: #{residual_block.1} parent=11 // pred_check_branch
        %211 = sbr.rel (%p209) target = $region20
      $region19: #{residual_block.1} parent=11 // pred_region
        _
      $region20: #{residual_block.1} parent=11 // pred_fallthru
        _
      // Predicated region
      $region21: #{residual_block.1} parent=11 // pred_check
        %p212 = pneg %p102
      $region22: #{residual_block.1} parent=11 // pred_check_branch
        %214 = sbr.rel (%p212) target = $region24
      $region23: #{residual_block.1} parent=11 // pred_region
        _
      $region24: #{residual_block.1} parent=11 // pred_fallthru
        _
      // Predicated region
      $region25: #{residual_block.1} parent=11 // pred_check
        %p215 = pneg %p123
      $region26: #{residual_block.1} parent=11 // pred_check_branch
        %217 = sbr.rel (%p215) target = $region28
      $region27: #{residual_block.1} parent=11 // pred_region
        _
      $region28: #{residual_block.1} parent=11 // pred_fallthru
        _
      // Predicated region
      $region29: #{residual_block.1} parent=11 // pred_check
        %p218 = pneg %p144
      $region30: #{residual_block.1} parent=11 // pred_check_branch
        %220 = sbr.rel (%p218) target = $region32
      $region31: #{residual_block.1} parent=11 // pred_region
        _
      $region32: #{residual_block.1} parent=11 // pred_fallthru
        _
      // Predicated region
      $region33: #{residual_block.1} parent=11 // pred_check
        %p221 = pneg %p165
      $region34: #{residual_block.1} parent=11 // pred_check_branch
        %223 = sbr.rel (%p221) target = $region36
      $region35: #{residual_block.1} parent=11 // pred_region
        _
      $region36: #{residual_block.1} parent=11 // pred_fallthru
        _
    $region12: #{residual_block.1} parent=5 // pred_fallthru
      _
    %p224 = scmp.lt.s32.totalorder %s13, 2
    // Predicated region
    $region37: #{residual_block.1} parent=5 // pred_check
      %p225 = pneg %p224
    $region38: #{residual_block.1} parent=5 // pred_check_branch
      %227 = sbr.rel (%p225) target = $region40
    $region39: #{residual_block.1} parent=5 // pred_region
      // Predicated region
      $region41: #{residual_block.1} parent=39 // pred_check
        %p228 = pneg %p33
      $region42: #{residual_block.1} parent=39 // pred_check_branch
        %230 = sbr.rel (%p228) target = $region44
      $region43: #{residual_block.1} parent=39 // pred_region
        %p231 = scmp.lt.s32.totalorder %s13, 1
        %s232 = scalar_select %p231, %s13, 1
        %s233 = smul.addr %s232, 32
        %s234 = smul.addr %s233, 8
        %s235 = scalar_lea.vmem %s0, %s234
      $region44: #{residual_block.1} parent=39 // pred_fallthru
        _
    $region40: #{residual_block.1} parent=5 // pred_fallthru
      _
    %p236 = scmp.le.s32.totalorder 1, %s13
    %p237 = scmp.lt.s32.totalorder %s13, 3
    %p238 = pnand %p236, %p237
    %p239 = pneg %p238
    // Predicated region
    $region45: #{residual_block.1} parent=5 // pred_check
      _
    $region46: #{residual_block.1} parent=5 // pred_check_branch
      %241 = sbr.rel (%p238) target = $region48
    $region47: #{residual_block.1} parent=5 // pred_region
      %s242 = ssub.s32 %s13, 1
      %p243 = scmp.lt.s32.totalorder %s18, 1
      %s244 = scalar_select %p243, %s18, 1
      %s245 = smul.addr %s244, 32
      %s246 = smul.addr %s245, 8
      %s247 = scalar_lea.vmem %s0, %s246
      %p248 = pneg %p39
      %p249 = pneg %p36
      %p250 = pneg %p60
      %p251 = pneg %p57
      %p252 = pneg %p81
      %p253 = pneg %p78
      %p254 = pneg %p102
      %p255 = pneg %p99
      %p256 = pneg %p123
      %p257 = pneg %p120
      %p258 = pneg %p144
      %p259 = pneg %p141
      %p260 = pneg %p165
      %p261 = pneg %p162
      %p262 = pneg %p191
      %p263 = pneg %p188
      %p264 = scmp.lt.s32.totalorder %s18, 1
      %s265 = scalar_select %p264, %s18, 1
      %s266 = smul.addr %s265, 32
      %s267 = smul.addr %s266, 8
      %s268 = scalar_lea.vmem %s7, %s267
      %p269 = scmp.lt.s32.totalorder %s18, 1
      %s270 = scalar_select %p269, %s18, 1
      %s271 = smul.addr %s270, 32
      %s272 = smul.addr %s271, 8
      %s273 = scalar_lea.vmem %s0, %s272
      %p274 = scmp.lt.s32.totalorder %s18, 1
      %s275 = scalar_select %p274, %s18, 1
      %s276 = smul.addr %s275, 32
      %s277 = smul.addr %s276, 8
      %s278 = scalar_lea.vmem %s7, %s277
      %279 = vst [vmem:[#allocation2] sm:$0xff] 0.0
      %280 = vst [vmem:[#allocation2 + $0x8] sm:$0xff] 0.0
      %281 = vst [vmem:[#allocation2 + $0x10] sm:$0x3] 0.0
      %s282 = scalar_lea.vmem [#allocation2], 408
      %283 = vst [vmem:[%s282] sm:$0xff] 0.0
      %284 = vst [vmem:[%s282 + $0x8] sm:$0xff] 0.0
      %285 = vst [vmem:[%s282 + $0x10] sm:$0x3] 0.0
      %s286 = scalar_lea.vmem [#allocation2], 24
      %287 = vst [vmem:[%s286] sm:$0x1] 0.0
      %288 = vst [vmem:[%s286 + $0x18] sm:$0x1] 0.0
      %289 = vst [vmem:[%s286 + $0x30] sm:$0x1] 0.0
      %290 = vst [vmem:[%s286 + $0x48] sm:$0x1] 0.0
      %291 = vst [vmem:[%s286 + $0x60] sm:$0x1] 0.0
      %292 = vst [vmem:[%s286 + $0x78] sm:$0x1] 0.0
      %293 = vst [vmem:[%s286 + $0x90] sm:$0x1] 0.0
      %294 = vst [vmem:[%s286 + $0xa8] sm:$0x1] 0.0
      %295 = vst [vmem:[%s286 + $0xc0] sm:$0x1] 0.0
      %296 = vst [vmem:[%s286 + $0xd8] sm:$0x1] 0.0
      %297 = vst [vmem:[%s286 + $0xf0] sm:$0x1] 0.0
      %298 = vst [vmem:[%s286 + $0x108] sm:$0x1] 0.0
      %299 = vst [vmem:[%s286 + $0x120] sm:$0x1] 0.0
      %300 = vst [vmem:[%s286 + $0x138] sm:$0x1] 0.0
      %301 = vst [vmem:[%s286 + $0x150] sm:$0x1] 0.0
      %302 = vst [vmem:[%s286 + $0x168] sm:$0x1] 0.0
      %303 = vst [vmem:[%s286 + $0x11] sm:$0x1] 0.0
      %304 = vst [vmem:[%s286 + $0x29] sm:$0x1] 0.0
      %305 = vst [vmem:[%s286 + $0x41] sm:$0x1] 0.0
      %306 = vst [vmem:[%s286 + $0x59] sm:$0x1] 0.0
      %307 = vst [vmem:[%s286 + $0x71] sm:$0x1] 0.0
      %308 = vst [vmem:[%s286 + $0x89] sm:$0x1] 0.0
      %309 = vst [vmem:[%s286 + $0xa1] sm:$0x1] 0.0
      %310 = vst [vmem:[%s286 + $0xb9] sm:$0x1] 0.0
      %311 = vst [vmem:[%s286 + $0xd1] sm:$0x1] 0.0
      %312 = vst [vmem:[%s286 + $0xe9] sm:$0x1] 0.0
      %313 = vst [vmem:[%s286 + $0x101] sm:$0x1] 0.0
      %314 = vst [vmem:[%s286 + $0x119] sm:$0x1] 0.0
      %315 = vst [vmem:[%s286 + $0x131] sm:$0x1] 0.0
      %316 = vst [vmem:[%s286 + $0x149] sm:$0x1] 0.0
      %317 = vst [vmem:[%s286 + $0x161] sm:$0x1] 0.0
      %318 = vst [vmem:[%s286 + $0x179] sm:$0x1] 0.0
      %v319 = vld [vmem:[%s273] sm:$0xff]
      %v320 = vld [vmem:[%s273 + $0x8] sm:$0xff]
      %v321 = vld [vmem:[%s273 + $0x10] sm:$0xff]
      %v322 = vld [vmem:[%s273 + $0x18] sm:$0xff]
      %v323 = vld [vmem:[%s273 + $0x20] sm:$0xff]
      %v324 = vld [vmem:[%s273 + $0x28] sm:$0xff]
      %v325 = vld [vmem:[%s273 + $0x30] sm:$0xff]
      %v326 = vld [vmem:[%s273 + $0x38] sm:$0xff]
      %v327 = vld [vmem:[%s273 + $0x40] sm:$0xff]
      %v328 = vld [vmem:[%s273 + $0x48] sm:$0xff]
      %v329 = vld [vmem:[%s273 + $0x50] sm:$0xff]
      %v330 = vld [vmem:[%s273 + $0x58] sm:$0xff]
      %v331 = vld [vmem:[%s273 + $0x60] sm:$0xff]
      %v332 = vld [vmem:[%s273 + $0x68] sm:$0xff]
      %v333 = vld [vmem:[%s273 + $0x70] sm:$0xff]
      %v334 = vld [vmem:[%s273 + $0x78] sm:$0xff]
      %v335 = vld [vmem:[%s273 + $0x80] sm:$0xff]
      %v336 = vld [vmem:[%s273 + $0x88] sm:$0xff]
      %v337 = vld [vmem:[%s273 + $0x90] sm:$0xff]
      %v338 = vld [vmem:[%s273 + $0x98] sm:$0xff]
      %v339 = vld [vmem:[%s273 + $0xa0] sm:$0xff]
      %v340 = vld [vmem:[%s273 + $0xa8] sm:$0xff]
      %v341 = vld [vmem:[%s273 + $0xb0] sm:$0xff]
      %v342 = vld [vmem:[%s273 + $0xb8] sm:$0xff]
      %v343 = vld [vmem:[%s273 + $0xc0] sm:$0xff]
      %v344 = vld [vmem:[%s273 + $0xc8] sm:$0xff]
      %v345 = vld [vmem:[%s273 + $0xd0] sm:$0xff]
      %v346 = vld [vmem:[%s273 + $0xd8] sm:$0xff]
      %v347 = vld [vmem:[%s273 + $0xe0] sm:$0xff]
      %v348 = vld [vmem:[%s273 + $0xe8] sm:$0xff]
      %v349 = vld [vmem:[%s273 + $0xf0] sm:$0xff]
      %v350 = vld [vmem:[%s273 + $0xf8] sm:$0xff]
      %351 = vst [vmem:[%s286 + $0x1] sm:$0xff] %v319
      %352 = vst [vmem:[%s286 + $0x9] sm:$0xff] %v320
      %353 = vst [vmem:[%s286 + $0x19] sm:$0xff] %v321
      %354 = vst [vmem:[%s286 + $0x21] sm:$0xff] %v322
      %355 = vst [vmem:[%s286 + $0x31] sm:$0xff] %v323
      %356 = vst [vmem:[%s286 + $0x39] sm:$0xff] %v324
      %357 = vst [vmem:[%s286 + $0x49] sm:$0xff] %v325
      %358 = vst [vmem:[%s286 + $0x51] sm:$0xff] %v326
      %359 = vst [vmem:[%s286 + $0x61] sm:$0xff] %v327
      %360 = vst [vmem:[%s286 + $0x69] sm:$0xff] %v328
      %361 = vst [vmem:[%s286 + $0x79] sm:$0xff] %v329
      %362 = vst [vmem:[%s286 + $0x81] sm:$0xff] %v330
      %363 = vst [vmem:[%s286 + $0x91] sm:$0xff] %v331
      %364 = vst [vmem:[%s286 + $0x99] sm:$0xff] %v332
      %365 = vst [vmem:[%s286 + $0xa9] sm:$0xff] %v333
      %366 = vst [vmem:[%s286 + $0xb1] sm:$0xff] %v334
      %367 = vst [vmem:[%s286 + $0xc1] sm:$0xff] %v335
      %368 = vst [vmem:[%s286 + $0xc9] sm:$0xff] %v336
      %369 = vst [vmem:[%s286 + $0xd9] sm:$0xff] %v337
      %370 = vst [vmem:[%s286 + $0xe1] sm:$0xff] %v338
      %371 = vst [vmem:[%s286 + $0xf1] sm:$0xff] %v339
      %372 = vst [vmem:[%s286 + $0xf9] sm:$0xff] %v340
      %373 = vst [vmem:[%s286 + $0x109] sm:$0xff] %v341
      %374 = vst [vmem:[%s286 + $0x111] sm:$0xff] %v342
      %375 = vst [vmem:[%s286 + $0x121] sm:$0xff] %v343
      %376 = vst [vmem:[%s286 + $0x129] sm:$0xff] %v344
      %377 = vst [vmem:[%s286 + $0x139] sm:$0xff] %v345
      %378 = vst [vmem:[%s286 + $0x141] sm:$0xff] %v346
      %379 = vst [vmem:[%s286 + $0x151] sm:$0xff] %v347
      %380 = vst [vmem:[%s286 + $0x159] sm:$0xff] %v348
      %381 = vst [vmem:[%s286 + $0x169] sm:$0xff] %v349
      %382 = vst [vmem:[%s286 + $0x171] sm:$0xff] %v350
      %v383 = vld [vmem:[#allocation2] sm:$0xff]
      %v384 = vld [vmem:[#allocation2 + $0x8] sm:$0xff]
      %v385 = vld [vmem:[#allocation2 + $0x10] sm:$0x3]
      %v386 = vld [vmem:[#allocation2 + $0x18] sm:$0xff]
      %v387 = vld [vmem:[#allocation2 + $0x20] sm:$0xff]
      %v388 = vld [vmem:[#allocation2 + $0x28] sm:$0x3]
      %v389 = vld [vmem:[#allocation2 + $0x30] sm:$0xff]
      %v390 = vld [vmem:[#allocation2 + $0x38] sm:$0xff]
      %v391 = vld [vmem:[#allocation2 + $0x40] sm:$0x3]
      %v392 = vld [vmem:[#allocation2 + $0x48] sm:$0xff]
      %v393 = vld [vmem:[#allocation2 + $0x50] sm:$0xff]
      %v394 = vld [vmem:[#allocation2 + $0x58] sm:$0x3]
      %v395 = vld [vmem:[#allocation2 + $0x60] sm:$0xff]
      %v396 = vld [vmem:[#allocation2 + $0x68] sm:$0xff]
      %v397 = vld [vmem:[#allocation2 + $0x70] sm:$0x3]
      %v398 = vld [vmem:[#allocation2 + $0x78] sm:$0xff]
      %v399 = vld [vmem:[#allocation2 + $0x80] sm:$0xff]
      %v400 = vld [vmem:[#allocation2 + $0x88] sm:$0x3]
      %v401 = vld [vmem:[#allocation2 + $0x90] sm:$0xff]
      %v402 = vld [vmem:[#allocation2 + $0x98] sm:$0xff]
      %v403 = vld [vmem:[#allocation2 + $0xa0] sm:$0x3]
      %v404 = vld [vmem:[#allocation2 + $0xa8] sm:$0xff]
      %v405 = vld [vmem:[#allocation2 + $0xb0] sm:$0xff]
      %v406 = vld [vmem:[#allocation2 + $0xb8] sm:$0x3]
      %v407 = vld [vmem:[#allocation2 + $0xc0] sm:$0xff]
      %v408 = vld [vmem:[#allocation2 + $0xc8] sm:$0xff]
      %v409 = vld [vmem:[#allocation2 + $0xd0] sm:$0x3]
      %v410 = vld [vmem:[#allocation2 + $0xd8] sm:$0xff]
      %v411 = vld [vmem:[#allocation2 + $0xe0] sm:$0xff]
      %v412 = vld [vmem:[#allocation2 + $0xe8] sm:$0x3]
      %v413 = vld [vmem:[#allocation2 + $0xf0] sm:$0xff]
      %v414 = vld [vmem:[#allocation2 + $0xf8] sm:$0xff]
      %v415 = vld [vmem:[#allocation2 + $0x100] sm:$0x3]
      %v416 = vld [vmem:[#allocation2 + $0x108] sm:$0xff]
      %v417 = vld [vmem:[#allocation2 + $0x110] sm:$0xff]
      %v418 = vld [vmem:[#allocation2 + $0x118] sm:$0x3]
      %v419 = vld [vmem:[#allocation2 + $0x120] sm:$0xff]
      %v420 = vld [vmem:[#allocation2 + $0x128] sm:$0xff]
      %v421 = vld [vmem:[#allocation2 + $0x130] sm:$0x3]
      %v422 = vld [vmem:[#allocation2 + $0x138] sm:$0xff]
      %v423 = vld [vmem:[#allocation2 + $0x140] sm:$0xff]
      %v424 = vld [vmem:[#allocation2 + $0x148] sm:$0x3]
      %v425 = vld [vmem:[#allocation2 + $0x150] sm:$0xff]
      %v426 = vld [vmem:[#allocation2 + $0x158] sm:$0xff]
      %v427 = vld [vmem:[#allocation2 + $0x160] sm:$0x3]
      %v428 = vld [vmem:[#allocation2 + $0x168] sm:$0xff]
      %v429 = vld [vmem:[#allocation2 + $0x170] sm:$0xff]
      %v430 = vld [vmem:[#allocation2 + $0x178] sm:$0x3]
      %v431 = vld [vmem:[#allocation2 + $0x180] sm:$0xff]
      %v432 = vld [vmem:[#allocation2 + $0x188] sm:$0xff]
      %v433 = vld [vmem:[#allocation2 + $0x190] sm:$0x3]
      %v434 = vld [vmem:[#allocation2 + $0x198] sm:$0xff]
      %v435 = vld [vmem:[#allocation2 + $0x1a0] sm:$0xff]
      %v436 = vld [vmem:[#allocation2 + $0x1a8] sm:$0x3]
      %vm485 = vcmask 1046528
      %v486 = vrot.slane %v383, 1
      %v487 = vrot.slane %v384, 1
      %v488 = vsel %vm485, %v486, %v487
      %v489 = vrot.slane %v385, 1
      %v490 = vsel %vm485, %v487, %v489
      %v491 = vrot.slane %v386, 1
      %v492 = vrot.slane %v387, 1
      %v493 = vsel %vm485, %v491, %v492
      %v494 = vrot.slane %v388, 1
      %v495 = vsel %vm485, %v492, %v494
      %v496 = vrot.slane %v389, 1
      %v497 = vrot.slane %v390, 1
      %v498 = vsel %vm485, %v496, %v497
      %v499 = vrot.slane %v391, 1
      %v500 = vsel %vm485, %v497, %v499
      %v501 = vrot.slane %v392, 1
      %v502 = vrot.slane %v393, 1
      %v503 = vsel %vm485, %v501, %v502
      %v504 = vrot.slane %v394, 1
      %v505 = vsel %vm485, %v502, %v504
      %v506 = vrot.slane %v395, 1
      %v507 = vrot.slane %v396, 1
      %v508 = vsel %vm485, %v506, %v507
      %v509 = vrot.slane %v397, 1
      %v510 = vsel %vm485, %v507, %v509
      %v511 = vrot.slane %v398, 1
      %v512 = vrot.slane %v399, 1
      %v513 = vsel %vm485, %v511, %v512
      %v514 = vrot.slane %v400, 1
      %v515 = vsel %vm485, %v512, %v514
      %v516 = vrot.slane %v401, 1
      %v517 = vrot.slane %v402, 1
      %v518 = vsel %vm485, %v516, %v517
      %v519 = vrot.slane %v403, 1
      %v520 = vsel %vm485, %v517, %v519
      %v521 = vrot.slane %v404, 1
      %v522 = vrot.slane %v405, 1
      %v523 = vsel %vm485, %v521, %v522
      %v524 = vrot.slane %v406, 1
      %v525 = vsel %vm485, %v522, %v524
      %v526 = vrot.slane %v407, 1
      %v527 = vrot.slane %v408, 1
      %v528 = vsel %vm485, %v526, %v527
      %v529 = vrot.slane %v409, 1
      %v530 = vsel %vm485, %v527, %v529
      %v531 = vrot.slane %v410, 1
      %v532 = vrot.slane %v411, 1
      %v533 = vsel %vm485, %v531, %v532
      %v534 = vrot.slane %v412, 1
      %v535 = vsel %vm485, %v532, %v534
      %v536 = vrot.slane %v413, 1
      %v537 = vrot.slane %v414, 1
      %v538 = vsel %vm485, %v536, %v537
      %v539 = vrot.slane %v415, 1
      %v540 = vsel %vm485, %v537, %v539
      %v541 = vrot.slane %v416, 1
      %v542 = vrot.slane %v417, 1
      %v543 = vsel %vm485, %v541, %v542
      %v544 = vrot.slane %v418, 1
      %v545 = vsel %vm485, %v542, %v544
      %v546 = vrot.slane %v419, 1
      %v547 = vrot.slane %v420, 1
      %v548 = vsel %vm485, %v546, %v547
      %v549 = vrot.slane %v421, 1
      %v550 = vsel %vm485, %v547, %v549
      %v551 = vrot.slane %v422, 1
      %v552 = vrot.slane %v423, 1
      %v553 = vsel %vm485, %v551, %v552
      %v554 = vrot.slane %v424, 1
      %v555 = vsel %vm485, %v552, %v554
      %v556 = vrot.slane %v425, 1
      %v557 = vrot.slane %v426, 1
      %v558 = vsel %vm485, %v556, %v557
      %v559 = vrot.slane %v427, 1
      %v560 = vsel %vm485, %v557, %v559
      %v561 = vrot.slane %v428, 1
      %v562 = vrot.slane %v429, 1
      %v563 = vsel %vm485, %v561, %v562
      %v564 = vrot.slane %v430, 1
      %v565 = vsel %vm485, %v562, %v564
      %vm598 = vcmask 1045504
      %v599 = vrot.slane %v383, 2
      %v600 = vrot.slane %v384, 2
      %v601 = vsel %vm598, %v599, %v600
      %v602 = vrot.slane %v385, 2
      %v603 = vsel %vm598, %v600, %v602
      %v604 = vrot.slane %v386, 2
      %v605 = vrot.slane %v387, 2
      %v606 = vsel %vm598, %v604, %v605
      %v607 = vrot.slane %v388, 2
      %v608 = vsel %vm598, %v605, %v607
      %v609 = vrot.slane %v389, 2
      %v610 = vrot.slane %v390, 2
      %v611 = vsel %vm598, %v609, %v610
      %v612 = vrot.slane %v391, 2
      %v613 = vsel %vm598, %v610, %v612
      %v614 = vrot.slane %v392, 2
      %v615 = vrot.slane %v393, 2
      %v616 = vsel %vm598, %v614, %v615
      %v617 = vrot.slane %v394, 2
      %v618 = vsel %vm598, %v615, %v617
      %v619 = vrot.slane %v395, 2
      %v620 = vrot.slane %v396, 2
      %v621 = vsel %vm598, %v619, %v620
      %v622 = vrot.slane %v397, 2
      %v623 = vsel %vm598, %v620, %v622
      %v624 = vrot.slane %v398, 2
      %v625 = vrot.slane %v399, 2
      %v626 = vsel %vm598, %v624, %v625
      %v627 = vrot.slane %v400, 2
      %v628 = vsel %vm598, %v625, %v627
      %v629 = vrot.slane %v401, 2
      %v630 = vrot.slane %v402, 2
      %v631 = vsel %vm598, %v629, %v630
      %v632 = vrot.slane %v403, 2
      %v633 = vsel %vm598, %v630, %v632
      %v634 = vrot.slane %v404, 2
      %v635 = vrot.slane %v405, 2
      %v636 = vsel %vm598, %v634, %v635
      %v637 = vrot.slane %v406, 2
      %v638 = vsel %vm598, %v635, %v637
      %v639 = vrot.slane %v407, 2
      %v640 = vrot.slane %v408, 2
      %v641 = vsel %vm598, %v639, %v640
      %v642 = vrot.slane %v409, 2
      %v643 = vsel %vm598, %v640, %v642
      %v644 = vrot.slane %v410, 2
      %v645 = vrot.slane %v411, 2
      %v646 = vsel %vm598, %v644, %v645
      %v647 = vrot.slane %v412, 2
      %v648 = vsel %vm598, %v645, %v647
      %v649 = vrot.slane %v413, 2
      %v650 = vrot.slane %v414, 2
      %v651 = vsel %vm598, %v649, %v650
      %v652 = vrot.slane %v415, 2
      %v653 = vsel %vm598, %v650, %v652
      %v654 = vrot.slane %v416, 2
      %v655 = vrot.slane %v417, 2
      %v656 = vsel %vm598, %v654, %v655
      %v657 = vrot.slane %v418, 2
      %v658 = vsel %vm598, %v655, %v657
      %v659 = vrot.slane %v419, 2
      %v660 = vrot.slane %v420, 2
      %v661 = vsel %vm598, %v659, %v660
      %v662 = vrot.slane %v421, 2
      %v663 = vsel %vm598, %v660, %v662
      %v664 = vrot.slane %v422, 2
      %v665 = vrot.slane %v423, 2
      %v666 = vsel %vm598, %v664, %v665
      %v667 = vrot.slane %v424, 2
      %v668 = vsel %vm598, %v665, %v667
      %v669 = vrot.slane %v425, 2
      %v670 = vrot.slane %v426, 2
      %v671 = vsel %vm598, %v669, %v670
      %v672 = vrot.slane %v427, 2
      %v673 = vsel %vm598, %v670, %v672
      %v674 = vrot.slane %v428, 2
      %v675 = vrot.slane %v429, 2
      %v676 = vsel %vm598, %v674, %v675
      %v677 = vrot.slane %v430, 2
      %v678 = vsel %vm598, %v675, %v677
      %v714 = vrot.slane %v431, 1
      %v715 = vrot.slane %v432, 1
      %v716 = vsel %vm485, %v714, %v715
      %v717 = vrot.slane %v433, 1
      %v718 = vsel %vm485, %v715, %v717
      %v721 = vrot.slane %v431, 2
      %v722 = vrot.slane %v432, 2
      %v723 = vsel %vm598, %v721, %v722
      %v724 = vrot.slane %v433, 2
      %v725 = vsel %vm598, %v722, %v724
      %v731 = vrot.slane %v434, 1
      %v732 = vrot.slane %v435, 1
      %v733 = vsel %vm485, %v731, %v732
      %v734 = vrot.slane %v436, 1
      %v735 = vsel %vm485, %v732, %v734
      %v738 = vrot.slane %v434, 2
      %v739 = vrot.slane %v435, 2
      %v740 = vsel %vm598, %v738, %v739
      %v741 = vrot.slane %v436, 2
      %v742 = vsel %vm598, %v739, %v741
      %v745 = vld [vmem:[%s1] sm:$0xff]
      %v746 = vld [vmem:[%s1 + $0x8] sm:$0xff]
      %v747 = vld [vmem:[%s1 + $0x10] sm:$0xff]
      %v748 = vld [vmem:[%s1 + $0x18] sm:$0xff]
      %v749 = vld [vmem:[%s1 + $0x20] sm:$0xff]
      %v750 = vld [vmem:[%s1 + $0x28] sm:$0xff]
      %v751 = vld [vmem:[%s1 + $0x30] sm:$0xff]
      %v752 = vld [vmem:[%s1 + $0x38] sm:$0xff]
      %v753 = vld [vmem:[%s1 + $0x40] sm:$0xff]
      %v754 = vld [vmem:[%s1 + $0x48] sm:$0xff]
      %v755 = vld [vmem:[%s1 + $0x50] sm:$0xff]
      %v756 = vld [vmem:[%s1 + $0x58] sm:$0xff]
      %v757 = vld [vmem:[%s1 + $0x60] sm:$0xff]
      %v758 = vld [vmem:[%s1 + $0x68] sm:$0xff]
      %v759 = vld [vmem:[%s1 + $0x70] sm:$0xff]
      %v760 = vld [vmem:[%s1 + $0x78] sm:$0xff]
      %v761 = vld [vmem:[%s1 + $0x80] sm:$0xff]
      %v762 = vld [vmem:[%s1 + $0x88] sm:$0xff]
      %v763 = vld [vmem:[%s1 + $0x90] sm:$0xff]
      %v764 = vld [vmem:[%s1 + $0x98] sm:$0xff]
      %v765 = vld [vmem:[%s1 + $0xa0] sm:$0xff]
      %v766 = vld [vmem:[%s1 + $0xa8] sm:$0xff]
      %v767 = vld [vmem:[%s1 + $0xb0] sm:$0xff]
      %v768 = vld [vmem:[%s1 + $0xb8] sm:$0xff]
      %v769 = vld [vmem:[%s1 + $0xc0] sm:$0xff]
      %v770 = vld [vmem:[%s1 + $0xc8] sm:$0xff]
      %v771 = vld [vmem:[%s1 + $0xd0] sm:$0xff]
      %v772 = vld [vmem:[%s1 + $0xd8] sm:$0xff]
      %v773 = vld [vmem:[%s1 + $0xe0] sm:$0xff]
      %v774 = vld [vmem:[%s1 + $0xe8] sm:$0xff]
      %v775 = vld [vmem:[%s1 + $0xf0] sm:$0xff]
      %v776 = vld [vmem:[%s1 + $0xf8] sm:$0xff]
      %v777 = vld [vmem:[%s1 + $0x100] sm:$0xff]
      %v778 = vld [vmem:[%s1 + $0x108] sm:$0xff]
      %v779 = vld [vmem:[%s1 + $0x110] sm:$0xff]
      %v780 = vld [vmem:[%s1 + $0x118] sm:$0xff]
      %v781 = vld [vmem:[%s1 + $0x120] sm:$0xff]
      %v782 = vld [vmem:[%s1 + $0x128] sm:$0xff]
      %v783 = vld [vmem:[%s1 + $0x130] sm:$0xff]
      %v784 = vld [vmem:[%s1 + $0x138] sm:$0xff]
      %v785 = vld [vmem:[%s1 + $0x140] sm:$0xff]
      %v786 = vld [vmem:[%s1 + $0x148] sm:$0xff]
      %v787 = vld [vmem:[%s1 + $0x150] sm:$0xff]
      %v788 = vld [vmem:[%s1 + $0x158] sm:$0xff]
      %v789 = vld [vmem:[%s1 + $0x160] sm:$0xff]
      %v790 = vld [vmem:[%s1 + $0x168] sm:$0xff]
      %v791 = vld [vmem:[%s1 + $0x170] sm:$0xff]
      %v792 = vld [vmem:[%s1 + $0x178] sm:$0xff]
      %v793 = vld [vmem:[%s1 + $0x180] sm:$0xff]
      %v794 = vld [vmem:[%s1 + $0x188] sm:$0xff]
      %v795 = vld [vmem:[%s1 + $0x190] sm:$0xff]
      %v796 = vld [vmem:[%s1 + $0x198] sm:$0xff]
      %v797 = vld [vmem:[%s1 + $0x1a0] sm:$0xff]
      %v798 = vld [vmem:[%s1 + $0x1a8] sm:$0xff]
      %v799 = vld [vmem:[%s1 + $0x1b0] sm:$0xff]
      %v800 = vld [vmem:[%s1 + $0x1b8] sm:$0xff]
      %v801 = vld [vmem:[%s1 + $0x1c0] sm:$0xff]
      %v802 = vld [vmem:[%s1 + $0x1c8] sm:$0xff]
      %v803 = vld [vmem:[%s1 + $0x1d0] sm:$0xff]
      %v804 = vld [vmem:[%s1 + $0x1d8] sm:$0xff]
      %v805 = vld [vmem:[%s1 + $0x1e0] sm:$0xff]
      %v806 = vld [vmem:[%s1 + $0x1e8] sm:$0xff]
      %v807 = vld [vmem:[%s1 + $0x1f0] sm:$0xff]
      %v808 = vld [vmem:[%s1 + $0x1f8] sm:$0xff]
      %v809 = vld [vmem:[%s1 + $0x200] sm:$0xff]
      %v810 = vld [vmem:[%s1 + $0x208] sm:$0xff]
      %v811 = vld [vmem:[%s1 + $0x210] sm:$0xff]
      %v812 = vld [vmem:[%s1 + $0x218] sm:$0xff]
      %v813 = vld [vmem:[%s1 + $0x220] sm:$0xff]
      %v814 = vld [vmem:[%s1 + $0x228] sm:$0xff]
      %v815 = vld [vmem:[%s1 + $0x230] sm:$0xff]
      %v816 = vld [vmem:[%s1 + $0x238] sm:$0xff]
      %v817 = vld [vmem:[%s1 + $0x240] sm:$0xff]
      %v818 = vld [vmem:[%s1 + $0x248] sm:$0xff]
      %v819 = vld [vmem:[%s1 + $0x250] sm:$0xff]
      %v820 = vld [vmem:[%s1 + $0x258] sm:$0xff]
      %v821 = vld [vmem:[%s1 + $0x260] sm:$0xff]
      %v822 = vld [vmem:[%s1 + $0x268] sm:$0xff]
      %v823 = vld [vmem:[%s1 + $0x270] sm:$0xff]
      %v824 = vld [vmem:[%s1 + $0x278] sm:$0xff]
      %v825 = vld [vmem:[%s1 + $0x280] sm:$0xff]
      %v826 = vld [vmem:[%s1 + $0x288] sm:$0xff]
      %v827 = vld [vmem:[%s1 + $0x290] sm:$0xff]
      %v828 = vld [vmem:[%s1 + $0x298] sm:$0xff]
      %v829 = vld [vmem:[%s1 + $0x2a0] sm:$0xff]
      %v830 = vld [vmem:[%s1 + $0x2a8] sm:$0xff]
      %v831 = vld [vmem:[%s1 + $0x2b0] sm:$0xff]
      %v832 = vld [vmem:[%s1 + $0x2b8] sm:$0xff]
      %v833 = vld [vmem:[%s1 + $0x2c0] sm:$0xff]
      %v834 = vld [vmem:[%s1 + $0x2c8] sm:$0xff]
      %v835 = vld [vmem:[%s1 + $0x2d0] sm:$0xff]
      %v836 = vld [vmem:[%s1 + $0x2d8] sm:$0xff]
      %v837 = vld [vmem:[%s1 + $0x2e0] sm:$0xff]
      %v838 = vld [vmem:[%s1 + $0x2e8] sm:$0xff]
      %v839 = vld [vmem:[%s1 + $0x2f0] sm:$0xff]
      %v840 = vld [vmem:[%s1 + $0x2f8] sm:$0xff]
      %v841 = vld [vmem:[%s1 + $0x300] sm:$0xff]
      %v842 = vld [vmem:[%s1 + $0x308] sm:$0xff]
      %v843 = vld [vmem:[%s1 + $0x310] sm:$0xff]
      %v844 = vld [vmem:[%s1 + $0x318] sm:$0xff]
      %v845 = vld [vmem:[%s1 + $0x320] sm:$0xff]
      %v846 = vld [vmem:[%s1 + $0x328] sm:$0xff]
      %v847 = vld [vmem:[%s1 + $0x330] sm:$0xff]
      %v848 = vld [vmem:[%s1 + $0x338] sm:$0xff]
      %v849 = vld [vmem:[%s1 + $0x340] sm:$0xff]
      %v850 = vld [vmem:[%s1 + $0x348] sm:$0xff]
      %v851 = vld [vmem:[%s1 + $0x350] sm:$0xff]
      %v852 = vld [vmem:[%s1 + $0x358] sm:$0xff]
      %v853 = vld [vmem:[%s1 + $0x360] sm:$0xff]
      %v854 = vld [vmem:[%s1 + $0x368] sm:$0xff]
      %v855 = vld [vmem:[%s1 + $0x370] sm:$0xff]
      %v856 = vld [vmem:[%s1 + $0x378] sm:$0xff]
      %v857 = vld [vmem:[%s1 + $0x380] sm:$0xff]
      %v858 = vld [vmem:[%s1 + $0x388] sm:$0xff]
      %v859 = vld [vmem:[%s1 + $0x390] sm:$0xff]
      %v860 = vld [vmem:[%s1 + $0x398] sm:$0xff]
      %v861 = vld [vmem:[%s1 + $0x3a0] sm:$0xff]
      %v862 = vld [vmem:[%s1 + $0x3a8] sm:$0xff]
      %v863 = vld [vmem:[%s1 + $0x3b0] sm:$0xff]
      %v864 = vld [vmem:[%s1 + $0x3b8] sm:$0xff]
      %v865 = vld [vmem:[%s1 + $0x3c0] sm:$0xff]
      %v866 = vld [vmem:[%s1 + $0x3c8] sm:$0xff]
      %v867 = vld [vmem:[%s1 + $0x3d0] sm:$0xff]
      %v868 = vld [vmem:[%s1 + $0x3d8] sm:$0xff]
      %v869 = vld [vmem:[%s1 + $0x3e0] sm:$0xff]
      %v870 = vld [vmem:[%s1 + $0x3e8] sm:$0xff]
      %v871 = vld [vmem:[%s1 + $0x3f0] sm:$0xff]
      %v872 = vld [vmem:[%s1 + $0x3f8] sm:$0xff]
      %v873 = vld [vmem:[%s1 + $0x400] sm:$0xff]
      %v874 = vld [vmem:[%s1 + $0x408] sm:$0xff]
      %v875 = vld [vmem:[%s1 + $0x410] sm:$0xff]
      %v876 = vld [vmem:[%s1 + $0x418] sm:$0xff]
      %v877 = vld [vmem:[%s1 + $0x420] sm:$0xff]
      %v878 = vld [vmem:[%s1 + $0x428] sm:$0xff]
      %v879 = vld [vmem:[%s1 + $0x430] sm:$0xff]
      %v880 = vld [vmem:[%s1 + $0x438] sm:$0xff]
      %v881 = vld [vmem:[%s1 + $0x440] sm:$0xff]
      %v882 = vld [vmem:[%s1 + $0x448] sm:$0xff]
      %v883 = vld [vmem:[%s1 + $0x450] sm:$0xff]
      %v884 = vld [vmem:[%s1 + $0x458] sm:$0xff]
      %v885 = vld [vmem:[%s1 + $0x460] sm:$0xff]
      %v886 = vld [vmem:[%s1 + $0x468] sm:$0xff]
      %v887 = vld [vmem:[%s1 + $0x470] sm:$0xff]
      %v888 = vld [vmem:[%s1 + $0x478] sm:$0xff]
      %v889 = vld [vmem:[%s2] sm:$0x1]
      %v891 = vlaneseq
      %v892 = vshrl.u32 %v891, 7
      %v893 = vsub.s32 0, %v892
      %v894 = vrot.slane %v889, %v893
      %896 = vmatprep.subr.mxu0 0.0
      %897 = vmatpush1.msra.mxu0 %v760
      %898 = vmatprep.subr.mxu0 0.0
      %899 = vmatpush1.msra.mxu0 %v759
      %900 = vmatprep.subr.mxu0 0.0
      %901 = vmatpush1.msra.mxu0 %v758
      %902 = vmatprep.subr.mxu0 0.0
      %903 = vmatpush1.msra.mxu0 %v757
      %904 = vmatprep.subr.mxu0 0.0
      %905 = vmatpush1.msra.mxu0 %v756
      %906 = vmatprep.subr.mxu0 0.0
      %907 = vmatpush1.msra.mxu0 %v755
      %908 = vmatprep.subr.mxu0 0.0
      %909 = vmatpush1.msra.mxu0 %v754
      %910 = vmatprep.subr.mxu0 0.0
      %911 = vmatpush1.msra.mxu0 %v753
      %912 = vmatprep.subr.mxu0 0.0
      %913 = vmatpush1.msra.mxu0 %v752
      %914 = vmatprep.subr.mxu0 0.0
      %915 = vmatpush1.msra.mxu0 %v751
      %916 = vmatprep.subr.mxu0 0.0
      %917 = vmatpush1.msra.mxu0 %v750
      %918 = vmatprep.subr.mxu0 0.0
      %919 = vmatpush1.msra.mxu0 %v749
      %920 = vmatprep.subr.mxu0 0.0
      %921 = vmatpush1.msra.mxu0 %v748
      %922 = vmatprep.subr.mxu0 0.0
      %923 = vmatpush1.msra.mxu0 %v747
      %924 = vmatprep.subr.mxu0 0.0
      %925 = vmatpush1.msra.mxu0 %v746
      %926 = vmatprep.subr.mxu0 0.0
      %927 = vmatpush1.msra.mxu0 %v745
      %928 = vmatprep.subr.mxu0 0.0
      %929 = vmatpush2.msra.mxu0 %v776
      %930 = vmatprep.subr.mxu0 0.0
      %931 = vmatpush2.msra.mxu0 %v775
      %932 = vmatprep.subr.mxu0 0.0
      %933 = vmatpush2.msra.mxu0 %v774
      %934 = vmatprep.subr.mxu0 0.0
      %935 = vmatpush2.msra.mxu0 %v773
      %936 = vmatprep.subr.mxu0 0.0
      %937 = vmatpush2.msra.mxu0 %v772
      %938 = vmatprep.subr.mxu0 0.0
      %939 = vmatpush2.msra.mxu0 %v771
      %940 = vmatprep.subr.mxu0 0.0
      %941 = vmatpush2.msra.mxu0 %v770
      %942 = vmatprep.subr.mxu0 0.0
      %943 = vmatpush2.msra.mxu0 %v769
      %944 = vmatprep.subr.mxu0 0.0
      %945 = vmatpush2.msra.mxu0 %v768
      %946 = vmatprep.subr.mxu0 0.0
      %947 = vmatpush2.msra.mxu0 %v767
      %948 = vmatprep.subr.mxu0 0.0
      %949 = vmatpush2.msra.mxu0 %v766
      %950 = vmatprep.subr.mxu0 0.0
      %951 = vmatpush2.msra.mxu0 %v765
      %952 = vmatprep.subr.mxu0 0.0
      %953 = vmatpush2.msra.mxu0 %v764
      %954 = vmatprep.subr.mxu0 0.0
      %955 = vmatpush2.msra.mxu0 %v763
      %956 = vmatprep.subr.mxu0 0.0
      %957 = vmatpush2.msra.mxu0 %v762
      %958 = vmatprep.subr.mxu0 0.0
      %959 = vmatpush2.msra.mxu0 %v761
      %960 = vmatprep.mubr.f32.mxu0 %v488
      %961 = vmatmul.mubr.f32.gmra.mxu0 %v383
      %v962 = vpop.f32.mrf.mxu0
      %v963 = vadd.f32 %v894, %v962
      %v964 = vpop.f32.mrf.mxu0
      %965 = vmatprep.mubr.f32.mxu0 %v490
      %966 = vmatmul.mubr.f32.gmra.mxu0 %v384
      %v967 = vpop.f32.mrf.mxu0
      %v968 = vadd.f32 %v894, %v967
      %v969 = vpop.f32.mrf.mxu0
      %970 = vmatprep.mubr.f32.mxu0 %v493
      %971 = vmatmul.mubr.f32.gmra.mxu0 %v386
      %v972 = vpop.f32.mrf.mxu0
      %v973 = vadd.f32 %v894, %v972
      %v974 = vpop.f32.mrf.mxu0
      %975 = vmatprep.mubr.f32.mxu0 %v495
      %976 = vmatmul.mubr.f32.gmra.mxu0 %v387
      %v977 = vpop.f32.mrf.mxu0
      %v978 = vadd.f32 %v894, %v977
      %v979 = vpop.f32.mrf.mxu0
      %980 = vmatprep.mubr.f32.mxu0 %v498
      %981 = vmatmul.mubr.f32.gmra.mxu0 %v389
      %v982 = vpop.f32.mrf.mxu0
      %v983 = vadd.f32 %v894, %v982
      %v984 = vpop.f32.mrf.mxu0
      %985 = vmatprep.mubr.f32.mxu0 %v500
      %986 = vmatmul.mubr.f32.gmra.mxu0 %v390
      %v987 = vpop.f32.mrf.mxu0
      %v988 = vadd.f32 %v894, %v987
      %v989 = vpop.f32.mrf.mxu0
      %990 = vmatprep.mubr.f32.mxu0 %v503
      %991 = vmatmul.mubr.f32.gmra.mxu0 %v392
      %v992 = vpop.f32.mrf.mxu0
      %v993 = vadd.f32 %v894, %v992
      %v994 = vpop.f32.mrf.mxu0
      %995 = vmatprep.mubr.f32.mxu0 %v505
      %996 = vmatmul.mubr.f32.gmra.mxu0 %v393
      %v997 = vpop.f32.mrf.mxu0
      %v998 = vadd.f32 %v894, %v997
      %v999 = vpop.f32.mrf.mxu0
      %1000 = vmatprep.mubr.f32.mxu0 %v508
      %1001 = vmatmul.mubr.f32.gmra.mxu0 %v395
      %v1002 = vpop.f32.mrf.mxu0
      %v1003 = vadd.f32 %v894, %v1002
      %v1004 = vpop.f32.mrf.mxu0
      %1005 = vmatprep.mubr.f32.mxu0 %v510
      %1006 = vmatmul.mubr.f32.gmra.mxu0 %v396
      %v1007 = vpop.f32.mrf.mxu0
      %v1008 = vadd.f32 %v894, %v1007
      %v1009 = vpop.f32.mrf.mxu0
      %1010 = vmatprep.mubr.f32.mxu0 %v513
      %1011 = vmatmul.mubr.f32.gmra.mxu0 %v398
      %v1012 = vpop.f32.mrf.mxu0
      %v1013 = vadd.f32 %v894, %v1012
      %v1014 = vpop.f32.mrf.mxu0
      %1015 = vmatprep.mubr.f32.mxu0 %v515
      %1016 = vmatmul.mubr.f32.gmra.mxu0 %v399
      %v1017 = vpop.f32.mrf.mxu0
      %v1018 = vadd.f32 %v894, %v1017
      %v1019 = vpop.f32.mrf.mxu0
      %1020 = vmatprep.mubr.f32.mxu0 %v518
      %1021 = vmatmul.mubr.f32.gmra.mxu0 %v401
      %v1022 = vpop.f32.mrf.mxu0
      %v1023 = vadd.f32 %v894, %v1022
      %v1024 = vpop.f32.mrf.mxu0
      %1025 = vmatprep.mubr.f32.mxu0 %v520
      %1026 = vmatmul.mubr.f32.gmra.mxu0 %v402
      %v1027 = vpop.f32.mrf.mxu0
      %v1028 = vadd.f32 %v894, %v1027
      %v1029 = vpop.f32.mrf.mxu0
      %1030 = vmatprep.mubr.f32.mxu0 %v523
      %1031 = vmatmul.mubr.f32.gmra.mxu0 %v404
      %v1032 = vpop.f32.mrf.mxu0
      %v1033 = vadd.f32 %v894, %v1032
      %v1034 = vpop.f32.mrf.mxu0
      %1035 = vmatprep.mubr.f32.mxu0 %v525
      %1036 = vmatmul.mubr.f32.gmra.mxu0 %v405
      %v1037 = vpop.f32.mrf.mxu0
      %v1038 = vadd.f32 %v894, %v1037
      %v1039 = vpop.f32.mrf.mxu0
      %1040 = vmatprep.mubr.f32.mxu0 %v528
      %1041 = vmatmul.mubr.f32.gmra.mxu0 %v407
      %v1042 = vpop.f32.mrf.mxu0
      %v1043 = vadd.f32 %v894, %v1042
      %v1044 = vpop.f32.mrf.mxu0
      %1045 = vmatprep.mubr.f32.mxu0 %v530
      %1046 = vmatmul.mubr.f32.gmra.mxu0 %v408
      %v1047 = vpop.f32.mrf.mxu0
      %v1048 = vadd.f32 %v894, %v1047
      %v1049 = vpop.f32.mrf.mxu0
      %1050 = vmatprep.mubr.f32.mxu0 %v533
      %1051 = vmatmul.mubr.f32.gmra.mxu0 %v410
      %v1052 = vpop.f32.mrf.mxu0
      %v1053 = vadd.f32 %v894, %v1052
      %v1054 = vpop.f32.mrf.mxu0
      %1055 = vmatprep.mubr.f32.mxu0 %v535
      %1056 = vmatmul.mubr.f32.gmra.mxu0 %v411
      %v1057 = vpop.f32.mrf.mxu0
      %v1058 = vadd.f32 %v894, %v1057
      %v1059 = vpop.f32.mrf.mxu0
      %1060 = vmatprep.mubr.f32.mxu0 %v538
      %1061 = vmatmul.mubr.f32.gmra.mxu0 %v413
      %v1062 = vpop.f32.mrf.mxu0
      %v1063 = vadd.f32 %v894, %v1062
      %v1064 = vpop.f32.mrf.mxu0
      %1065 = vmatprep.mubr.f32.mxu0 %v540
      %1066 = vmatmul.mubr.f32.gmra.mxu0 %v414
      %v1067 = vpop.f32.mrf.mxu0
      %v1068 = vadd.f32 %v894, %v1067
      %v1069 = vpop.f32.mrf.mxu0
      %1070 = vmatprep.mubr.f32.mxu0 %v543
      %1071 = vmatmul.mubr.f32.gmra.mxu0 %v416
      %v1072 = vpop.f32.mrf.mxu0
      %v1073 = vadd.f32 %v894, %v1072
      %v1074 = vpop.f32.mrf.mxu0
      %1075 = vmatprep.mubr.f32.mxu0 %v545
      %1076 = vmatmul.mubr.f32.gmra.mxu0 %v417
      %v1077 = vpop.f32.mrf.mxu0
      %v1078 = vadd.f32 %v894, %v1077
      %v1079 = vpop.f32.mrf.mxu0
      %1080 = vmatprep.mubr.f32.mxu0 %v548
      %1081 = vmatmul.mubr.f32.gmra.mxu0 %v419
      %v1082 = vpop.f32.mrf.mxu0
      %v1083 = vadd.f32 %v894, %v1082
      %v1084 = vpop.f32.mrf.mxu0
      %1085 = vmatprep.mubr.f32.mxu0 %v550
      %1086 = vmatmul.mubr.f32.gmra.mxu0 %v420
      %v1087 = vpop.f32.mrf.mxu0
      %v1088 = vadd.f32 %v894, %v1087
      %v1089 = vpop.f32.mrf.mxu0
      %1090 = vmatprep.mubr.f32.mxu0 %v553
      %1091 = vmatmul.mubr.f32.gmra.mxu0 %v422
      %v1092 = vpop.f32.mrf.mxu0
      %v1093 = vadd.f32 %v894, %v1092
      %v1094 = vpop.f32.mrf.mxu0
      %1095 = vmatprep.mubr.f32.mxu0 %v555
      %1096 = vmatmul.mubr.f32.gmra.mxu0 %v423
      %v1097 = vpop.f32.mrf.mxu0
      %v1098 = vadd.f32 %v894, %v1097
      %v1099 = vpop.f32.mrf.mxu0
      %1100 = vmatprep.mubr.f32.mxu0 %v558
      %1101 = vmatmul.mubr.f32.gmra.mxu0 %v425
      %v1102 = vpop.f32.mrf.mxu0
      %v1103 = vadd.f32 %v894, %v1102
      %v1104 = vpop.f32.mrf.mxu0
      %1105 = vmatprep.mubr.f32.mxu0 %v560
      %1106 = vmatmul.mubr.f32.gmra.mxu0 %v426
      %v1107 = vpop.f32.mrf.mxu0
      %v1108 = vadd.f32 %v894, %v1107
      %v1109 = vpop.f32.mrf.mxu0
      %1110 = vmatprep.mubr.f32.mxu0 %v563
      %1111 = vmatmul.mubr.f32.gmra.mxu0 %v428
      %v1112 = vpop.f32.mrf.mxu0
      %v1113 = vadd.f32 %v894, %v1112
      %v1114 = vpop.f32.mrf.mxu0
      %1115 = vmatprep.mubr.f32.mxu0 %v565
      %1116 = vmatmul.mubr.f32.gmra.mxu0 %v429
      %v1117 = vpop.f32.mrf.mxu0
      %v1118 = vadd.f32 %v894, %v1117
      %v1119 = vpop.f32.mrf.mxu0
      %1120 = vdwg.mxu0
      %1121 = vmatprep.subr.mxu0 0.0
      %1122 = vmatpush1.msra.mxu0 %v792
      %1123 = vmatprep.subr.mxu0 0.0
      %1124 = vmatpush1.msra.mxu0 %v791
      %1125 = vmatprep.subr.mxu0 0.0
      %1126 = vmatpush1.msra.mxu0 %v790
      %1127 = vmatprep.subr.mxu0 0.0
      %1128 = vmatpush1.msra.mxu0 %v789
      %1129 = vmatprep.subr.mxu0 0.0
      %1130 = vmatpush1.msra.mxu0 %v788
      %1131 = vmatprep.subr.mxu0 0.0
      %1132 = vmatpush1.msra.mxu0 %v787
      %1133 = vmatprep.subr.mxu0 0.0
      %1134 = vmatpush1.msra.mxu0 %v786
      %1135 = vmatprep.subr.mxu0 0.0
      %1136 = vmatpush1.msra.mxu0 %v785
      %1137 = vmatprep.subr.mxu0 0.0
      %1138 = vmatpush1.msra.mxu0 %v784
      %1139 = vmatprep.subr.mxu0 0.0
      %1140 = vmatpush1.msra.mxu0 %v783
      %1141 = vmatprep.subr.mxu0 0.0
      %1142 = vmatpush1.msra.mxu0 %v782
      %1143 = vmatprep.subr.mxu0 0.0
      %1144 = vmatpush1.msra.mxu0 %v781
      %1145 = vmatprep.subr.mxu0 0.0
      %1146 = vmatpush1.msra.mxu0 %v780
      %1147 = vmatprep.subr.mxu0 0.0
      %1148 = vmatpush1.msra.mxu0 %v779
      %1149 = vmatprep.subr.mxu0 0.0
      %1150 = vmatpush1.msra.mxu0 %v778
      %1151 = vmatprep.subr.mxu0 0.0
      %1152 = vmatpush1.msra.mxu0 %v777
      %1153 = vmatprep.subr.mxu0 0.0
      %1154 = vmatpush2.msra.mxu0 %v808
      %1155 = vmatprep.subr.mxu0 0.0
      %1156 = vmatpush2.msra.mxu0 %v807
      %1157 = vmatprep.subr.mxu0 0.0
      %1158 = vmatpush2.msra.mxu0 %v806
      %1159 = vmatprep.subr.mxu0 0.0
      %1160 = vmatpush2.msra.mxu0 %v805
      %1161 = vmatprep.subr.mxu0 0.0
      %1162 = vmatpush2.msra.mxu0 %v804
      %1163 = vmatprep.subr.mxu0 0.0
      %1164 = vmatpush2.msra.mxu0 %v803
      %1165 = vmatprep.subr.mxu0 0.0
      %1166 = vmatpush2.msra.mxu0 %v802
      %1167 = vmatprep.subr.mxu0 0.0
      %1168 = vmatpush2.msra.mxu0 %v801
      %1169 = vmatprep.subr.mxu0 0.0
      %1170 = vmatpush2.msra.mxu0 %v800
      %1171 = vmatprep.subr.mxu0 0.0
      %1172 = vmatpush2.msra.mxu0 %v799
      %1173 = vmatprep.subr.mxu0 0.0
      %1174 = vmatpush2.msra.mxu0 %v798
      %1175 = vmatprep.subr.mxu0 0.0
      %1176 = vmatpush2.msra.mxu0 %v797
      %1177 = vmatprep.subr.mxu0 0.0
      %1178 = vmatpush2.msra.mxu0 %v796
      %1179 = vmatprep.subr.mxu0 0.0
      %1180 = vmatpush2.msra.mxu0 %v795
      %1181 = vmatprep.subr.mxu0 0.0
      %1182 = vmatpush2.msra.mxu0 %v794
      %1183 = vmatprep.subr.mxu0 0.0
      %1184 = vmatpush2.msra.mxu0 %v793
      %1185 = vmatprep.mubr.f32.mxu0 %v386
      %1186 = vmatmul.mubr.f32.gmra.mxu0 %v601
      %v1187 = vpop.f32.mrf.mxu0
      %v1188 = vadd.f32 %v963, %v1187
      %v1189 = vpop.f32.mrf.mxu0
      %1190 = vmatprep.mubr.f32.mxu0 %v387
      %1191 = vmatmul.mubr.f32.gmra.mxu0 %v603
      %v1192 = vpop.f32.mrf.mxu0
      %v1193 = vadd.f32 %v968, %v1192
      %v1194 = vpop.f32.mrf.mxu0
      %1195 = vmatprep.mubr.f32.mxu0 %v389
      %1196 = vmatmul.mubr.f32.gmra.mxu0 %v606
      %v1197 = vpop.f32.mrf.mxu0
      %v1198 = vadd.f32 %v973, %v1197
      %v1199 = vpop.f32.mrf.mxu0
      %1200 = vmatprep.mubr.f32.mxu0 %v390
      %1201 = vmatmul.mubr.f32.gmra.mxu0 %v608
      %v1202 = vpop.f32.mrf.mxu0
      %v1203 = vadd.f32 %v978, %v1202
      %v1204 = vpop.f32.mrf.mxu0
      %1205 = vmatprep.mubr.f32.mxu0 %v392
      %1206 = vmatmul.mubr.f32.gmra.mxu0 %v611
      %v1207 = vpop.f32.mrf.mxu0
      %v1208 = vadd.f32 %v983, %v1207
      %v1209 = vpop.f32.mrf.mxu0
      %1210 = vmatprep.mubr.f32.mxu0 %v393
      %1211 = vmatmul.mubr.f32.gmra.mxu0 %v613
      %v1212 = vpop.f32.mrf.mxu0
      %v1213 = vadd.f32 %v988, %v1212
      %v1214 = vpop.f32.mrf.mxu0
      %1215 = vmatprep.mubr.f32.mxu0 %v395
      %1216 = vmatmul.mubr.f32.gmra.mxu0 %v616
      %v1217 = vpop.f32.mrf.mxu0
      %v1218 = vadd.f32 %v993, %v1217
      %v1219 = vpop.f32.mrf.mxu0
      %1220 = vmatprep.mubr.f32.mxu0 %v396
      %1221 = vmatmul.mubr.f32.gmra.mxu0 %v618
      %v1222 = vpop.f32.mrf.mxu0
      %v1223 = vadd.f32 %v998, %v1222
      %v1224 = vpop.f32.mrf.mxu0
      %1225 = vmatprep.mubr.f32.mxu0 %v398
      %1226 = vmatmul.mubr.f32.gmra.mxu0 %v621
      %v1227 = vpop.f32.mrf.mxu0
      %v1228 = vadd.f32 %v1003, %v1227
      %v1229 = vpop.f32.mrf.mxu0
      %1230 = vmatprep.mubr.f32.mxu0 %v399
      %1231 = vmatmul.mubr.f32.gmra.mxu0 %v623
      %v1232 = vpop.f32.mrf.mxu0
      %v1233 = vadd.f32 %v1008, %v1232
      %v1234 = vpop.f32.mrf.mxu0
      %1235 = vmatprep.mubr.f32.mxu0 %v401
      %1236 = vmatmul.mubr.f32.gmra.mxu0 %v626
      %v1237 = vpop.f32.mrf.mxu0
      %v1238 = vadd.f32 %v1013, %v1237
      %v1239 = vpop.f32.mrf.mxu0
      %1240 = vmatprep.mubr.f32.mxu0 %v402
      %1241 = vmatmul.mubr.f32.gmra.mxu0 %v628
      %v1242 = vpop.f32.mrf.mxu0
      %v1243 = vadd.f32 %v1018, %v1242
      %v1244 = vpop.f32.mrf.mxu0
      %1245 = vmatprep.mubr.f32.mxu0 %v404
      %1246 = vmatmul.mubr.f32.gmra.mxu0 %v631
      %v1247 = vpop.f32.mrf.mxu0
      %v1248 = vadd.f32 %v1023, %v1247
      %v1249 = vpop.f32.mrf.mxu0
      %1250 = vmatprep.mubr.f32.mxu0 %v405
      %1251 = vmatmul.mubr.f32.gmra.mxu0 %v633
      %v1252 = vpop.f32.mrf.mxu0
      %v1253 = vadd.f32 %v1028, %v1252
      %v1254 = vpop.f32.mrf.mxu0
      %1255 = vmatprep.mubr.f32.mxu0 %v407
      %1256 = vmatmul.mubr.f32.gmra.mxu0 %v636
      %v1257 = vpop.f32.mrf.mxu0
      %v1258 = vadd.f32 %v1033, %v1257
      %v1259 = vpop.f32.mrf.mxu0
      %1260 = vmatprep.mubr.f32.mxu0 %v408
      %1261 = vmatmul.mubr.f32.gmra.mxu0 %v638
      %v1262 = vpop.f32.mrf.mxu0
      %v1263 = vadd.f32 %v1038, %v1262
      %v1264 = vpop.f32.mrf.mxu0
      %1265 = vmatprep.mubr.f32.mxu0 %v410
      %1266 = vmatmul.mubr.f32.gmra.mxu0 %v641
      %v1267 = vpop.f32.mrf.mxu0
      %v1268 = vadd.f32 %v1043, %v1267
      %v1269 = vpop.f32.mrf.mxu0
      %1270 = vmatprep.mubr.f32.mxu0 %v411
      %1271 = vmatmul.mubr.f32.gmra.mxu0 %v643
      %v1272 = vpop.f32.mrf.mxu0
      %v1273 = vadd.f32 %v1048, %v1272
      %v1274 = vpop.f32.mrf.mxu0
      %1275 = vmatprep.mubr.f32.mxu0 %v413
      %1276 = vmatmul.mubr.f32.gmra.mxu0 %v646
      %v1277 = vpop.f32.mrf.mxu0
      %v1278 = vadd.f32 %v1053, %v1277
      %v1279 = vpop.f32.mrf.mxu0
      %1280 = vmatprep.mubr.f32.mxu0 %v414
      %1281 = vmatmul.mubr.f32.gmra.mxu0 %v648
      %v1282 = vpop.f32.mrf.mxu0
      %v1283 = vadd.f32 %v1058, %v1282
      %v1284 = vpop.f32.mrf.mxu0
      %1285 = vmatprep.mubr.f32.mxu0 %v416
      %1286 = vmatmul.mubr.f32.gmra.mxu0 %v651
      %v1287 = vpop.f32.mrf.mxu0
      %v1288 = vadd.f32 %v1063, %v1287
      %v1289 = vpop.f32.mrf.mxu0
      %1290 = vmatprep.mubr.f32.mxu0 %v417
      %1291 = vmatmul.mubr.f32.gmra.mxu0 %v653
      %v1292 = vpop.f32.mrf.mxu0
      %v1293 = vadd.f32 %v1068, %v1292
      %v1294 = vpop.f32.mrf.mxu0
      %1295 = vmatprep.mubr.f32.mxu0 %v419
      %1296 = vmatmul.mubr.f32.gmra.mxu0 %v656
      %v1297 = vpop.f32.mrf.mxu0
      %v1298 = vadd.f32 %v1073, %v1297
      %v1299 = vpop.f32.mrf.mxu0
      %1300 = vmatprep.mubr.f32.mxu0 %v420
      %1301 = vmatmul.mubr.f32.gmra.mxu0 %v658
      %v1302 = vpop.f32.mrf.mxu0
      %v1303 = vadd.f32 %v1078, %v1302
      %v1304 = vpop.f32.mrf.mxu0
      %1305 = vmatprep.mubr.f32.mxu0 %v422
      %1306 = vmatmul.mubr.f32.gmra.mxu0 %v661
      %v1307 = vpop.f32.mrf.mxu0
      %v1308 = vadd.f32 %v1083, %v1307
      %v1309 = vpop.f32.mrf.mxu0
      %1310 = vmatprep.mubr.f32.mxu0 %v423
      %1311 = vmatmul.mubr.f32.gmra.mxu0 %v663
      %v1312 = vpop.f32.mrf.mxu0
      %v1313 = vadd.f32 %v1088, %v1312
      %v1314 = vpop.f32.mrf.mxu0
      %1315 = vmatprep.mubr.f32.mxu0 %v425
      %1316 = vmatmul.mubr.f32.gmra.mxu0 %v666
      %v1317 = vpop.f32.mrf.mxu0
      %v1318 = vadd.f32 %v1093, %v1317
      %v1319 = vpop.f32.mrf.mxu0
      %1320 = vmatprep.mubr.f32.mxu0 %v426
      %1321 = vmatmul.mubr.f32.gmra.mxu0 %v668
      %v1322 = vpop.f32.mrf.mxu0
      %v1323 = vadd.f32 %v1098, %v1322
      %v1324 = vpop.f32.mrf.mxu0
      %1325 = vmatprep.mubr.f32.mxu0 %v428
      %1326 = vmatmul.mubr.f32.gmra.mxu0 %v671
      %v1327 = vpop.f32.mrf.mxu0
      %v1328 = vadd.f32 %v1103, %v1327
      %v1329 = vpop.f32.mrf.mxu0
      %1330 = vmatprep.mubr.f32.mxu0 %v429
      %1331 = vmatmul.mubr.f32.gmra.mxu0 %v673
      %v1332 = vpop.f32.mrf.mxu0
      %v1333 = vadd.f32 %v1108, %v1332
      %v1334 = vpop.f32.mrf.mxu0
      %1335 = vmatprep.mubr.f32.mxu0 %v431
      %1336 = vmatmul.mubr.f32.gmra.mxu0 %v676
      %v1337 = vpop.f32.mrf.mxu0
      %v1338 = vadd.f32 %v1113, %v1337
      %v1339 = vpop.f32.mrf.mxu0
      %1340 = vmatprep.mubr.f32.mxu0 %v432
      %1341 = vmatmul.mubr.f32.gmra.mxu0 %v678
      %v1342 = vpop.f32.mrf.mxu0
      %v1343 = vadd.f32 %v1118, %v1342
      %v1344 = vpop.f32.mrf.mxu0
      %1345 = vdwg.mxu0
      %1346 = vmatprep.subr.mxu0 0.0
      %1347 = vmatpush1.msra.mxu0 %v824
      %1348 = vmatprep.subr.mxu0 0.0
      %1349 = vmatpush1.msra.mxu0 %v823
      %1350 = vmatprep.subr.mxu0 0.0
      %1351 = vmatpush1.msra.mxu0 %v822
      %1352 = vmatprep.subr.mxu0 0.0
      %1353 = vmatpush1.msra.mxu0 %v821
      %1354 = vmatprep.subr.mxu0 0.0
      %1355 = vmatpush1.msra.mxu0 %v820
      %1356 = vmatprep.subr.mxu0 0.0
      %1357 = vmatpush1.msra.mxu0 %v819
      %1358 = vmatprep.subr.mxu0 0.0
      %1359 = vmatpush1.msra.mxu0 %v818
      %1360 = vmatprep.subr.mxu0 0.0
      %1361 = vmatpush1.msra.mxu0 %v817
      %1362 = vmatprep.subr.mxu0 0.0
      %1363 = vmatpush1.msra.mxu0 %v816
      %1364 = vmatprep.subr.mxu0 0.0
      %1365 = vmatpush1.msra.mxu0 %v815
      %1366 = vmatprep.subr.mxu0 0.0
      %1367 = vmatpush1.msra.mxu0 %v814
      %1368 = vmatprep.subr.mxu0 0.0
      %1369 = vmatpush1.msra.mxu0 %v813
      %1370 = vmatprep.subr.mxu0 0.0
      %1371 = vmatpush1.msra.mxu0 %v812
      %1372 = vmatprep.subr.mxu0 0.0
      %1373 = vmatpush1.msra.mxu0 %v811
      %1374 = vmatprep.subr.mxu0 0.0
      %1375 = vmatpush1.msra.mxu0 %v810
      %1376 = vmatprep.subr.mxu0 0.0
      %1377 = vmatpush1.msra.mxu0 %v809
      %1378 = vmatprep.subr.mxu0 0.0
      %1379 = vmatpush2.msra.mxu0 %v840
      %1380 = vmatprep.subr.mxu0 0.0
      %1381 = vmatpush2.msra.mxu0 %v839
      %1382 = vmatprep.subr.mxu0 0.0
      %1383 = vmatpush2.msra.mxu0 %v838
      %1384 = vmatprep.subr.mxu0 0.0
      %1385 = vmatpush2.msra.mxu0 %v837
      %1386 = vmatprep.subr.mxu0 0.0
      %1387 = vmatpush2.msra.mxu0 %v836
      %1388 = vmatprep.subr.mxu0 0.0
      %1389 = vmatpush2.msra.mxu0 %v835
      %1390 = vmatprep.subr.mxu0 0.0
      %1391 = vmatpush2.msra.mxu0 %v834
      %1392 = vmatprep.subr.mxu0 0.0
      %1393 = vmatpush2.msra.mxu0 %v833
      %1394 = vmatprep.subr.mxu0 0.0
      %1395 = vmatpush2.msra.mxu0 %v832
      %1396 = vmatprep.subr.mxu0 0.0
      %1397 = vmatpush2.msra.mxu0 %v831
      %1398 = vmatprep.subr.mxu0 0.0
      %1399 = vmatpush2.msra.mxu0 %v830
      %1400 = vmatprep.subr.mxu0 0.0
      %1401 = vmatpush2.msra.mxu0 %v829
      %1402 = vmatprep.subr.mxu0 0.0
      %1403 = vmatpush2.msra.mxu0 %v828
      %1404 = vmatprep.subr.mxu0 0.0
      %1405 = vmatpush2.msra.mxu0 %v827
      %1406 = vmatprep.subr.mxu0 0.0
      %1407 = vmatpush2.msra.mxu0 %v826
      %1408 = vmatprep.subr.mxu0 0.0
      %1409 = vmatpush2.msra.mxu0 %v825
      %1410 = vmatprep.mubr.f32.mxu0 %v606
      %1411 = vmatmul.mubr.f32.gmra.mxu0 %v493
      %v1412 = vpop.f32.mrf.mxu0
      %v1413 = vadd.f32 %v1188, %v1412
      %v1414 = vpop.f32.mrf.mxu0
      %1415 = vmatprep.mubr.f32.mxu0 %v608
      %1416 = vmatmul.mubr.f32.gmra.mxu0 %v495
      %v1417 = vpop.f32.mrf.mxu0
      %v1418 = vadd.f32 %v1193, %v1417
      %v1419 = vpop.f32.mrf.mxu0
      %1420 = vmatprep.mubr.f32.mxu0 %v611
      %1421 = vmatmul.mubr.f32.gmra.mxu0 %v498
      %v1422 = vpop.f32.mrf.mxu0
      %v1423 = vadd.f32 %v1198, %v1422
      %v1424 = vpop.f32.mrf.mxu0
      %1425 = vmatprep.mubr.f32.mxu0 %v613
      %1426 = vmatmul.mubr.f32.gmra.mxu0 %v500
      %v1427 = vpop.f32.mrf.mxu0
      %v1428 = vadd.f32 %v1203, %v1427
      %v1429 = vpop.f32.mrf.mxu0
      %1430 = vmatprep.mubr.f32.mxu0 %v616
      %1431 = vmatmul.mubr.f32.gmra.mxu0 %v503
      %v1432 = vpop.f32.mrf.mxu0
      %v1433 = vadd.f32 %v1208, %v1432
      %v1434 = vpop.f32.mrf.mxu0
      %1435 = vmatprep.mubr.f32.mxu0 %v618
      %1436 = vmatmul.mubr.f32.gmra.mxu0 %v505
      %v1437 = vpop.f32.mrf.mxu0
      %v1438 = vadd.f32 %v1213, %v1437
      %v1439 = vpop.f32.mrf.mxu0
      %1440 = vmatprep.mubr.f32.mxu0 %v621
      %1441 = vmatmul.mubr.f32.gmra.mxu0 %v508
      %v1442 = vpop.f32.mrf.mxu0
      %v1443 = vadd.f32 %v1218, %v1442
      %v1444 = vpop.f32.mrf.mxu0
      %1445 = vmatprep.mubr.f32.mxu0 %v623
      %1446 = vmatmul.mubr.f32.gmra.mxu0 %v510
      %v1447 = vpop.f32.mrf.mxu0
      %v1448 = vadd.f32 %v1223, %v1447
      %v1449 = vpop.f32.mrf.mxu0
      %1450 = vmatprep.mubr.f32.mxu0 %v626
      %1451 = vmatmul.mubr.f32.gmra.mxu0 %v513
      %v1452 = vpop.f32.mrf.mxu0
      %v1453 = vadd.f32 %v1228, %v1452
      %v1454 = vpop.f32.mrf.mxu0
      %1455 = vmatprep.mubr.f32.mxu0 %v628
      %1456 = vmatmul.mubr.f32.gmra.mxu0 %v515
      %v1457 = vpop.f32.mrf.mxu0
      %v1458 = vadd.f32 %v1233, %v1457
      %v1459 = vpop.f32.mrf.mxu0
      %1460 = vmatprep.mubr.f32.mxu0 %v631
      %1461 = vmatmul.mubr.f32.gmra.mxu0 %v518
      %v1462 = vpop.f32.mrf.mxu0
      %v1463 = vadd.f32 %v1238, %v1462
      %v1464 = vpop.f32.mrf.mxu0
      %1465 = vmatprep.mubr.f32.mxu0 %v633
      %1466 = vmatmul.mubr.f32.gmra.mxu0 %v520
      %v1467 = vpop.f32.mrf.mxu0
      %v1468 = vadd.f32 %v1243, %v1467
      %v1469 = vpop.f32.mrf.mxu0
      %1470 = vmatprep.mubr.f32.mxu0 %v636
      %1471 = vmatmul.mubr.f32.gmra.mxu0 %v523
      %v1472 = vpop.f32.mrf.mxu0
      %v1473 = vadd.f32 %v1248, %v1472
      %v1474 = vpop.f32.mrf.mxu0
      %1475 = vmatprep.mubr.f32.mxu0 %v638
      %1476 = vmatmul.mubr.f32.gmra.mxu0 %v525
      %v1477 = vpop.f32.mrf.mxu0
      %v1478 = vadd.f32 %v1253, %v1477
      %v1479 = vpop.f32.mrf.mxu0
      %1480 = vmatprep.mubr.f32.mxu0 %v641
      %1481 = vmatmul.mubr.f32.gmra.mxu0 %v528
      %v1482 = vpop.f32.mrf.mxu0
      %v1483 = vadd.f32 %v1258, %v1482
      %v1484 = vpop.f32.mrf.mxu0
      %1485 = vmatprep.mubr.f32.mxu0 %v643
      %1486 = vmatmul.mubr.f32.gmra.mxu0 %v530
      %v1487 = vpop.f32.mrf.mxu0
      %v1488 = vadd.f32 %v1263, %v1487
      %v1489 = vpop.f32.mrf.mxu0
      %1490 = vmatprep.mubr.f32.mxu0 %v646
      %1491 = vmatmul.mubr.f32.gmra.mxu0 %v533
      %v1492 = vpop.f32.mrf.mxu0
      %v1493 = vadd.f32 %v1268, %v1492
      %v1494 = vpop.f32.mrf.mxu0
      %1495 = vmatprep.mubr.f32.mxu0 %v648
      %1496 = vmatmul.mubr.f32.gmra.mxu0 %v535
      %v1497 = vpop.f32.mrf.mxu0
      %v1498 = vadd.f32 %v1273, %v1497
      %v1499 = vpop.f32.mrf.mxu0
      %1500 = vmatprep.mubr.f32.mxu0 %v651
      %1501 = vmatmul.mubr.f32.gmra.mxu0 %v538
      %v1502 = vpop.f32.mrf.mxu0
      %v1503 = vadd.f32 %v1278, %v1502
      %v1504 = vpop.f32.mrf.mxu0
      %1505 = vmatprep.mubr.f32.mxu0 %v653
      %1506 = vmatmul.mubr.f32.gmra.mxu0 %v540
      %v1507 = vpop.f32.mrf.mxu0
      %v1508 = vadd.f32 %v1283, %v1507
      %v1509 = vpop.f32.mrf.mxu0
      %1510 = vmatprep.mubr.f32.mxu0 %v656
      %1511 = vmatmul.mubr.f32.gmra.mxu0 %v543
      %v1512 = vpop.f32.mrf.mxu0
      %v1513 = vadd.f32 %v1288, %v1512
      %v1514 = vpop.f32.mrf.mxu0
      %1515 = vmatprep.mubr.f32.mxu0 %v658
      %1516 = vmatmul.mubr.f32.gmra.mxu0 %v545
      %v1517 = vpop.f32.mrf.mxu0
      %v1518 = vadd.f32 %v1293, %v1517
      %v1519 = vpop.f32.mrf.mxu0
      %1520 = vmatprep.mubr.f32.mxu0 %v661
      %1521 = vmatmul.mubr.f32.gmra.mxu0 %v548
      %v1522 = vpop.f32.mrf.mxu0
      %v1523 = vadd.f32 %v1298, %v1522
      %v1524 = vpop.f32.mrf.mxu0
      %1525 = vmatprep.mubr.f32.mxu0 %v663
      %1526 = vmatmul.mubr.f32.gmra.mxu0 %v550
      %v1527 = vpop.f32.mrf.mxu0
      %v1528 = vadd.f32 %v1303, %v1527
      %v1529 = vpop.f32.mrf.mxu0
      %1530 = vmatprep.mubr.f32.mxu0 %v666
      %1531 = vmatmul.mubr.f32.gmra.mxu0 %v553
      %v1532 = vpop.f32.mrf.mxu0
      %v1533 = vadd.f32 %v1308, %v1532
      %v1534 = vpop.f32.mrf.mxu0
      %1535 = vmatprep.mubr.f32.mxu0 %v668
      %1536 = vmatmul.mubr.f32.gmra.mxu0 %v555
      %v1537 = vpop.f32.mrf.mxu0
      %v1538 = vadd.f32 %v1313, %v1537
      %v1539 = vpop.f32.mrf.mxu0
      %1540 = vmatprep.mubr.f32.mxu0 %v671
      %1541 = vmatmul.mubr.f32.gmra.mxu0 %v558
      %v1542 = vpop.f32.mrf.mxu0
      %v1543 = vadd.f32 %v1318, %v1542
      %v1544 = vpop.f32.mrf.mxu0
      %1545 = vmatprep.mubr.f32.mxu0 %v673
      %1546 = vmatmul.mubr.f32.gmra.mxu0 %v560
      %v1547 = vpop.f32.mrf.mxu0
      %v1548 = vadd.f32 %v1323, %v1547
      %v1549 = vpop.f32.mrf.mxu0
      %1550 = vmatprep.mubr.f32.mxu0 %v676
      %1551 = vmatmul.mubr.f32.gmra.mxu0 %v563
      %v1552 = vpop.f32.mrf.mxu0
      %v1553 = vadd.f32 %v1328, %v1552
      %v1554 = vpop.f32.mrf.mxu0
      %1555 = vmatprep.mubr.f32.mxu0 %v678
      %1556 = vmatmul.mubr.f32.gmra.mxu0 %v565
      %v1557 = vpop.f32.mrf.mxu0
      %v1558 = vadd.f32 %v1333, %v1557
      %v1559 = vpop.f32.mrf.mxu0
      %1560 = vmatprep.mubr.f32.mxu0 %v723
      %1561 = vmatmul.mubr.f32.gmra.mxu0 %v716
      %v1562 = vpop.f32.mrf.mxu0
      %v1563 = vadd.f32 %v1338, %v1562
      %v1564 = vpop.f32.mrf.mxu0
      %1565 = vmatprep.mubr.f32.mxu0 %v725
      %1566 = vmatmul.mubr.f32.gmra.mxu0 %v718
      %v1567 = vpop.f32.mrf.mxu0
      %v1568 = vadd.f32 %v1343, %v1567
      %v1569 = vpop.f32.mrf.mxu0
      %1570 = vdwg.mxu0
      %1571 = vmatprep.subr.mxu0 0.0
      %1572 = vmatpush1.msra.mxu0 %v856
      %1573 = vmatprep.subr.mxu0 0.0
      %1574 = vmatpush1.msra.mxu0 %v855
      %1575 = vmatprep.subr.mxu0 0.0
      %1576 = vmatpush1.msra.mxu0 %v854
      %1577 = vmatprep.subr.mxu0 0.0
      %1578 = vmatpush1.msra.mxu0 %v853
      %1579 = vmatprep.subr.mxu0 0.0
      %1580 = vmatpush1.msra.mxu0 %v852
      %1581 = vmatprep.subr.mxu0 0.0
      %1582 = vmatpush1.msra.mxu0 %v851
      %1583 = vmatprep.subr.mxu0 0.0
      %1584 = vmatpush1.msra.mxu0 %v850
      %1585 = vmatprep.subr.mxu0 0.0
      %1586 = vmatpush1.msra.mxu0 %v849
      %1587 = vmatprep.subr.mxu0 0.0
      %1588 = vmatpush1.msra.mxu0 %v848
      %1589 = vmatprep.subr.mxu0 0.0
      %1590 = vmatpush1.msra.mxu0 %v847
      %1591 = vmatprep.subr.mxu0 0.0
      %1592 = vmatpush1.msra.mxu0 %v846
      %1593 = vmatprep.subr.mxu0 0.0
      %1594 = vmatpush1.msra.mxu0 %v845
      %1595 = vmatprep.subr.mxu0 0.0
      %1596 = vmatpush1.msra.mxu0 %v844
      %1597 = vmatprep.subr.mxu0 0.0
      %1598 = vmatpush1.msra.mxu0 %v843
      %1599 = vmatprep.subr.mxu0 0.0
      %1600 = vmatpush1.msra.mxu0 %v842
      %1601 = vmatprep.subr.mxu0 0.0
      %1602 = vmatpush1.msra.mxu0 %v841
      %1603 = vmatprep.subr.mxu0 0.0
      %1604 = vmatpush2.msra.mxu0 %v872
      %1605 = vmatprep.subr.mxu0 0.0
      %1606 = vmatpush2.msra.mxu0 %v871
      %1607 = vmatprep.subr.mxu0 0.0
      %1608 = vmatpush2.msra.mxu0 %v870
      %1609 = vmatprep.subr.mxu0 0.0
      %1610 = vmatpush2.msra.mxu0 %v869
      %1611 = vmatprep.subr.mxu0 0.0
      %1612 = vmatpush2.msra.mxu0 %v868
      %1613 = vmatprep.subr.mxu0 0.0
      %1614 = vmatpush2.msra.mxu0 %v867
      %1615 = vmatprep.subr.mxu0 0.0
      %1616 = vmatpush2.msra.mxu0 %v866
      %1617 = vmatprep.subr.mxu0 0.0
      %1618 = vmatpush2.msra.mxu0 %v865
      %1619 = vmatprep.subr.mxu0 0.0
      %1620 = vmatpush2.msra.mxu0 %v864
      %1621 = vmatprep.subr.mxu0 0.0
      %1622 = vmatpush2.msra.mxu0 %v863
      %1623 = vmatprep.subr.mxu0 0.0
      %1624 = vmatpush2.msra.mxu0 %v862
      %1625 = vmatprep.subr.mxu0 0.0
      %1626 = vmatpush2.msra.mxu0 %v861
      %1627 = vmatprep.subr.mxu0 0.0
      %1628 = vmatpush2.msra.mxu0 %v860
      %1629 = vmatprep.subr.mxu0 0.0
      %1630 = vmatpush2.msra.mxu0 %v859
      %1631 = vmatprep.subr.mxu0 0.0
      %1632 = vmatpush2.msra.mxu0 %v858
      %1633 = vmatprep.subr.mxu0 0.0
      %1634 = vmatpush2.msra.mxu0 %v857
      %1635 = vmatprep.mubr.f32.mxu0 %v498
      %1636 = vmatmul.mubr.f32.gmra.mxu0 %v389
      %v1637 = vpop.f32.mrf.mxu0
      %v1638 = vadd.f32 %v1413, %v1637
      %v1639 = vpop.f32.mrf.mxu0
      %1640 = vmatprep.mubr.f32.mxu0 %v500
      %1641 = vmatmul.mubr.f32.gmra.mxu0 %v390
      %v1642 = vpop.f32.mrf.mxu0
      %v1643 = vadd.f32 %v1418, %v1642
      %v1644 = vpop.f32.mrf.mxu0
      %1645 = vmatprep.mubr.f32.mxu0 %v503
      %1646 = vmatmul.mubr.f32.gmra.mxu0 %v392
      %v1647 = vpop.f32.mrf.mxu0
      %v1648 = vadd.f32 %v1423, %v1647
      %v1649 = vpop.f32.mrf.mxu0
      %1650 = vmatprep.mubr.f32.mxu0 %v505
      %1651 = vmatmul.mubr.f32.gmra.mxu0 %v393
      %v1652 = vpop.f32.mrf.mxu0
      %v1653 = vadd.f32 %v1428, %v1652
      %v1654 = vpop.f32.mrf.mxu0
      %1655 = vmatprep.mubr.f32.mxu0 %v508
      %1656 = vmatmul.mubr.f32.gmra.mxu0 %v395
      %v1657 = vpop.f32.mrf.mxu0
      %v1658 = vadd.f32 %v1433, %v1657
      %v1659 = vpop.f32.mrf.mxu0
      %1660 = vmatprep.mubr.f32.mxu0 %v510
      %1661 = vmatmul.mubr.f32.gmra.mxu0 %v396
      %v1662 = vpop.f32.mrf.mxu0
      %v1663 = vadd.f32 %v1438, %v1662
      %v1664 = vpop.f32.mrf.mxu0
      %1665 = vmatprep.mubr.f32.mxu0 %v513
      %1666 = vmatmul.mubr.f32.gmra.mxu0 %v398
      %v1667 = vpop.f32.mrf.mxu0
      %v1668 = vadd.f32 %v1443, %v1667
      %v1669 = vpop.f32.mrf.mxu0
      %1670 = vmatprep.mubr.f32.mxu0 %v515
      %1671 = vmatmul.mubr.f32.gmra.mxu0 %v399
      %v1672 = vpop.f32.mrf.mxu0
      %v1673 = vadd.f32 %v1448, %v1672
      %v1674 = vpop.f32.mrf.mxu0
      %1675 = vmatprep.mubr.f32.mxu0 %v518
      %1676 = vmatmul.mubr.f32.gmra.mxu0 %v401
      %v1677 = vpop.f32.mrf.mxu0
      %v1678 = vadd.f32 %v1453, %v1677
      %v1679 = vpop.f32.mrf.mxu0
      %1680 = vmatprep.mubr.f32.mxu0 %v520
      %1681 = vmatmul.mubr.f32.gmra.mxu0 %v402
      %v1682 = vpop.f32.mrf.mxu0
      %v1683 = vadd.f32 %v1458, %v1682
      %v1684 = vpop.f32.mrf.mxu0
      %1685 = vmatprep.mubr.f32.mxu0 %v523
      %1686 = vmatmul.mubr.f32.gmra.mxu0 %v404
      %v1687 = vpop.f32.mrf.mxu0
      %v1688 = vadd.f32 %v1463, %v1687
      %v1689 = vpop.f32.mrf.mxu0
      %1690 = vmatprep.mubr.f32.mxu0 %v525
      %1691 = vmatmul.mubr.f32.gmra.mxu0 %v405
      %v1692 = vpop.f32.mrf.mxu0
      %v1693 = vadd.f32 %v1468, %v1692
      %v1694 = vpop.f32.mrf.mxu0
      %1695 = vmatprep.mubr.f32.mxu0 %v528
      %1696 = vmatmul.mubr.f32.gmra.mxu0 %v407
      %v1697 = vpop.f32.mrf.mxu0
      %v1698 = vadd.f32 %v1473, %v1697
      %v1699 = vpop.f32.mrf.mxu0
      %1700 = vmatprep.mubr.f32.mxu0 %v530
      %1701 = vmatmul.mubr.f32.gmra.mxu0 %v408
      %v1702 = vpop.f32.mrf.mxu0
      %v1703 = vadd.f32 %v1478, %v1702
      %v1704 = vpop.f32.mrf.mxu0
      %1705 = vmatprep.mubr.f32.mxu0 %v533
      %1706 = vmatmul.mubr.f32.gmra.mxu0 %v410
      %v1707 = vpop.f32.mrf.mxu0
      %v1708 = vadd.f32 %v1483, %v1707
      %v1709 = vpop.f32.mrf.mxu0
      %1710 = vmatprep.mubr.f32.mxu0 %v535
      %1711 = vmatmul.mubr.f32.gmra.mxu0 %v411
      %v1712 = vpop.f32.mrf.mxu0
      %v1713 = vadd.f32 %v1488, %v1712
      %v1714 = vpop.f32.mrf.mxu0
      %1715 = vmatprep.mubr.f32.mxu0 %v538
      %1716 = vmatmul.mubr.f32.gmra.mxu0 %v413
      %v1717 = vpop.f32.mrf.mxu0
      %v1718 = vadd.f32 %v1493, %v1717
      %v1719 = vpop.f32.mrf.mxu0
      %1720 = vmatprep.mubr.f32.mxu0 %v540
      %1721 = vmatmul.mubr.f32.gmra.mxu0 %v414
      %v1722 = vpop.f32.mrf.mxu0
      %v1723 = vadd.f32 %v1498, %v1722
      %v1724 = vpop.f32.mrf.mxu0
      %1725 = vmatprep.mubr.f32.mxu0 %v543
      %1726 = vmatmul.mubr.f32.gmra.mxu0 %v416
      %v1727 = vpop.f32.mrf.mxu0
      %v1728 = vadd.f32 %v1503, %v1727
      %v1729 = vpop.f32.mrf.mxu0
      %1730 = vmatprep.mubr.f32.mxu0 %v545
      %1731 = vmatmul.mubr.f32.gmra.mxu0 %v417
      %v1732 = vpop.f32.mrf.mxu0
      %v1733 = vadd.f32 %v1508, %v1732
      %v1734 = vpop.f32.mrf.mxu0
      %1735 = vmatprep.mubr.f32.mxu0 %v548
      %1736 = vmatmul.mubr.f32.gmra.mxu0 %v419
      %v1737 = vpop.f32.mrf.mxu0
      %v1738 = vadd.f32 %v1513, %v1737
      %v1739 = vpop.f32.mrf.mxu0
      %1740 = vmatprep.mubr.f32.mxu0 %v550
      %1741 = vmatmul.mubr.f32.gmra.mxu0 %v420
      %v1742 = vpop.f32.mrf.mxu0
      %v1743 = vadd.f32 %v1518, %v1742
      %v1744 = vpop.f32.mrf.mxu0
      %1745 = vmatprep.mubr.f32.mxu0 %v553
      %1746 = vmatmul.mubr.f32.gmra.mxu0 %v422
      %v1747 = vpop.f32.mrf.mxu0
      %v1748 = vadd.f32 %v1523, %v1747
      %v1749 = vpop.f32.mrf.mxu0
      %1750 = vmatprep.mubr.f32.mxu0 %v555
      %1751 = vmatmul.mubr.f32.gmra.mxu0 %v423
      %v1752 = vpop.f32.mrf.mxu0
      %v1753 = vadd.f32 %v1528, %v1752
      %v1754 = vpop.f32.mrf.mxu0
      %1755 = vmatprep.mubr.f32.mxu0 %v558
      %1756 = vmatmul.mubr.f32.gmra.mxu0 %v425
      %v1757 = vpop.f32.mrf.mxu0
      %v1758 = vadd.f32 %v1533, %v1757
      %v1759 = vpop.f32.mrf.mxu0
      %1760 = vmatprep.mubr.f32.mxu0 %v560
      %1761 = vmatmul.mubr.f32.gmra.mxu0 %v426
      %v1762 = vpop.f32.mrf.mxu0
      %v1763 = vadd.f32 %v1538, %v1762
      %v1764 = vpop.f32.mrf.mxu0
      %1765 = vmatprep.mubr.f32.mxu0 %v563
      %1766 = vmatmul.mubr.f32.gmra.mxu0 %v428
      %v1767 = vpop.f32.mrf.mxu0
      %v1768 = vadd.f32 %v1543, %v1767
      %v1769 = vpop.f32.mrf.mxu0
      %1770 = vmatprep.mubr.f32.mxu0 %v565
      %1771 = vmatmul.mubr.f32.gmra.mxu0 %v429
      %v1772 = vpop.f32.mrf.mxu0
      %v1773 = vadd.f32 %v1548, %v1772
      %v1774 = vpop.f32.mrf.mxu0
      %1775 = vmatprep.mubr.f32.mxu0 %v716
      %1776 = vmatmul.mubr.f32.gmra.mxu0 %v431
      %v1777 = vpop.f32.mrf.mxu0
      %v1778 = vadd.f32 %v1553, %v1777
      %v1779 = vpop.f32.mrf.mxu0
      %1780 = vmatprep.mubr.f32.mxu0 %v718
      %1781 = vmatmul.mubr.f32.gmra.mxu0 %v432
      %v1782 = vpop.f32.mrf.mxu0
      %v1783 = vadd.f32 %v1558, %v1782
      %v1784 = vpop.f32.mrf.mxu0
      %1785 = vmatprep.mubr.f32.mxu0 %v733
      %1786 = vmatmul.mubr.f32.gmra.mxu0 %v434
      %v1787 = vpop.f32.mrf.mxu0
      %v1788 = vadd.f32 %v1563, %v1787
      %v1789 = vpop.f32.mrf.mxu0
      %1790 = vmatprep.mubr.f32.mxu0 %v735
      %1791 = vmatmul.mubr.f32.gmra.mxu0 %v435
      %v1792 = vpop.f32.mrf.mxu0
      %v1793 = vadd.f32 %v1568, %v1792
      %v1794 = vpop.f32.mrf.mxu0
      %1795 = vdwg.mxu0
      %1796 = vmatprep.subr.mxu0 0.0
      %1797 = vmatpush1.msra.mxu0 %v888
      %1798 = vmatprep.subr.mxu0 0.0
      %1799 = vmatpush1.msra.mxu0 %v887
      %1800 = vmatprep.subr.mxu0 0.0
      %1801 = vmatpush1.msra.mxu0 %v886
      %1802 = vmatprep.subr.mxu0 0.0
      %1803 = vmatpush1.msra.mxu0 %v885
      %1804 = vmatprep.subr.mxu0 0.0
      %1805 = vmatpush1.msra.mxu0 %v884
      %1806 = vmatprep.subr.mxu0 0.0
      %1807 = vmatpush1.msra.mxu0 %v883
      %1808 = vmatprep.subr.mxu0 0.0
      %1809 = vmatpush1.msra.mxu0 %v882
      %1810 = vmatprep.subr.mxu0 0.0
      %1811 = vmatpush1.msra.mxu0 %v881
      %1812 = vmatprep.subr.mxu0 0.0
      %1813 = vmatpush1.msra.mxu0 %v880
      %1814 = vmatprep.subr.mxu0 0.0
      %1815 = vmatpush1.msra.mxu0 %v879
      %1816 = vmatprep.subr.mxu0 0.0
      %1817 = vmatpush1.msra.mxu0 %v878
      %1818 = vmatprep.subr.mxu0 0.0
      %1819 = vmatpush1.msra.mxu0 %v877
      %1820 = vmatprep.subr.mxu0 0.0
      %1821 = vmatpush1.msra.mxu0 %v876
      %1822 = vmatprep.subr.mxu0 0.0
      %1823 = vmatpush1.msra.mxu0 %v875
      %1824 = vmatprep.subr.mxu0 0.0
      %1825 = vmatpush1.msra.mxu0 %v874
      %1826 = vmatprep.subr.mxu0 0.0
      %1827 = vmatpush1.msra.mxu0 %v873
      %1828 = vmatprep.subr.mxu0 0.0
      %1829 = vmatpush2.msra.mxu0 0.0
      %1830 = vmatprep.subr.mxu0 0.0
      %1831 = vmatpush2.msra.mxu0 0.0
      %1832 = vmatprep.subr.mxu0 0.0
      %1833 = vmatpush2.msra.mxu0 0.0
      %1834 = vmatprep.subr.mxu0 0.0
      %1835 = vmatpush2.msra.mxu0 0.0
      %1836 = vmatprep.subr.mxu0 0.0
      %1837 = vmatpush2.msra.mxu0 0.0
      %1838 = vmatprep.subr.mxu0 0.0
      %1839 = vmatpush2.msra.mxu0 0.0
      %1840 = vmatprep.subr.mxu0 0.0
      %1841 = vmatpush2.msra.mxu0 0.0
      %1842 = vmatprep.subr.mxu0 0.0
      %1843 = vmatpush2.msra.mxu0 0.0
      %1844 = vmatprep.subr.mxu0 0.0
      %1845 = vmatpush2.msra.mxu0 0.0
      %1846 = vmatprep.subr.mxu0 0.0
      %1847 = vmatpush2.msra.mxu0 0.0
      %1848 = vmatprep.subr.mxu0 0.0
      %1849 = vmatpush2.msra.mxu0 0.0
      %1850 = vmatprep.subr.mxu0 0.0
      %1851 = vmatpush2.msra.mxu0 0.0
      %1852 = vmatprep.subr.mxu0 0.0
      %1853 = vmatpush2.msra.mxu0 0.0
      %1854 = vmatprep.subr.mxu0 0.0
      %1855 = vmatpush2.msra.mxu0 0.0
      %1856 = vmatprep.subr.mxu0 0.0
      %1857 = vmatpush2.msra.mxu0 0.0
      %1858 = vmatprep.subr.mxu0 0.0
      %1859 = vmatpush2.msra.mxu0 0.0
      %1860 = vmatprep.mubr.f32.mxu0 0.0
      %1861 = vmatmul.mubr.f32.gmra.mxu0 %v611
      %v1862 = vpop.f32.mrf.mxu0
      %v1863 = vadd.f32 %v1638, %v1862
      %v1864 = vpop.f32.mrf.mxu0
      %1865 = vmatprep.mubr.f32.mxu0 0.0
      %1866 = vmatmul.mubr.f32.gmra.mxu0 %v613
      %v1867 = vpop.f32.mrf.mxu0
      %v1868 = vadd.f32 %v1643, %v1867
      %v1869 = vpop.f32.mrf.mxu0
      %1870 = vmatprep.mubr.f32.mxu0 0.0
      %1871 = vmatmul.mubr.f32.gmra.mxu0 %v616
      %v1872 = vpop.f32.mrf.mxu0
      %v1873 = vadd.f32 %v1648, %v1872
      %v1874 = vpop.f32.mrf.mxu0
      %1875 = vmatprep.mubr.f32.mxu0 0.0
      %1876 = vmatmul.mubr.f32.gmra.mxu0 %v618
      %v1877 = vpop.f32.mrf.mxu0
      %v1878 = vadd.f32 %v1653, %v1877
      %v1879 = vpop.f32.mrf.mxu0
      %1880 = vmatprep.mubr.f32.mxu0 0.0
      %1881 = vmatmul.mubr.f32.gmra.mxu0 %v621
      %v1882 = vpop.f32.mrf.mxu0
      %v1883 = vadd.f32 %v1658, %v1882
      %v1884 = vpop.f32.mrf.mxu0
      %1885 = vmatprep.mubr.f32.mxu0 0.0
      %1886 = vmatmul.mubr.f32.gmra.mxu0 %v623
      %v1887 = vpop.f32.mrf.mxu0
      %v1888 = vadd.f32 %v1663, %v1887
      %v1889 = vpop.f32.mrf.mxu0
      %1890 = vmatprep.mubr.f32.mxu0 0.0
      %1891 = vmatmul.mubr.f32.gmra.mxu0 %v626
      %v1892 = vpop.f32.mrf.mxu0
      %v1893 = vadd.f32 %v1668, %v1892
      %v1894 = vpop.f32.mrf.mxu0
      %1895 = vmatprep.mubr.f32.mxu0 0.0
      %1896 = vmatmul.mubr.f32.gmra.mxu0 %v628
      %v1897 = vpop.f32.mrf.mxu0
      %v1898 = vadd.f32 %v1673, %v1897
      %v1899 = vpop.f32.mrf.mxu0
      %1900 = vmatprep.mubr.f32.mxu0 0.0
      %1901 = vmatmul.mubr.f32.gmra.mxu0 %v631
      %v1902 = vpop.f32.mrf.mxu0
      %v1903 = vadd.f32 %v1678, %v1902
      %v1904 = vpop.f32.mrf.mxu0
      %1905 = vmatprep.mubr.f32.mxu0 0.0
      %1906 = vmatmul.mubr.f32.gmra.mxu0 %v633
      %v1907 = vpop.f32.mrf.mxu0
      %v1908 = vadd.f32 %v1683, %v1907
      %v1909 = vpop.f32.mrf.mxu0
      %1910 = vmatprep.mubr.f32.mxu0 0.0
      %1911 = vmatmul.mubr.f32.gmra.mxu0 %v636
      %v1912 = vpop.f32.mrf.mxu0
      %v1913 = vadd.f32 %v1688, %v1912
      %v1914 = vpop.f32.mrf.mxu0
      %1915 = vmatprep.mubr.f32.mxu0 0.0
      %1916 = vmatmul.mubr.f32.gmra.mxu0 %v638
      %v1917 = vpop.f32.mrf.mxu0
      %v1918 = vadd.f32 %v1693, %v1917
      %v1919 = vpop.f32.mrf.mxu0
      %1920 = vmatprep.mubr.f32.mxu0 0.0
      %1921 = vmatmul.mubr.f32.gmra.mxu0 %v641
      %v1922 = vpop.f32.mrf.mxu0
      %v1923 = vadd.f32 %v1698, %v1922
      %v1924 = vpop.f32.mrf.mxu0
      %1925 = vmatprep.mubr.f32.mxu0 0.0
      %1926 = vmatmul.mubr.f32.gmra.mxu0 %v643
      %v1927 = vpop.f32.mrf.mxu0
      %v1928 = vadd.f32 %v1703, %v1927
      %v1929 = vpop.f32.mrf.mxu0
      %1930 = vmatprep.mubr.f32.mxu0 0.0
      %1931 = vmatmul.mubr.f32.gmra.mxu0 %v646
      %v1932 = vpop.f32.mrf.mxu0
      %v1933 = vadd.f32 %v1708, %v1932
      %v1934 = vpop.f32.mrf.mxu0
      %1935 = vmatprep.mubr.f32.mxu0 0.0
      %1936 = vmatmul.mubr.f32.gmra.mxu0 %v648
      %v1937 = vpop.f32.mrf.mxu0
      %v1938 = vadd.f32 %v1713, %v1937
      %v1939 = vpop.f32.mrf.mxu0
      %1940 = vmatprep.mubr.f32.mxu0 0.0
      %1941 = vmatmul.mubr.f32.gmra.mxu0 %v651
      %v1942 = vpop.f32.mrf.mxu0
      %v1943 = vadd.f32 %v1718, %v1942
      %v1944 = vpop.f32.mrf.mxu0
      %1945 = vmatprep.mubr.f32.mxu0 0.0
      %1946 = vmatmul.mubr.f32.gmra.mxu0 %v653
      %v1947 = vpop.f32.mrf.mxu0
      %v1948 = vadd.f32 %v1723, %v1947
      %v1949 = vpop.f32.mrf.mxu0
      %1950 = vmatprep.mubr.f32.mxu0 0.0
      %1951 = vmatmul.mubr.f32.gmra.mxu0 %v656
      %v1952 = vpop.f32.mrf.mxu0
      %v1953 = vadd.f32 %v1728, %v1952
      %v1954 = vpop.f32.mrf.mxu0
      %1955 = vmatprep.mubr.f32.mxu0 0.0
      %1956 = vmatmul.mubr.f32.gmra.mxu0 %v658
      %v1957 = vpop.f32.mrf.mxu0
      %v1958 = vadd.f32 %v1733, %v1957
      %v1959 = vpop.f32.mrf.mxu0
      %1960 = vmatprep.mubr.f32.mxu0 0.0
      %1961 = vmatmul.mubr.f32.gmra.mxu0 %v661
      %v1962 = vpop.f32.mrf.mxu0
      %v1963 = vadd.f32 %v1738, %v1962
      %v1964 = vpop.f32.mrf.mxu0
      %1965 = vmatprep.mubr.f32.mxu0 0.0
      %1966 = vmatmul.mubr.f32.gmra.mxu0 %v663
      %v1967 = vpop.f32.mrf.mxu0
      %v1968 = vadd.f32 %v1743, %v1967
      %v1969 = vpop.f32.mrf.mxu0
      %1970 = vmatprep.mubr.f32.mxu0 0.0
      %1971 = vmatmul.mubr.f32.gmra.mxu0 %v666
      %v1972 = vpop.f32.mrf.mxu0
      %v1973 = vadd.f32 %v1748, %v1972
      %v1974 = vpop.f32.mrf.mxu0
      %1975 = vmatprep.mubr.f32.mxu0 0.0
      %1976 = vmatmul.mubr.f32.gmra.mxu0 %v668
      %v1977 = vpop.f32.mrf.mxu0
      %v1978 = vadd.f32 %v1753, %v1977
      %v1979 = vpop.f32.mrf.mxu0
      %1980 = vmatprep.mubr.f32.mxu0 0.0
      %1981 = vmatmul.mubr.f32.gmra.mxu0 %v671
      %v1982 = vpop.f32.mrf.mxu0
      %v1983 = vadd.f32 %v1758, %v1982
      %v1984 = vpop.f32.mrf.mxu0
      %1985 = vmatprep.mubr.f32.mxu0 0.0
      %1986 = vmatmul.mubr.f32.gmra.mxu0 %v673
      %v1987 = vpop.f32.mrf.mxu0
      %v1988 = vadd.f32 %v1763, %v1987
      %v1989 = vpop.f32.mrf.mxu0
      %1990 = vmatprep.mubr.f32.mxu0 0.0
      %1991 = vmatmul.mubr.f32.gmra.mxu0 %v676
      %v1992 = vpop.f32.mrf.mxu0
      %v1993 = vadd.f32 %v1768, %v1992
      %v1994 = vpop.f32.mrf.mxu0
      %1995 = vmatprep.mubr.f32.mxu0 0.0
      %1996 = vmatmul.mubr.f32.gmra.mxu0 %v678
      %v1997 = vpop.f32.mrf.mxu0
      %v1998 = vadd.f32 %v1773, %v1997
      %v1999 = vpop.f32.mrf.mxu0
      %2000 = vmatprep.mubr.f32.mxu0 0.0
      %2001 = vmatmul.mubr.f32.gmra.mxu0 %v723
      %v2002 = vpop.f32.mrf.mxu0
      %v2003 = vadd.f32 %v1778, %v2002
      %v2004 = vpop.f32.mrf.mxu0
      %2005 = vmatprep.mubr.f32.mxu0 0.0
      %2006 = vmatmul.mubr.f32.gmra.mxu0 %v725
      %v2007 = vpop.f32.mrf.mxu0
      %v2008 = vadd.f32 %v1783, %v2007
      %v2009 = vpop.f32.mrf.mxu0
      %2010 = vmatprep.mubr.f32.mxu0 0.0
      %2011 = vmatmul.mubr.f32.gmra.mxu0 %v740
      %v2012 = vpop.f32.mrf.mxu0
      %v2013 = vadd.f32 %v1788, %v2012
      %v2014 = vpop.f32.mrf.mxu0
      %2015 = vmatprep.mubr.f32.mxu0 0.0
      %2016 = vmatmul.mubr.f32.gmra.mxu0 %v742
      %v2017 = vpop.f32.mrf.mxu0
      %v2018 = vadd.f32 %v1793, %v2017
      %v2019 = vpop.f32.mrf.mxu0
      %2020 = vdwg.mxu0
      %v2021 = vmax.f32 %v1863, 0.0
      %v2022 = vmax.f32 %v1868, 0.0
      %v2023 = vmax.f32 %v1873, 0.0
      %v2024 = vmax.f32 %v1878, 0.0
      %v2025 = vmax.f32 %v1883, 0.0
      %v2026 = vmax.f32 %v1888, 0.0
      %v2027 = vmax.f32 %v1893, 0.0
      %v2028 = vmax.f32 %v1898, 0.0
      %v2029 = vmax.f32 %v1903, 0.0
      %v2030 = vmax.f32 %v1908, 0.0
      %v2031 = vmax.f32 %v1913, 0.0
      %v2032 = vmax.f32 %v1918, 0.0
      %v2033 = vmax.f32 %v1923, 0.0
      %v2034 = vmax.f32 %v1928, 0.0
      %v2035 = vmax.f32 %v1933, 0.0
      %v2036 = vmax.f32 %v1938, 0.0
      %v2037 = vmax.f32 %v1943, 0.0
      %v2038 = vmax.f32 %v1948, 0.0
      %v2039 = vmax.f32 %v1953, 0.0
      %v2040 = vmax.f32 %v1958, 0.0
      %v2041 = vmax.f32 %v1963, 0.0
      %v2042 = vmax.f32 %v1968, 0.0
      %v2043 = vmax.f32 %v1973, 0.0
      %v2044 = vmax.f32 %v1978, 0.0
      %v2045 = vmax.f32 %v1983, 0.0
      %v2046 = vmax.f32 %v1988, 0.0
      %v2047 = vmax.f32 %v1993, 0.0
      %v2048 = vmax.f32 %v1998, 0.0
      %v2049 = vmax.f32 %v2003, 0.0
      %v2050 = vmax.f32 %v2008, 0.0
      %v2051 = vmax.f32 %v2013, 0.0
      %v2052 = vmax.f32 %v2018, 0.0
      %2053 = vst [vmem:[#allocation3] sm:$0xff] 0.0
      %2054 = vst [vmem:[#allocation3 + $0x8] sm:$0xff] 0.0
      %2055 = vst [vmem:[#allocation3 + $0x10] sm:$0x3] 0.0
      %s2056 = scalar_lea.vmem [#allocation3], 408
      %2057 = vst [vmem:[%s2056] sm:$0xff] 0.0
      %2058 = vst [vmem:[%s2056 + $0x8] sm:$0xff] 0.0
      %2059 = vst [vmem:[%s2056 + $0x10] sm:$0x3] 0.0
      %s2060 = scalar_lea.vmem [#allocation3], 24
      %2061 = vst [vmem:[%s2060] sm:$0x1] 0.0
      %2062 = vst [vmem:[%s2060 + $0x18] sm:$0x1] 0.0
      %2063 = vst [vmem:[%s2060 + $0x30] sm:$0x1] 0.0
      %2064 = vst [vmem:[%s2060 + $0x48] sm:$0x1] 0.0
      %2065 = vst [vmem:[%s2060 + $0x60] sm:$0x1] 0.0
      %2066 = vst [vmem:[%s2060 + $0x78] sm:$0x1] 0.0
      %2067 = vst [vmem:[%s2060 + $0x90] sm:$0x1] 0.0
      %2068 = vst [vmem:[%s2060 + $0xa8] sm:$0x1] 0.0
      %2069 = vst [vmem:[%s2060 + $0xc0] sm:$0x1] 0.0
      %2070 = vst [vmem:[%s2060 + $0xd8] sm:$0x1] 0.0
      %2071 = vst [vmem:[%s2060 + $0xf0] sm:$0x1] 0.0
      %2072 = vst [vmem:[%s2060 + $0x108] sm:$0x1] 0.0
      %2073 = vst [vmem:[%s2060 + $0x120] sm:$0x1] 0.0
      %2074 = vst [vmem:[%s2060 + $0x138] sm:$0x1] 0.0
      %2075 = vst [vmem:[%s2060 + $0x150] sm:$0x1] 0.0
      %2076 = vst [vmem:[%s2060 + $0x168] sm:$0x1] 0.0
      %2077 = vst [vmem:[%s2060 + $0x11] sm:$0x1] 0.0
      %2078 = vst [vmem:[%s2060 + $0x29] sm:$0x1] 0.0
      %2079 = vst [vmem:[%s2060 + $0x41] sm:$0x1] 0.0
      %2080 = vst [vmem:[%s2060 + $0x59] sm:$0x1] 0.0
      %2081 = vst [vmem:[%s2060 + $0x71] sm:$0x1] 0.0
      %2082 = vst [vmem:[%s2060 + $0x89] sm:$0x1] 0.0
      %2083 = vst [vmem:[%s2060 + $0xa1] sm:$0x1] 0.0
      %2084 = vst [vmem:[%s2060 + $0xb9] sm:$0x1] 0.0
      %2085 = vst [vmem:[%s2060 + $0xd1] sm:$0x1] 0.0
      %2086 = vst [vmem:[%s2060 + $0xe9] sm:$0x1] 0.0
      %2087 = vst [vmem:[%s2060 + $0x101] sm:$0x1] 0.0
      %2088 = vst [vmem:[%s2060 + $0x119] sm:$0x1] 0.0
      %2089 = vst [vmem:[%s2060 + $0x131] sm:$0x1] 0.0
      %2090 = vst [vmem:[%s2060 + $0x149] sm:$0x1] 0.0
      %2091 = vst [vmem:[%s2060 + $0x161] sm:$0x1] 0.0
      %2092 = vst [vmem:[%s2060 + $0x179] sm:$0x1] 0.0
      %2093 = vst [vmem:[%s2060 + $0x1] sm:$0xff] %v2021
      %2094 = vst [vmem:[%s2060 + $0x9] sm:$0xff] %v2022
      %2095 = vst [vmem:[%s2060 + $0x19] sm:$0xff] %v2023
      %2096 = vst [vmem:[%s2060 + $0x21] sm:$0xff] %v2024
      %2097 = vst [vmem:[%s2060 + $0x31] sm:$0xff] %v2025
      %2098 = vst [vmem:[%s2060 + $0x39] sm:$0xff] %v2026
      %2099 = vst [vmem:[%s2060 + $0x49] sm:$0xff] %v2027
      %2100 = vst [vmem:[%s2060 + $0x51] sm:$0xff] %v2028
      %2101 = vst [vmem:[%s2060 + $0x61] sm:$0xff] %v2029
      %2102 = vst [vmem:[%s2060 + $0x69] sm:$0xff] %v2030
      %2103 = vst [vmem:[%s2060 + $0x79] sm:$0xff] %v2031
      %2104 = vst [vmem:[%s2060 + $0x81] sm:$0xff] %v2032
      %2105 = vst [vmem:[%s2060 + $0x91] sm:$0xff] %v2033
      %2106 = vst [vmem:[%s2060 + $0x99] sm:$0xff] %v2034
      %2107 = vst [vmem:[%s2060 + $0xa9] sm:$0xff] %v2035
      %2108 = vst [vmem:[%s2060 + $0xb1] sm:$0xff] %v2036
      %2109 = vst [vmem:[%s2060 + $0xc1] sm:$0xff] %v2037
      %2110 = vst [vmem:[%s2060 + $0xc9] sm:$0xff] %v2038
      %2111 = vst [vmem:[%s2060 + $0xd9] sm:$0xff] %v2039
      %2112 = vst [vmem:[%s2060 + $0xe1] sm:$0xff] %v2040
      %2113 = vst [vmem:[%s2060 + $0xf1] sm:$0xff] %v2041
      %2114 = vst [vmem:[%s2060 + $0xf9] sm:$0xff] %v2042
      %2115 = vst [vmem:[%s2060 + $0x109] sm:$0xff] %v2043
      %2116 = vst [vmem:[%s2060 + $0x111] sm:$0xff] %v2044
      %2117 = vst [vmem:[%s2060 + $0x121] sm:$0xff] %v2045
      %2118 = vst [vmem:[%s2060 + $0x129] sm:$0xff] %v2046
      %2119 = vst [vmem:[%s2060 + $0x139] sm:$0xff] %v2047
      %2120 = vst [vmem:[%s2060 + $0x141] sm:$0xff] %v2048
      %2121 = vst [vmem:[%s2060 + $0x151] sm:$0xff] %v2049
      %2122 = vst [vmem:[%s2060 + $0x159] sm:$0xff] %v2050
      %2123 = vst [vmem:[%s2060 + $0x169] sm:$0xff] %v2051
      %2124 = vst [vmem:[%s2060 + $0x171] sm:$0xff] %v2052
      %v2125 = vld [vmem:[#allocation3] sm:$0xff]
      %v2126 = vld [vmem:[#allocation3 + $0x8] sm:$0xff]
      %v2127 = vld [vmem:[#allocation3 + $0x10] sm:$0x3]
      %v2128 = vld [vmem:[#allocation3 + $0x18] sm:$0xff]
      %v2129 = vld [vmem:[#allocation3 + $0x20] sm:$0xff]
      %v2130 = vld [vmem:[#allocation3 + $0x28] sm:$0x3]
      %v2131 = vld [vmem:[#allocation3 + $0x30] sm:$0xff]
      %v2132 = vld [vmem:[#allocation3 + $0x38] sm:$0xff]
      %v2133 = vld [vmem:[#allocation3 + $0x40] sm:$0x3]
      %v2134 = vld [vmem:[#allocation3 + $0x48] sm:$0xff]
      %v2135 = vld [vmem:[#allocation3 + $0x50] sm:$0xff]
      %v2136 = vld [vmem:[#allocation3 + $0x58] sm:$0x3]
      %v2137 = vld [vmem:[#allocation3 + $0x60] sm:$0xff]
      %v2138 = vld [vmem:[#allocation3 + $0x68] sm:$0xff]
      %v2139 = vld [vmem:[#allocation3 + $0x70] sm:$0x3]
      %v2140 = vld [vmem:[#allocation3 + $0x78] sm:$0xff]
      %v2141 = vld [vmem:[#allocation3 + $0x80] sm:$0xff]
      %v2142 = vld [vmem:[#allocation3 + $0x88] sm:$0x3]
      %v2143 = vld [vmem:[#allocation3 + $0x90] sm:$0xff]
      %v2144 = vld [vmem:[#allocation3 + $0x98] sm:$0xff]
      %v2145 = vld [vmem:[#allocation3 + $0xa0] sm:$0x3]
      %v2146 = vld [vmem:[#allocation3 + $0xa8] sm:$0xff]
      %v2147 = vld [vmem:[#allocation3 + $0xb0] sm:$0xff]
      %v2148 = vld [vmem:[#allocation3 + $0xb8] sm:$0x3]
      %v2149 = vld [vmem:[#allocation3 + $0xc0] sm:$0xff]
      %v2150 = vld [vmem:[#allocation3 + $0xc8] sm:$0xff]
      %v2151 = vld [vmem:[#allocation3 + $0xd0] sm:$0x3]
      %v2152 = vld [vmem:[#allocation3 + $0xd8] sm:$0xff]
      %v2153 = vld [vmem:[#allocation3 + $0xe0] sm:$0xff]
      %v2154 = vld [vmem:[#allocation3 + $0xe8] sm:$0x3]
      %v2155 = vld [vmem:[#allocation3 + $0xf0] sm:$0xff]
      %v2156 = vld [vmem:[#allocation3 + $0xf8] sm:$0xff]
      %v2157 = vld [vmem:[#allocation3 + $0x100] sm:$0x3]
      %v2158 = vld [vmem:[#allocation3 + $0x108] sm:$0xff]
      %v2159 = vld [vmem:[#allocation3 + $0x110] sm:$0xff]
      %v2160 = vld [vmem:[#allocation3 + $0x118] sm:$0x3]
      %v2161 = vld [vmem:[#allocation3 + $0x120] sm:$0xff]
      %v2162 = vld [vmem:[#allocation3 + $0x128] sm:$0xff]
      %v2163 = vld [vmem:[#allocation3 + $0x130] sm:$0x3]
      %v2164 = vld [vmem:[#allocation3 + $0x138] sm:$0xff]
      %v2165 = vld [vmem:[#allocation3 + $0x140] sm:$0xff]
      %v2166 = vld [vmem:[#allocation3 + $0x148] sm:$0x3]
      %v2167 = vld [vmem:[#allocation3 + $0x150] sm:$0xff]
      %v2168 = vld [vmem:[#allocation3 + $0x158] sm:$0xff]
      %v2169 = vld [vmem:[#allocation3 + $0x160] sm:$0x3]
      %v2170 = vld [vmem:[#allocation3 + $0x168] sm:$0xff]
      %v2171 = vld [vmem:[#allocation3 + $0x170] sm:$0xff]
      %v2172 = vld [vmem:[#allocation3 + $0x178] sm:$0x3]
      %v2173 = vld [vmem:[#allocation3 + $0x180] sm:$0xff]
      %v2174 = vld [vmem:[#allocation3 + $0x188] sm:$0xff]
      %v2175 = vld [vmem:[#allocation3 + $0x190] sm:$0x3]
      %v2176 = vld [vmem:[#allocation3 + $0x198] sm:$0xff]
      %v2177 = vld [vmem:[#allocation3 + $0x1a0] sm:$0xff]
      %v2178 = vld [vmem:[#allocation3 + $0x1a8] sm:$0x3]
      %v2227 = vrot.slane %v2125, 1
      %v2228 = vrot.slane %v2126, 1
      %v2229 = vsel %vm485, %v2227, %v2228
      %v2230 = vrot.slane %v2127, 1
      %v2231 = vsel %vm485, %v2228, %v2230
      %v2232 = vrot.slane %v2128, 1
      %v2233 = vrot.slane %v2129, 1
      %v2234 = vsel %vm485, %v2232, %v2233
      %v2235 = vrot.slane %v2130, 1
      %v2236 = vsel %vm485, %v2233, %v2235
      %v2237 = vrot.slane %v2131, 1
      %v2238 = vrot.slane %v2132, 1
      %v2239 = vsel %vm485, %v2237, %v2238
      %v2240 = vrot.slane %v2133, 1
      %v2241 = vsel %vm485, %v2238, %v2240
      %v2242 = vrot.slane %v2134, 1
      %v2243 = vrot.slane %v2135, 1
      %v2244 = vsel %vm485, %v2242, %v2243
      %v2245 = vrot.slane %v2136, 1
      %v2246 = vsel %vm485, %v2243, %v2245
      %v2247 = vrot.slane %v2137, 1
      %v2248 = vrot.slane %v2138, 1
      %v2249 = vsel %vm485, %v2247, %v2248
      %v2250 = vrot.slane %v2139, 1
      %v2251 = vsel %vm485, %v2248, %v2250
      %v2252 = vrot.slane %v2140, 1
      %v2253 = vrot.slane %v2141, 1
      %v2254 = vsel %vm485, %v2252, %v2253
      %v2255 = vrot.slane %v2142, 1
      %v2256 = vsel %vm485, %v2253, %v2255
      %v2257 = vrot.slane %v2143, 1
      %v2258 = vrot.slane %v2144, 1
      %v2259 = vsel %vm485, %v2257, %v2258
      %v2260 = vrot.slane %v2145, 1
      %v2261 = vsel %vm485, %v2258, %v2260
      %v2262 = vrot.slane %v2146, 1
      %v2263 = vrot.slane %v2147, 1
      %v2264 = vsel %vm485, %v2262, %v2263
      %v2265 = vrot.slane %v2148, 1
      %v2266 = vsel %vm485, %v2263, %v2265
      %v2267 = vrot.slane %v2149, 1
      %v2268 = vrot.slane %v2150, 1
      %v2269 = vsel %vm485, %v2267, %v2268
      %v2270 = vrot.slane %v2151, 1
      %v2271 = vsel %vm485, %v2268, %v2270
      %v2272 = vrot.slane %v2152, 1
      %v2273 = vrot.slane %v2153, 1
      %v2274 = vsel %vm485, %v2272, %v2273
      %v2275 = vrot.slane %v2154, 1
      %v2276 = vsel %vm485, %v2273, %v2275
      %v2277 = vrot.slane %v2155, 1
      %v2278 = vrot.slane %v2156, 1
      %v2279 = vsel %vm485, %v2277, %v2278
      %v2280 = vrot.slane %v2157, 1
      %v2281 = vsel %vm485, %v2278, %v2280
      %v2282 = vrot.slane %v2158, 1
      %v2283 = vrot.slane %v2159, 1
      %v2284 = vsel %vm485, %v2282, %v2283
      %v2285 = vrot.slane %v2160, 1
      %v2286 = vsel %vm485, %v2283, %v2285
      %v2287 = vrot.slane %v2161, 1
      %v2288 = vrot.slane %v2162, 1
      %v2289 = vsel %vm485, %v2287, %v2288
      %v2290 = vrot.slane %v2163, 1
      %v2291 = vsel %vm485, %v2288, %v2290
      %v2292 = vrot.slane %v2164, 1
      %v2293 = vrot.slane %v2165, 1
      %v2294 = vsel %vm485, %v2292, %v2293
      %v2295 = vrot.slane %v2166, 1
      %v2296 = vsel %vm485, %v2293, %v2295
      %v2297 = vrot.slane %v2167, 1
      %v2298 = vrot.slane %v2168, 1
      %v2299 = vsel %vm485, %v2297, %v2298
      %v2300 = vrot.slane %v2169, 1
      %v2301 = vsel %vm485, %v2298, %v2300
      %v2302 = vrot.slane %v2170, 1
      %v2303 = vrot.slane %v2171, 1
      %v2304 = vsel %vm485, %v2302, %v2303
      %v2305 = vrot.slane %v2172, 1
      %v2306 = vsel %vm485, %v2303, %v2305
      %v2339 = vrot.slane %v2125, 2
      %v2340 = vrot.slane %v2126, 2
      %v2341 = vsel %vm598, %v2339, %v2340
      %v2342 = vrot.slane %v2127, 2
      %v2343 = vsel %vm598, %v2340, %v2342
      %v2344 = vrot.slane %v2128, 2
      %v2345 = vrot.slane %v2129, 2
      %v2346 = vsel %vm598, %v2344, %v2345
      %v2347 = vrot.slane %v2130, 2
      %v2348 = vsel %vm598, %v2345, %v2347
      %v2349 = vrot.slane %v2131, 2
      %v2350 = vrot.slane %v2132, 2
      %v2351 = vsel %vm598, %v2349, %v2350
      %v2352 = vrot.slane %v2133, 2
      %v2353 = vsel %vm598, %v2350, %v2352
      %v2354 = vrot.slane %v2134, 2
      %v2355 = vrot.slane %v2135, 2
      %v2356 = vsel %vm598, %v2354, %v2355
      %v2357 = vrot.slane %v2136, 2
      %v2358 = vsel %vm598, %v2355, %v2357
      %v2359 = vrot.slane %v2137, 2
      %v2360 = vrot.slane %v2138, 2
      %v2361 = vsel %vm598, %v2359, %v2360
      %v2362 = vrot.slane %v2139, 2
      %v2363 = vsel %vm598, %v2360, %v2362
      %v2364 = vrot.slane %v2140, 2
      %v2365 = vrot.slane %v2141, 2
      %v2366 = vsel %vm598, %v2364, %v2365
      %v2367 = vrot.slane %v2142, 2
      %v2368 = vsel %vm598, %v2365, %v2367
      %v2369 = vrot.slane %v2143, 2
      %v2370 = vrot.slane %v2144, 2
      %v2371 = vsel %vm598, %v2369, %v2370
      %v2372 = vrot.slane %v2145, 2
      %v2373 = vsel %vm598, %v2370, %v2372
      %v2374 = vrot.slane %v2146, 2
      %v2375 = vrot.slane %v2147, 2
      %v2376 = vsel %vm598, %v2374, %v2375
      %v2377 = vrot.slane %v2148, 2
      %v2378 = vsel %vm598, %v2375, %v2377
      %v2379 = vrot.slane %v2149, 2
      %v2380 = vrot.slane %v2150, 2
      %v2381 = vsel %vm598, %v2379, %v2380
      %v2382 = vrot.slane %v2151, 2
      %v2383 = vsel %vm598, %v2380, %v2382
      %v2384 = vrot.slane %v2152, 2
      %v2385 = vrot.slane %v2153, 2
      %v2386 = vsel %vm598, %v2384, %v2385
      %v2387 = vrot.slane %v2154, 2
      %v2388 = vsel %vm598, %v2385, %v2387
      %v2389 = vrot.slane %v2155, 2
      %v2390 = vrot.slane %v2156, 2
      %v2391 = vsel %vm598, %v2389, %v2390
      %v2392 = vrot.slane %v2157, 2
      %v2393 = vsel %vm598, %v2390, %v2392
      %v2394 = vrot.slane %v2158, 2
      %v2395 = vrot.slane %v2159, 2
      %v2396 = vsel %vm598, %v2394, %v2395
      %v2397 = vrot.slane %v2160, 2
      %v2398 = vsel %vm598, %v2395, %v2397
      %v2399 = vrot.slane %v2161, 2
      %v2400 = vrot.slane %v2162, 2
      %v2401 = vsel %vm598, %v2399, %v2400
      %v2402 = vrot.slane %v2163, 2
      %v2403 = vsel %vm598, %v2400, %v2402
      %v2404 = vrot.slane %v2164, 2
      %v2405 = vrot.slane %v2165, 2
      %v2406 = vsel %vm598, %v2404, %v2405
      %v2407 = vrot.slane %v2166, 2
      %v2408 = vsel %vm598, %v2405, %v2407
      %v2409 = vrot.slane %v2167, 2
      %v2410 = vrot.slane %v2168, 2
      %v2411 = vsel %vm598, %v2409, %v2410
      %v2412 = vrot.slane %v2169, 2
      %v2413 = vsel %vm598, %v2410, %v2412
      %v2414 = vrot.slane %v2170, 2
      %v2415 = vrot.slane %v2171, 2
      %v2416 = vsel %vm598, %v2414, %v2415
      %v2417 = vrot.slane %v2172, 2
      %v2418 = vsel %vm598, %v2415, %v2417
      %v2454 = vrot.slane %v2173, 1
      %v2455 = vrot.slane %v2174, 1
      %v2456 = vsel %vm485, %v2454, %v2455
      %v2457 = vrot.slane %v2175, 1
      %v2458 = vsel %vm485, %v2455, %v2457
      %v2461 = vrot.slane %v2173, 2
      %v2462 = vrot.slane %v2174, 2
      %v2463 = vsel %vm598, %v2461, %v2462
      %v2464 = vrot.slane %v2175, 2
      %v2465 = vsel %vm598, %v2462, %v2464
      %v2471 = vrot.slane %v2176, 1
      %v2472 = vrot.slane %v2177, 1
      %v2473 = vsel %vm485, %v2471, %v2472
      %v2474 = vrot.slane %v2178, 1
      %v2475 = vsel %vm485, %v2472, %v2474
      %v2478 = vrot.slane %v2176, 2
      %v2479 = vrot.slane %v2177, 2
      %v2480 = vsel %vm598, %v2478, %v2479
      %v2481 = vrot.slane %v2178, 2
      %v2482 = vsel %vm598, %v2479, %v2481
      %v2485 = vld [vmem:[%s3] sm:$0xff]
      %v2486 = vld [vmem:[%s3 + $0x8] sm:$0xff]
      %v2487 = vld [vmem:[%s3 + $0x10] sm:$0xff]
      %v2488 = vld [vmem:[%s3 + $0x18] sm:$0xff]
      %v2489 = vld [vmem:[%s3 + $0x20] sm:$0xff]
      %v2490 = vld [vmem:[%s3 + $0x28] sm:$0xff]
      %v2491 = vld [vmem:[%s3 + $0x30] sm:$0xff]
      %v2492 = vld [vmem:[%s3 + $0x38] sm:$0xff]
      %v2493 = vld [vmem:[%s3 + $0x40] sm:$0xff]
      %v2494 = vld [vmem:[%s3 + $0x48] sm:$0xff]
      %v2495 = vld [vmem:[%s3 + $0x50] sm:$0xff]
      %v2496 = vld [vmem:[%s3 + $0x58] sm:$0xff]
      %v2497 = vld [vmem:[%s3 + $0x60] sm:$0xff]
      %v2498 = vld [vmem:[%s3 + $0x68] sm:$0xff]
      %v2499 = vld [vmem:[%s3 + $0x70] sm:$0xff]
      %v2500 = vld [vmem:[%s3 + $0x78] sm:$0xff]
      %v2501 = vld [vmem:[%s3 + $0x80] sm:$0xff]
      %v2502 = vld [vmem:[%s3 + $0x88] sm:$0xff]
      %v2503 = vld [vmem:[%s3 + $0x90] sm:$0xff]
      %v2504 = vld [vmem:[%s3 + $0x98] sm:$0xff]
      %v2505 = vld [vmem:[%s3 + $0xa0] sm:$0xff]
      %v2506 = vld [vmem:[%s3 + $0xa8] sm:$0xff]
      %v2507 = vld [vmem:[%s3 + $0xb0] sm:$0xff]
      %v2508 = vld [vmem:[%s3 + $0xb8] sm:$0xff]
      %v2509 = vld [vmem:[%s3 + $0xc0] sm:$0xff]
      %v2510 = vld [vmem:[%s3 + $0xc8] sm:$0xff]
      %v2511 = vld [vmem:[%s3 + $0xd0] sm:$0xff]
      %v2512 = vld [vmem:[%s3 + $0xd8] sm:$0xff]
      %v2513 = vld [vmem:[%s3 + $0xe0] sm:$0xff]
      %v2514 = vld [vmem:[%s3 + $0xe8] sm:$0xff]
      %v2515 = vld [vmem:[%s3 + $0xf0] sm:$0xff]
      %v2516 = vld [vmem:[%s3 + $0xf8] sm:$0xff]
      %v2517 = vld [vmem:[%s3 + $0x100] sm:$0xff]
      %v2518 = vld [vmem:[%s3 + $0x108] sm:$0xff]
      %v2519 = vld [vmem:[%s3 + $0x110] sm:$0xff]
      %v2520 = vld [vmem:[%s3 + $0x118] sm:$0xff]
      %v2521 = vld [vmem:[%s3 + $0x120] sm:$0xff]
      %v2522 = vld [vmem:[%s3 + $0x128] sm:$0xff]
      %v2523 = vld [vmem:[%s3 + $0x130] sm:$0xff]
      %v2524 = vld [vmem:[%s3 + $0x138] sm:$0xff]
      %v2525 = vld [vmem:[%s3 + $0x140] sm:$0xff]
      %v2526 = vld [vmem:[%s3 + $0x148] sm:$0xff]
      %v2527 = vld [vmem:[%s3 + $0x150] sm:$0xff]
      %v2528 = vld [vmem:[%s3 + $0x158] sm:$0xff]
      %v2529 = vld [vmem:[%s3 + $0x160] sm:$0xff]
      %v2530 = vld [vmem:[%s3 + $0x168] sm:$0xff]
      %v2531 = vld [vmem:[%s3 + $0x170] sm:$0xff]
      %v2532 = vld [vmem:[%s3 + $0x178] sm:$0xff]
      %v2533 = vld [vmem:[%s3 + $0x180] sm:$0xff]
      %v2534 = vld [vmem:[%s3 + $0x188] sm:$0xff]
      %v2535 = vld [vmem:[%s3 + $0x190] sm:$0xff]
      %v2536 = vld [vmem:[%s3 + $0x198] sm:$0xff]
      %v2537 = vld [vmem:[%s3 + $0x1a0] sm:$0xff]
      %v2538 = vld [vmem:[%s3 + $0x1a8] sm:$0xff]
      %v2539 = vld [vmem:[%s3 + $0x1b0] sm:$0xff]
      %v2540 = vld [vmem:[%s3 + $0x1b8] sm:$0xff]
      %v2541 = vld [vmem:[%s3 + $0x1c0] sm:$0xff]
      %v2542 = vld [vmem:[%s3 + $0x1c8] sm:$0xff]
      %v2543 = vld [vmem:[%s3 + $0x1d0] sm:$0xff]
      %v2544 = vld [vmem:[%s3 + $0x1d8] sm:$0xff]
      %v2545 = vld [vmem:[%s3 + $0x1e0] sm:$0xff]
      %v2546 = vld [vmem:[%s3 + $0x1e8] sm:$0xff]
      %v2547 = vld [vmem:[%s3 + $0x1f0] sm:$0xff]
      %v2548 = vld [vmem:[%s3 + $0x1f8] sm:$0xff]
      %v2549 = vld [vmem:[%s3 + $0x200] sm:$0xff]
      %v2550 = vld [vmem:[%s3 + $0x208] sm:$0xff]
      %v2551 = vld [vmem:[%s3 + $0x210] sm:$0xff]
      %v2552 = vld [vmem:[%s3 + $0x218] sm:$0xff]
      %v2553 = vld [vmem:[%s3 + $0x220] sm:$0xff]
      %v2554 = vld [vmem:[%s3 + $0x228] sm:$0xff]
      %v2555 = vld [vmem:[%s3 + $0x230] sm:$0xff]
      %v2556 = vld [vmem:[%s3 + $0x238] sm:$0xff]
      %v2557 = vld [vmem:[%s3 + $0x240] sm:$0xff]
      %v2558 = vld [vmem:[%s3 + $0x248] sm:$0xff]
      %v2559 = vld [vmem:[%s3 + $0x250] sm:$0xff]
      %v2560 = vld [vmem:[%s3 + $0x258] sm:$0xff]
      %v2561 = vld [vmem:[%s3 + $0x260] sm:$0xff]
      %v2562 = vld [vmem:[%s3 + $0x268] sm:$0xff]
      %v2563 = vld [vmem:[%s3 + $0x270] sm:$0xff]
      %v2564 = vld [vmem:[%s3 + $0x278] sm:$0xff]
      %v2565 = vld [vmem:[%s3 + $0x280] sm:$0xff]
      %v2566 = vld [vmem:[%s3 + $0x288] sm:$0xff]
      %v2567 = vld [vmem:[%s3 + $0x290] sm:$0xff]
      %v2568 = vld [vmem:[%s3 + $0x298] sm:$0xff]
      %v2569 = vld [vmem:[%s3 + $0x2a0] sm:$0xff]
      %v2570 = vld [vmem:[%s3 + $0x2a8] sm:$0xff]
      %v2571 = vld [vmem:[%s3 + $0x2b0] sm:$0xff]
      %v2572 = vld [vmem:[%s3 + $0x2b8] sm:$0xff]
      %v2573 = vld [vmem:[%s3 + $0x2c0] sm:$0xff]
      %v2574 = vld [vmem:[%s3 + $0x2c8] sm:$0xff]
      %v2575 = vld [vmem:[%s3 + $0x2d0] sm:$0xff]
      %v2576 = vld [vmem:[%s3 + $0x2d8] sm:$0xff]
      %v2577 = vld [vmem:[%s3 + $0x2e0] sm:$0xff]
      %v2578 = vld [vmem:[%s3 + $0x2e8] sm:$0xff]
      %v2579 = vld [vmem:[%s3 + $0x2f0] sm:$0xff]
      %v2580 = vld [vmem:[%s3 + $0x2f8] sm:$0xff]
      %v2581 = vld [vmem:[%s3 + $0x300] sm:$0xff]
      %v2582 = vld [vmem:[%s3 + $0x308] sm:$0xff]
      %v2583 = vld [vmem:[%s3 + $0x310] sm:$0xff]
      %v2584 = vld [vmem:[%s3 + $0x318] sm:$0xff]
      %v2585 = vld [vmem:[%s3 + $0x320] sm:$0xff]
      %v2586 = vld [vmem:[%s3 + $0x328] sm:$0xff]
      %v2587 = vld [vmem:[%s3 + $0x330] sm:$0xff]
      %v2588 = vld [vmem:[%s3 + $0x338] sm:$0xff]
      %v2589 = vld [vmem:[%s3 + $0x340] sm:$0xff]
      %v2590 = vld [vmem:[%s3 + $0x348] sm:$0xff]
      %v2591 = vld [vmem:[%s3 + $0x350] sm:$0xff]
      %v2592 = vld [vmem:[%s3 + $0x358] sm:$0xff]
      %v2593 = vld [vmem:[%s3 + $0x360] sm:$0xff]
      %v2594 = vld [vmem:[%s3 + $0x368] sm:$0xff]
      %v2595 = vld [vmem:[%s3 + $0x370] sm:$0xff]
      %v2596 = vld [vmem:[%s3 + $0x378] sm:$0xff]
      %v2597 = vld [vmem:[%s3 + $0x380] sm:$0xff]
      %v2598 = vld [vmem:[%s3 + $0x388] sm:$0xff]
      %v2599 = vld [vmem:[%s3 + $0x390] sm:$0xff]
      %v2600 = vld [vmem:[%s3 + $0x398] sm:$0xff]
      %v2601 = vld [vmem:[%s3 + $0x3a0] sm:$0xff]
      %v2602 = vld [vmem:[%s3 + $0x3a8] sm:$0xff]
      %v2603 = vld [vmem:[%s3 + $0x3b0] sm:$0xff]
      %v2604 = vld [vmem:[%s3 + $0x3b8] sm:$0xff]
      %v2605 = vld [vmem:[%s3 + $0x3c0] sm:$0xff]
      %v2606 = vld [vmem:[%s3 + $0x3c8] sm:$0xff]
      %v2607 = vld [vmem:[%s3 + $0x3d0] sm:$0xff]
      %v2608 = vld [vmem:[%s3 + $0x3d8] sm:$0xff]
      %v2609 = vld [vmem:[%s3 + $0x3e0] sm:$0xff]
      %v2610 = vld [vmem:[%s3 + $0x3e8] sm:$0xff]
      %v2611 = vld [vmem:[%s3 + $0x3f0] sm:$0xff]
      %v2612 = vld [vmem:[%s3 + $0x3f8] sm:$0xff]
      %v2613 = vld [vmem:[%s3 + $0x400] sm:$0xff]
      %v2614 = vld [vmem:[%s3 + $0x408] sm:$0xff]
      %v2615 = vld [vmem:[%s3 + $0x410] sm:$0xff]
      %v2616 = vld [vmem:[%s3 + $0x418] sm:$0xff]
      %v2617 = vld [vmem:[%s3 + $0x420] sm:$0xff]
      %v2618 = vld [vmem:[%s3 + $0x428] sm:$0xff]
      %v2619 = vld [vmem:[%s3 + $0x430] sm:$0xff]
      %v2620 = vld [vmem:[%s3 + $0x438] sm:$0xff]
      %v2621 = vld [vmem:[%s3 + $0x440] sm:$0xff]
      %v2622 = vld [vmem:[%s3 + $0x448] sm:$0xff]
      %v2623 = vld [vmem:[%s3 + $0x450] sm:$0xff]
      %v2624 = vld [vmem:[%s3 + $0x458] sm:$0xff]
      %v2625 = vld [vmem:[%s3 + $0x460] sm:$0xff]
      %v2626 = vld [vmem:[%s3 + $0x468] sm:$0xff]
      %v2627 = vld [vmem:[%s3 + $0x470] sm:$0xff]
      %v2628 = vld [vmem:[%s3 + $0x478] sm:$0xff]
      %v2629 = vld [vmem:[%s4] sm:$0x1]
      %v2631 = vlaneseq
      %v2632 = vshrl.u32 %v2631, 7
      %v2633 = vsub.s32 0, %v2632
      %v2634 = vrot.slane %v2629, %v2633
      %2636 = vmatprep.subr.mxu0 0.0
      %2637 = vmatpush1.msra.mxu0 %v2500
      %2638 = vmatprep.subr.mxu0 0.0
      %2639 = vmatpush1.msra.mxu0 %v2499
      %2640 = vmatprep.subr.mxu0 0.0
      %2641 = vmatpush1.msra.mxu0 %v2498
      %2642 = vmatprep.subr.mxu0 0.0
      %2643 = vmatpush1.msra.mxu0 %v2497
      %2644 = vmatprep.subr.mxu0 0.0
      %2645 = vmatpush1.msra.mxu0 %v2496
      %2646 = vmatprep.subr.mxu0 0.0
      %2647 = vmatpush1.msra.mxu0 %v2495
      %2648 = vmatprep.subr.mxu0 0.0
      %2649 = vmatpush1.msra.mxu0 %v2494
      %2650 = vmatprep.subr.mxu0 0.0
      %2651 = vmatpush1.msra.mxu0 %v2493
      %2652 = vmatprep.subr.mxu0 0.0
      %2653 = vmatpush1.msra.mxu0 %v2492
      %2654 = vmatprep.subr.mxu0 0.0
      %2655 = vmatpush1.msra.mxu0 %v2491
      %2656 = vmatprep.subr.mxu0 0.0
      %2657 = vmatpush1.msra.mxu0 %v2490
      %2658 = vmatprep.subr.mxu0 0.0
      %2659 = vmatpush1.msra.mxu0 %v2489
      %2660 = vmatprep.subr.mxu0 0.0
      %2661 = vmatpush1.msra.mxu0 %v2488
      %2662 = vmatprep.subr.mxu0 0.0
      %2663 = vmatpush1.msra.mxu0 %v2487
      %2664 = vmatprep.subr.mxu0 0.0
      %2665 = vmatpush1.msra.mxu0 %v2486
      %2666 = vmatprep.subr.mxu0 0.0
      %2667 = vmatpush1.msra.mxu0 %v2485
      %2668 = vmatprep.subr.mxu0 0.0
      %2669 = vmatpush2.msra.mxu0 %v2516
      %2670 = vmatprep.subr.mxu0 0.0
      %2671 = vmatpush2.msra.mxu0 %v2515
      %2672 = vmatprep.subr.mxu0 0.0
      %2673 = vmatpush2.msra.mxu0 %v2514
      %2674 = vmatprep.subr.mxu0 0.0
      %2675 = vmatpush2.msra.mxu0 %v2513
      %2676 = vmatprep.subr.mxu0 0.0
      %2677 = vmatpush2.msra.mxu0 %v2512
      %2678 = vmatprep.subr.mxu0 0.0
      %2679 = vmatpush2.msra.mxu0 %v2511
      %2680 = vmatprep.subr.mxu0 0.0
      %2681 = vmatpush2.msra.mxu0 %v2510
      %2682 = vmatprep.subr.mxu0 0.0
      %2683 = vmatpush2.msra.mxu0 %v2509
      %2684 = vmatprep.subr.mxu0 0.0
      %2685 = vmatpush2.msra.mxu0 %v2508
      %2686 = vmatprep.subr.mxu0 0.0
      %2687 = vmatpush2.msra.mxu0 %v2507
      %2688 = vmatprep.subr.mxu0 0.0
      %2689 = vmatpush2.msra.mxu0 %v2506
      %2690 = vmatprep.subr.mxu0 0.0
      %2691 = vmatpush2.msra.mxu0 %v2505
      %2692 = vmatprep.subr.mxu0 0.0
      %2693 = vmatpush2.msra.mxu0 %v2504
      %2694 = vmatprep.subr.mxu0 0.0
      %2695 = vmatpush2.msra.mxu0 %v2503
      %2696 = vmatprep.subr.mxu0 0.0
      %2697 = vmatpush2.msra.mxu0 %v2502
      %2698 = vmatprep.subr.mxu0 0.0
      %2699 = vmatpush2.msra.mxu0 %v2501
      %2700 = vmatprep.mubr.f32.mxu0 %v2229
      %2701 = vmatmul.mubr.f32.gmra.mxu0 %v2125
      %v2702 = vpop.f32.mrf.mxu0
      %v2703 = vadd.f32 %v2634, %v2702
      %v2704 = vpop.f32.mrf.mxu0
      %2705 = vmatprep.mubr.f32.mxu0 %v2231
      %2706 = vmatmul.mubr.f32.gmra.mxu0 %v2126
      %v2707 = vpop.f32.mrf.mxu0
      %v2708 = vadd.f32 %v2634, %v2707
      %v2709 = vpop.f32.mrf.mxu0
      %2710 = vmatprep.mubr.f32.mxu0 %v2234
      %2711 = vmatmul.mubr.f32.gmra.mxu0 %v2128
      %v2712 = vpop.f32.mrf.mxu0
      %v2713 = vadd.f32 %v2634, %v2712
      %v2714 = vpop.f32.mrf.mxu0
      %2715 = vmatprep.mubr.f32.mxu0 %v2236
      %2716 = vmatmul.mubr.f32.gmra.mxu0 %v2129
      %v2717 = vpop.f32.mrf.mxu0
      %v2718 = vadd.f32 %v2634, %v2717
      %v2719 = vpop.f32.mrf.mxu0
      %2720 = vmatprep.mubr.f32.mxu0 %v2239
      %2721 = vmatmul.mubr.f32.gmra.mxu0 %v2131
      %v2722 = vpop.f32.mrf.mxu0
      %v2723 = vadd.f32 %v2634, %v2722
      %v2724 = vpop.f32.mrf.mxu0
      %2725 = vmatprep.mubr.f32.mxu0 %v2241
      %2726 = vmatmul.mubr.f32.gmra.mxu0 %v2132
      %v2727 = vpop.f32.mrf.mxu0
      %v2728 = vadd.f32 %v2634, %v2727
      %v2729 = vpop.f32.mrf.mxu0
      %2730 = vmatprep.mubr.f32.mxu0 %v2244
      %2731 = vmatmul.mubr.f32.gmra.mxu0 %v2134
      %v2732 = vpop.f32.mrf.mxu0
      %v2733 = vadd.f32 %v2634, %v2732
      %v2734 = vpop.f32.mrf.mxu0
      %2735 = vmatprep.mubr.f32.mxu0 %v2246
      %2736 = vmatmul.mubr.f32.gmra.mxu0 %v2135
      %v2737 = vpop.f32.mrf.mxu0
      %v2738 = vadd.f32 %v2634, %v2737
      %v2739 = vpop.f32.mrf.mxu0
      %2740 = vmatprep.mubr.f32.mxu0 %v2249
      %2741 = vmatmul.mubr.f32.gmra.mxu0 %v2137
      %v2742 = vpop.f32.mrf.mxu0
      %v2743 = vadd.f32 %v2634, %v2742
      %v2744 = vpop.f32.mrf.mxu0
      %2745 = vmatprep.mubr.f32.mxu0 %v2251
      %2746 = vmatmul.mubr.f32.gmra.mxu0 %v2138
      %v2747 = vpop.f32.mrf.mxu0
      %v2748 = vadd.f32 %v2634, %v2747
      %v2749 = vpop.f32.mrf.mxu0
      %2750 = vmatprep.mubr.f32.mxu0 %v2254
      %2751 = vmatmul.mubr.f32.gmra.mxu0 %v2140
      %v2752 = vpop.f32.mrf.mxu0
      %v2753 = vadd.f32 %v2634, %v2752
      %v2754 = vpop.f32.mrf.mxu0
      %2755 = vmatprep.mubr.f32.mxu0 %v2256
      %2756 = vmatmul.mubr.f32.gmra.mxu0 %v2141
      %v2757 = vpop.f32.mrf.mxu0
      %v2758 = vadd.f32 %v2634, %v2757
      %v2759 = vpop.f32.mrf.mxu0
      %2760 = vmatprep.mubr.f32.mxu0 %v2259
      %2761 = vmatmul.mubr.f32.gmra.mxu0 %v2143
      %v2762 = vpop.f32.mrf.mxu0
      %v2763 = vadd.f32 %v2634, %v2762
      %v2764 = vpop.f32.mrf.mxu0
      %2765 = vmatprep.mubr.f32.mxu0 %v2261
      %2766 = vmatmul.mubr.f32.gmra.mxu0 %v2144
      %v2767 = vpop.f32.mrf.mxu0
      %v2768 = vadd.f32 %v2634, %v2767
      %v2769 = vpop.f32.mrf.mxu0
      %2770 = vmatprep.mubr.f32.mxu0 %v2264
      %2771 = vmatmul.mubr.f32.gmra.mxu0 %v2146
      %v2772 = vpop.f32.mrf.mxu0
      %v2773 = vadd.f32 %v2634, %v2772
      %v2774 = vpop.f32.mrf.mxu0
      %2775 = vmatprep.mubr.f32.mxu0 %v2266
      %2776 = vmatmul.mubr.f32.gmra.mxu0 %v2147
      %v2777 = vpop.f32.mrf.mxu0
      %v2778 = vadd.f32 %v2634, %v2777
      %v2779 = vpop.f32.mrf.mxu0
      %2780 = vmatprep.mubr.f32.mxu0 %v2269
      %2781 = vmatmul.mubr.f32.gmra.mxu0 %v2149
      %v2782 = vpop.f32.mrf.mxu0
      %v2783 = vadd.f32 %v2634, %v2782
      %v2784 = vpop.f32.mrf.mxu0
      %2785 = vmatprep.mubr.f32.mxu0 %v2271
      %2786 = vmatmul.mubr.f32.gmra.mxu0 %v2150
      %v2787 = vpop.f32.mrf.mxu0
      %v2788 = vadd.f32 %v2634, %v2787
      %v2789 = vpop.f32.mrf.mxu0
      %2790 = vmatprep.mubr.f32.mxu0 %v2274
      %2791 = vmatmul.mubr.f32.gmra.mxu0 %v2152
      %v2792 = vpop.f32.mrf.mxu0
      %v2793 = vadd.f32 %v2634, %v2792
      %v2794 = vpop.f32.mrf.mxu0
      %2795 = vmatprep.mubr.f32.mxu0 %v2276
      %2796 = vmatmul.mubr.f32.gmra.mxu0 %v2153
      %v2797 = vpop.f32.mrf.mxu0
      %v2798 = vadd.f32 %v2634, %v2797
      %v2799 = vpop.f32.mrf.mxu0
      %2800 = vmatprep.mubr.f32.mxu0 %v2279
      %2801 = vmatmul.mubr.f32.gmra.mxu0 %v2155
      %v2802 = vpop.f32.mrf.mxu0
      %v2803 = vadd.f32 %v2634, %v2802
      %v2804 = vpop.f32.mrf.mxu0
      %2805 = vmatprep.mubr.f32.mxu0 %v2281
      %2806 = vmatmul.mubr.f32.gmra.mxu0 %v2156
      %v2807 = vpop.f32.mrf.mxu0
      %v2808 = vadd.f32 %v2634, %v2807
      %v2809 = vpop.f32.mrf.mxu0
      %2810 = vmatprep.mubr.f32.mxu0 %v2284
      %2811 = vmatmul.mubr.f32.gmra.mxu0 %v2158
      %v2812 = vpop.f32.mrf.mxu0
      %v2813 = vadd.f32 %v2634, %v2812
      %v2814 = vpop.f32.mrf.mxu0
      %2815 = vmatprep.mubr.f32.mxu0 %v2286
      %2816 = vmatmul.mubr.f32.gmra.mxu0 %v2159
      %v2817 = vpop.f32.mrf.mxu0
      %v2818 = vadd.f32 %v2634, %v2817
      %v2819 = vpop.f32.mrf.mxu0
      %2820 = vmatprep.mubr.f32.mxu0 %v2289
      %2821 = vmatmul.mubr.f32.gmra.mxu0 %v2161
      %v2822 = vpop.f32.mrf.mxu0
      %v2823 = vadd.f32 %v2634, %v2822
      %v2824 = vpop.f32.mrf.mxu0
      %2825 = vmatprep.mubr.f32.mxu0 %v2291
      %2826 = vmatmul.mubr.f32.gmra.mxu0 %v2162
      %v2827 = vpop.f32.mrf.mxu0
      %v2828 = vadd.f32 %v2634, %v2827
      %v2829 = vpop.f32.mrf.mxu0
      %2830 = vmatprep.mubr.f32.mxu0 %v2294
      %2831 = vmatmul.mubr.f32.gmra.mxu0 %v2164
      %v2832 = vpop.f32.mrf.mxu0
      %v2833 = vadd.f32 %v2634, %v2832
      %v2834 = vpop.f32.mrf.mxu0
      %2835 = vmatprep.mubr.f32.mxu0 %v2296
      %2836 = vmatmul.mubr.f32.gmra.mxu0 %v2165
      %v2837 = vpop.f32.mrf.mxu0
      %v2838 = vadd.f32 %v2634, %v2837
      %v2839 = vpop.f32.mrf.mxu0
      %2840 = vmatprep.mubr.f32.mxu0 %v2299
      %2841 = vmatmul.mubr.f32.gmra.mxu0 %v2167
      %v2842 = vpop.f32.mrf.mxu0
      %v2843 = vadd.f32 %v2634, %v2842
      %v2844 = vpop.f32.mrf.mxu0
      %2845 = vmatprep.mubr.f32.mxu0 %v2301
      %2846 = vmatmul.mubr.f32.gmra.mxu0 %v2168
      %v2847 = vpop.f32.mrf.mxu0
      %v2848 = vadd.f32 %v2634, %v2847
      %v2849 = vpop.f32.mrf.mxu0
      %2850 = vmatprep.mubr.f32.mxu0 %v2304
      %2851 = vmatmul.mubr.f32.gmra.mxu0 %v2170
      %v2852 = vpop.f32.mrf.mxu0
      %v2853 = vadd.f32 %v2634, %v2852
      %v2854 = vpop.f32.mrf.mxu0
      %2855 = vmatprep.mubr.f32.mxu0 %v2306
      %2856 = vmatmul.mubr.f32.gmra.mxu0 %v2171
      %v2857 = vpop.f32.mrf.mxu0
      %v2858 = vadd.f32 %v2634, %v2857
      %v2859 = vpop.f32.mrf.mxu0
      %2860 = vdwg.mxu0
      %2861 = vmatprep.subr.mxu0 0.0
      %2862 = vmatpush1.msra.mxu0 %v2532
      %2863 = vmatprep.subr.mxu0 0.0
      %2864 = vmatpush1.msra.mxu0 %v2531
      %2865 = vmatprep.subr.mxu0 0.0
      %2866 = vmatpush1.msra.mxu0 %v2530
      %2867 = vmatprep.subr.mxu0 0.0
      %2868 = vmatpush1.msra.mxu0 %v2529
      %2869 = vmatprep.subr.mxu0 0.0
      %2870 = vmatpush1.msra.mxu0 %v2528
      %2871 = vmatprep.subr.mxu0 0.0
      %2872 = vmatpush1.msra.mxu0 %v2527
      %2873 = vmatprep.subr.mxu0 0.0
      %2874 = vmatpush1.msra.mxu0 %v2526
      %2875 = vmatprep.subr.mxu0 0.0
      %2876 = vmatpush1.msra.mxu0 %v2525
      %2877 = vmatprep.subr.mxu0 0.0
      %2878 = vmatpush1.msra.mxu0 %v2524
      %2879 = vmatprep.subr.mxu0 0.0
      %2880 = vmatpush1.msra.mxu0 %v2523
      %2881 = vmatprep.subr.mxu0 0.0
      %2882 = vmatpush1.msra.mxu0 %v2522
      %2883 = vmatprep.subr.mxu0 0.0
      %2884 = vmatpush1.msra.mxu0 %v2521
      %2885 = vmatprep.subr.mxu0 0.0
      %2886 = vmatpush1.msra.mxu0 %v2520
      %2887 = vmatprep.subr.mxu0 0.0
      %2888 = vmatpush1.msra.mxu0 %v2519
      %2889 = vmatprep.subr.mxu0 0.0
      %2890 = vmatpush1.msra.mxu0 %v2518
      %2891 = vmatprep.subr.mxu0 0.0
      %2892 = vmatpush1.msra.mxu0 %v2517
      %2893 = vmatprep.subr.mxu0 0.0
      %2894 = vmatpush2.msra.mxu0 %v2548
      %2895 = vmatprep.subr.mxu0 0.0
      %2896 = vmatpush2.msra.mxu0 %v2547
      %2897 = vmatprep.subr.mxu0 0.0
      %2898 = vmatpush2.msra.mxu0 %v2546
      %2899 = vmatprep.subr.mxu0 0.0
      %2900 = vmatpush2.msra.mxu0 %v2545
      %2901 = vmatprep.subr.mxu0 0.0
      %2902 = vmatpush2.msra.mxu0 %v2544
      %2903 = vmatprep.subr.mxu0 0.0
      %2904 = vmatpush2.msra.mxu0 %v2543
      %2905 = vmatprep.subr.mxu0 0.0
      %2906 = vmatpush2.msra.mxu0 %v2542
      %2907 = vmatprep.subr.mxu0 0.0
      %2908 = vmatpush2.msra.mxu0 %v2541
      %2909 = vmatprep.subr.mxu0 0.0
      %2910 = vmatpush2.msra.mxu0 %v2540
      %2911 = vmatprep.subr.mxu0 0.0
      %2912 = vmatpush2.msra.mxu0 %v2539
      %2913 = vmatprep.subr.mxu0 0.0
      %2914 = vmatpush2.msra.mxu0 %v2538
      %2915 = vmatprep.subr.mxu0 0.0
      %2916 = vmatpush2.msra.mxu0 %v2537
      %2917 = vmatprep.subr.mxu0 0.0
      %2918 = vmatpush2.msra.mxu0 %v2536
      %2919 = vmatprep.subr.mxu0 0.0
      %2920 = vmatpush2.msra.mxu0 %v2535
      %2921 = vmatprep.subr.mxu0 0.0
      %2922 = vmatpush2.msra.mxu0 %v2534
      %2923 = vmatprep.subr.mxu0 0.0
      %2924 = vmatpush2.msra.mxu0 %v2533
      %2925 = vmatprep.mubr.f32.mxu0 %v2128
      %2926 = vmatmul.mubr.f32.gmra.mxu0 %v2341
      %v2927 = vpop.f32.mrf.mxu0
      %v2928 = vadd.f32 %v2703, %v2927
      %v2929 = vpop.f32.mrf.mxu0
      %2930 = vmatprep.mubr.f32.mxu0 %v2129
      %2931 = vmatmul.mubr.f32.gmra.mxu0 %v2343
      %v2932 = vpop.f32.mrf.mxu0
      %v2933 = vadd.f32 %v2708, %v2932
      %v2934 = vpop.f32.mrf.mxu0
      %2935 = vmatprep.mubr.f32.mxu0 %v2131
      %2936 = vmatmul.mubr.f32.gmra.mxu0 %v2346
      %v2937 = vpop.f32.mrf.mxu0
      %v2938 = vadd.f32 %v2713, %v2937
      %v2939 = vpop.f32.mrf.mxu0
      %2940 = vmatprep.mubr.f32.mxu0 %v2132
      %2941 = vmatmul.mubr.f32.gmra.mxu0 %v2348
      %v2942 = vpop.f32.mrf.mxu0
      %v2943 = vadd.f32 %v2718, %v2942
      %v2944 = vpop.f32.mrf.mxu0
      %2945 = vmatprep.mubr.f32.mxu0 %v2134
      %2946 = vmatmul.mubr.f32.gmra.mxu0 %v2351
      %v2947 = vpop.f32.mrf.mxu0
      %v2948 = vadd.f32 %v2723, %v2947
      %v2949 = vpop.f32.mrf.mxu0
      %2950 = vmatprep.mubr.f32.mxu0 %v2135
      %2951 = vmatmul.mubr.f32.gmra.mxu0 %v2353
      %v2952 = vpop.f32.mrf.mxu0
      %v2953 = vadd.f32 %v2728, %v2952
      %v2954 = vpop.f32.mrf.mxu0
      %2955 = vmatprep.mubr.f32.mxu0 %v2137
      %2956 = vmatmul.mubr.f32.gmra.mxu0 %v2356
      %v2957 = vpop.f32.mrf.mxu0
      %v2958 = vadd.f32 %v2733, %v2957
      %v2959 = vpop.f32.mrf.mxu0
      %2960 = vmatprep.mubr.f32.mxu0 %v2138
      %2961 = vmatmul.mubr.f32.gmra.mxu0 %v2358
      %v2962 = vpop.f32.mrf.mxu0
      %v2963 = vadd.f32 %v2738, %v2962
      %v2964 = vpop.f32.mrf.mxu0
      %2965 = vmatprep.mubr.f32.mxu0 %v2140
      %2966 = vmatmul.mubr.f32.gmra.mxu0 %v2361
      %v2967 = vpop.f32.mrf.mxu0
      %v2968 = vadd.f32 %v2743, %v2967
      %v2969 = vpop.f32.mrf.mxu0
      %2970 = vmatprep.mubr.f32.mxu0 %v2141
      %2971 = vmatmul.mubr.f32.gmra.mxu0 %v2363
      %v2972 = vpop.f32.mrf.mxu0
      %v2973 = vadd.f32 %v2748, %v2972
      %v2974 = vpop.f32.mrf.mxu0
      %2975 = vmatprep.mubr.f32.mxu0 %v2143
      %2976 = vmatmul.mubr.f32.gmra.mxu0 %v2366
      %v2977 = vpop.f32.mrf.mxu0
      %v2978 = vadd.f32 %v2753, %v2977
      %v2979 = vpop.f32.mrf.mxu0
      %2980 = vmatprep.mubr.f32.mxu0 %v2144
      %2981 = vmatmul.mubr.f32.gmra.mxu0 %v2368
      %v2982 = vpop.f32.mrf.mxu0
      %v2983 = vadd.f32 %v2758, %v2982
      %v2984 = vpop.f32.mrf.mxu0
      %2985 = vmatprep.mubr.f32.mxu0 %v2146
      %2986 = vmatmul.mubr.f32.gmra.mxu0 %v2371
      %v2987 = vpop.f32.mrf.mxu0
      %v2988 = vadd.f32 %v2763, %v2987
      %v2989 = vpop.f32.mrf.mxu0
      %2990 = vmatprep.mubr.f32.mxu0 %v2147
      %2991 = vmatmul.mubr.f32.gmra.mxu0 %v2373
      %v2992 = vpop.f32.mrf.mxu0
      %v2993 = vadd.f32 %v2768, %v2992
      %v2994 = vpop.f32.mrf.mxu0
      %2995 = vmatprep.mubr.f32.mxu0 %v2149
      %2996 = vmatmul.mubr.f32.gmra.mxu0 %v2376
      %v2997 = vpop.f32.mrf.mxu0
      %v2998 = vadd.f32 %v2773, %v2997
      %v2999 = vpop.f32.mrf.mxu0
      %3000 = vmatprep.mubr.f32.mxu0 %v2150
      %3001 = vmatmul.mubr.f32.gmra.mxu0 %v2378
      %v3002 = vpop.f32.mrf.mxu0
      %v3003 = vadd.f32 %v2778, %v3002
      %v3004 = vpop.f32.mrf.mxu0
      %3005 = vmatprep.mubr.f32.mxu0 %v2152
      %3006 = vmatmul.mubr.f32.gmra.mxu0 %v2381
      %v3007 = vpop.f32.mrf.mxu0
      %v3008 = vadd.f32 %v2783, %v3007
      %v3009 = vpop.f32.mrf.mxu0
      %3010 = vmatprep.mubr.f32.mxu0 %v2153
      %3011 = vmatmul.mubr.f32.gmra.mxu0 %v2383
      %v3012 = vpop.f32.mrf.mxu0
      %v3013 = vadd.f32 %v2788, %v3012
      %v3014 = vpop.f32.mrf.mxu0
      %3015 = vmatprep.mubr.f32.mxu0 %v2155
      %3016 = vmatmul.mubr.f32.gmra.mxu0 %v2386
      %v3017 = vpop.f32.mrf.mxu0
      %v3018 = vadd.f32 %v2793, %v3017
      %v3019 = vpop.f32.mrf.mxu0
      %3020 = vmatprep.mubr.f32.mxu0 %v2156
      %3021 = vmatmul.mubr.f32.gmra.mxu0 %v2388
      %v3022 = vpop.f32.mrf.mxu0
      %v3023 = vadd.f32 %v2798, %v3022
      %v3024 = vpop.f32.mrf.mxu0
      %3025 = vmatprep.mubr.f32.mxu0 %v2158
      %3026 = vmatmul.mubr.f32.gmra.mxu0 %v2391
      %v3027 = vpop.f32.mrf.mxu0
      %v3028 = vadd.f32 %v2803, %v3027
      %v3029 = vpop.f32.mrf.mxu0
      %3030 = vmatprep.mubr.f32.mxu0 %v2159
      %3031 = vmatmul.mubr.f32.gmra.mxu0 %v2393
      %v3032 = vpop.f32.mrf.mxu0
      %v3033 = vadd.f32 %v2808, %v3032
      %v3034 = vpop.f32.mrf.mxu0
      %3035 = vmatprep.mubr.f32.mxu0 %v2161
      %3036 = vmatmul.mubr.f32.gmra.mxu0 %v2396
      %v3037 = vpop.f32.mrf.mxu0
      %v3038 = vadd.f32 %v2813, %v3037
      %v3039 = vpop.f32.mrf.mxu0
      %3040 = vmatprep.mubr.f32.mxu0 %v2162
      %3041 = vmatmul.mubr.f32.gmra.mxu0 %v2398
      %v3042 = vpop.f32.mrf.mxu0
      %v3043 = vadd.f32 %v2818, %v3042
      %v3044 = vpop.f32.mrf.mxu0
      %3045 = vmatprep.mubr.f32.mxu0 %v2164
      %3046 = vmatmul.mubr.f32.gmra.mxu0 %v2401
      %v3047 = vpop.f32.mrf.mxu0
      %v3048 = vadd.f32 %v2823, %v3047
      %v3049 = vpop.f32.mrf.mxu0
      %3050 = vmatprep.mubr.f32.mxu0 %v2165
      %3051 = vmatmul.mubr.f32.gmra.mxu0 %v2403
      %v3052 = vpop.f32.mrf.mxu0
      %v3053 = vadd.f32 %v2828, %v3052
      %v3054 = vpop.f32.mrf.mxu0
      %3055 = vmatprep.mubr.f32.mxu0 %v2167
      %3056 = vmatmul.mubr.f32.gmra.mxu0 %v2406
      %v3057 = vpop.f32.mrf.mxu0
      %v3058 = vadd.f32 %v2833, %v3057
      %v3059 = vpop.f32.mrf.mxu0
      %3060 = vmatprep.mubr.f32.mxu0 %v2168
      %3061 = vmatmul.mubr.f32.gmra.mxu0 %v2408
      %v3062 = vpop.f32.mrf.mxu0
      %v3063 = vadd.f32 %v2838, %v3062
      %v3064 = vpop.f32.mrf.mxu0
      %3065 = vmatprep.mubr.f32.mxu0 %v2170
      %3066 = vmatmul.mubr.f32.gmra.mxu0 %v2411
      %v3067 = vpop.f32.mrf.mxu0
      %v3068 = vadd.f32 %v2843, %v3067
      %v3069 = vpop.f32.mrf.mxu0
      %3070 = vmatprep.mubr.f32.mxu0 %v2171
      %3071 = vmatmul.mubr.f32.gmra.mxu0 %v2413
      %v3072 = vpop.f32.mrf.mxu0
      %v3073 = vadd.f32 %v2848, %v3072
      %v3074 = vpop.f32.mrf.mxu0
      %3075 = vmatprep.mubr.f32.mxu0 %v2173
      %3076 = vmatmul.mubr.f32.gmra.mxu0 %v2416
      %v3077 = vpop.f32.mrf.mxu0
      %v3078 = vadd.f32 %v2853, %v3077
      %v3079 = vpop.f32.mrf.mxu0
      %3080 = vmatprep.mubr.f32.mxu0 %v2174
      %3081 = vmatmul.mubr.f32.gmra.mxu0 %v2418
      %v3082 = vpop.f32.mrf.mxu0
      %v3083 = vadd.f32 %v2858, %v3082
      %v3084 = vpop.f32.mrf.mxu0
      %3085 = vdwg.mxu0
      %3086 = vmatprep.subr.mxu0 0.0
      %3087 = vmatpush1.msra.mxu0 %v2564
      %3088 = vmatprep.subr.mxu0 0.0
      %3089 = vmatpush1.msra.mxu0 %v2563
      %3090 = vmatprep.subr.mxu0 0.0
      %3091 = vmatpush1.msra.mxu0 %v2562
      %3092 = vmatprep.subr.mxu0 0.0
      %3093 = vmatpush1.msra.mxu0 %v2561
      %3094 = vmatprep.subr.mxu0 0.0
      %3095 = vmatpush1.msra.mxu0 %v2560
      %3096 = vmatprep.subr.mxu0 0.0
      %3097 = vmatpush1.msra.mxu0 %v2559
      %3098 = vmatprep.subr.mxu0 0.0
      %3099 = vmatpush1.msra.mxu0 %v2558
      %3100 = vmatprep.subr.mxu0 0.0
      %3101 = vmatpush1.msra.mxu0 %v2557
      %3102 = vmatprep.subr.mxu0 0.0
      %3103 = vmatpush1.msra.mxu0 %v2556
      %3104 = vmatprep.subr.mxu0 0.0
      %3105 = vmatpush1.msra.mxu0 %v2555
      %3106 = vmatprep.subr.mxu0 0.0
      %3107 = vmatpush1.msra.mxu0 %v2554
      %3108 = vmatprep.subr.mxu0 0.0
      %3109 = vmatpush1.msra.mxu0 %v2553
      %3110 = vmatprep.subr.mxu0 0.0
      %3111 = vmatpush1.msra.mxu0 %v2552
      %3112 = vmatprep.subr.mxu0 0.0
      %3113 = vmatpush1.msra.mxu0 %v2551
      %3114 = vmatprep.subr.mxu0 0.0
      %3115 = vmatpush1.msra.mxu0 %v2550
      %3116 = vmatprep.subr.mxu0 0.0
      %3117 = vmatpush1.msra.mxu0 %v2549
      %3118 = vmatprep.subr.mxu0 0.0
      %3119 = vmatpush2.msra.mxu0 %v2580
      %3120 = vmatprep.subr.mxu0 0.0
      %3121 = vmatpush2.msra.mxu0 %v2579
      %3122 = vmatprep.subr.mxu0 0.0
      %3123 = vmatpush2.msra.mxu0 %v2578
      %3124 = vmatprep.subr.mxu0 0.0
      %3125 = vmatpush2.msra.mxu0 %v2577
      %3126 = vmatprep.subr.mxu0 0.0
      %3127 = vmatpush2.msra.mxu0 %v2576
      %3128 = vmatprep.subr.mxu0 0.0
      %3129 = vmatpush2.msra.mxu0 %v2575
      %3130 = vmatprep.subr.mxu0 0.0
      %3131 = vmatpush2.msra.mxu0 %v2574
      %3132 = vmatprep.subr.mxu0 0.0
      %3133 = vmatpush2.msra.mxu0 %v2573
      %3134 = vmatprep.subr.mxu0 0.0
      %3135 = vmatpush2.msra.mxu0 %v2572
      %3136 = vmatprep.subr.mxu0 0.0
      %3137 = vmatpush2.msra.mxu0 %v2571
      %3138 = vmatprep.subr.mxu0 0.0
      %3139 = vmatpush2.msra.mxu0 %v2570
      %3140 = vmatprep.subr.mxu0 0.0
      %3141 = vmatpush2.msra.mxu0 %v2569
      %3142 = vmatprep.subr.mxu0 0.0
      %3143 = vmatpush2.msra.mxu0 %v2568
      %3144 = vmatprep.subr.mxu0 0.0
      %3145 = vmatpush2.msra.mxu0 %v2567
      %3146 = vmatprep.subr.mxu0 0.0
      %3147 = vmatpush2.msra.mxu0 %v2566
      %3148 = vmatprep.subr.mxu0 0.0
      %3149 = vmatpush2.msra.mxu0 %v2565
      %3150 = vmatprep.mubr.f32.mxu0 %v2346
      %3151 = vmatmul.mubr.f32.gmra.mxu0 %v2234
      %v3152 = vpop.f32.mrf.mxu0
      %v3153 = vadd.f32 %v2928, %v3152
      %v3154 = vpop.f32.mrf.mxu0
      %3155 = vmatprep.mubr.f32.mxu0 %v2348
      %3156 = vmatmul.mubr.f32.gmra.mxu0 %v2236
      %v3157 = vpop.f32.mrf.mxu0
      %v3158 = vadd.f32 %v2933, %v3157
      %v3159 = vpop.f32.mrf.mxu0
      %3160 = vmatprep.mubr.f32.mxu0 %v2351
      %3161 = vmatmul.mubr.f32.gmra.mxu0 %v2239
      %v3162 = vpop.f32.mrf.mxu0
      %v3163 = vadd.f32 %v2938, %v3162
      %v3164 = vpop.f32.mrf.mxu0
      %3165 = vmatprep.mubr.f32.mxu0 %v2353
      %3166 = vmatmul.mubr.f32.gmra.mxu0 %v2241
      %v3167 = vpop.f32.mrf.mxu0
      %v3168 = vadd.f32 %v2943, %v3167
      %v3169 = vpop.f32.mrf.mxu0
      %3170 = vmatprep.mubr.f32.mxu0 %v2356
      %3171 = vmatmul.mubr.f32.gmra.mxu0 %v2244
      %v3172 = vpop.f32.mrf.mxu0
      %v3173 = vadd.f32 %v2948, %v3172
      %v3174 = vpop.f32.mrf.mxu0
      %3175 = vmatprep.mubr.f32.mxu0 %v2358
      %3176 = vmatmul.mubr.f32.gmra.mxu0 %v2246
      %v3177 = vpop.f32.mrf.mxu0
      %v3178 = vadd.f32 %v2953, %v3177
      %v3179 = vpop.f32.mrf.mxu0
      %3180 = vmatprep.mubr.f32.mxu0 %v2361
      %3181 = vmatmul.mubr.f32.gmra.mxu0 %v2249
      %v3182 = vpop.f32.mrf.mxu0
      %v3183 = vadd.f32 %v2958, %v3182
      %v3184 = vpop.f32.mrf.mxu0
      %3185 = vmatprep.mubr.f32.mxu0 %v2363
      %3186 = vmatmul.mubr.f32.gmra.mxu0 %v2251
      %v3187 = vpop.f32.mrf.mxu0
      %v3188 = vadd.f32 %v2963, %v3187
      %v3189 = vpop.f32.mrf.mxu0
      %3190 = vmatprep.mubr.f32.mxu0 %v2366
      %3191 = vmatmul.mubr.f32.gmra.mxu0 %v2254
      %v3192 = vpop.f32.mrf.mxu0
      %v3193 = vadd.f32 %v2968, %v3192
      %v3194 = vpop.f32.mrf.mxu0
      %3195 = vmatprep.mubr.f32.mxu0 %v2368
      %3196 = vmatmul.mubr.f32.gmra.mxu0 %v2256
      %v3197 = vpop.f32.mrf.mxu0
      %v3198 = vadd.f32 %v2973, %v3197
      %v3199 = vpop.f32.mrf.mxu0
      %3200 = vmatprep.mubr.f32.mxu0 %v2371
      %3201 = vmatmul.mubr.f32.gmra.mxu0 %v2259
      %v3202 = vpop.f32.mrf.mxu0
      %v3203 = vadd.f32 %v2978, %v3202
      %v3204 = vpop.f32.mrf.mxu0
      %3205 = vmatprep.mubr.f32.mxu0 %v2373
      %3206 = vmatmul.mubr.f32.gmra.mxu0 %v2261
      %v3207 = vpop.f32.mrf.mxu0
      %v3208 = vadd.f32 %v2983, %v3207
      %v3209 = vpop.f32.mrf.mxu0
      %3210 = vmatprep.mubr.f32.mxu0 %v2376
      %3211 = vmatmul.mubr.f32.gmra.mxu0 %v2264
      %v3212 = vpop.f32.mrf.mxu0
      %v3213 = vadd.f32 %v2988, %v3212
      %v3214 = vpop.f32.mrf.mxu0
      %3215 = vmatprep.mubr.f32.mxu0 %v2378
      %3216 = vmatmul.mubr.f32.gmra.mxu0 %v2266
      %v3217 = vpop.f32.mrf.mxu0
      %v3218 = vadd.f32 %v2993, %v3217
      %v3219 = vpop.f32.mrf.mxu0
      %3220 = vmatprep.mubr.f32.mxu0 %v2381
      %3221 = vmatmul.mubr.f32.gmra.mxu0 %v2269
      %v3222 = vpop.f32.mrf.mxu0
      %v3223 = vadd.f32 %v2998, %v3222
      %v3224 = vpop.f32.mrf.mxu0
      %3225 = vmatprep.mubr.f32.mxu0 %v2383
      %3226 = vmatmul.mubr.f32.gmra.mxu0 %v2271
      %v3227 = vpop.f32.mrf.mxu0
      %v3228 = vadd.f32 %v3003, %v3227
      %v3229 = vpop.f32.mrf.mxu0
      %3230 = vmatprep.mubr.f32.mxu0 %v2386
      %3231 = vmatmul.mubr.f32.gmra.mxu0 %v2274
      %v3232 = vpop.f32.mrf.mxu0
      %v3233 = vadd.f32 %v3008, %v3232
      %v3234 = vpop.f32.mrf.mxu0
      %3235 = vmatprep.mubr.f32.mxu0 %v2388
      %3236 = vmatmul.mubr.f32.gmra.mxu0 %v2276
      %v3237 = vpop.f32.mrf.mxu0
      %v3238 = vadd.f32 %v3013, %v3237
      %v3239 = vpop.f32.mrf.mxu0
      %3240 = vmatprep.mubr.f32.mxu0 %v2391
      %3241 = vmatmul.mubr.f32.gmra.mxu0 %v2279
      %v3242 = vpop.f32.mrf.mxu0
      %v3243 = vadd.f32 %v3018, %v3242
      %v3244 = vpop.f32.mrf.mxu0
      %3245 = vmatprep.mubr.f32.mxu0 %v2393
      %3246 = vmatmul.mubr.f32.gmra.mxu0 %v2281
      %v3247 = vpop.f32.mrf.mxu0
      %v3248 = vadd.f32 %v3023, %v3247
      %v3249 = vpop.f32.mrf.mxu0
      %3250 = vmatprep.mubr.f32.mxu0 %v2396
      %3251 = vmatmul.mubr.f32.gmra.mxu0 %v2284
      %v3252 = vpop.f32.mrf.mxu0
      %v3253 = vadd.f32 %v3028, %v3252
      %v3254 = vpop.f32.mrf.mxu0
      %3255 = vmatprep.mubr.f32.mxu0 %v2398
      %3256 = vmatmul.mubr.f32.gmra.mxu0 %v2286
      %v3257 = vpop.f32.mrf.mxu0
      %v3258 = vadd.f32 %v3033, %v3257
      %v3259 = vpop.f32.mrf.mxu0
      %3260 = vmatprep.mubr.f32.mxu0 %v2401
      %3261 = vmatmul.mubr.f32.gmra.mxu0 %v2289
      %v3262 = vpop.f32.mrf.mxu0
      %v3263 = vadd.f32 %v3038, %v3262
      %v3264 = vpop.f32.mrf.mxu0
      %3265 = vmatprep.mubr.f32.mxu0 %v2403
      %3266 = vmatmul.mubr.f32.gmra.mxu0 %v2291
      %v3267 = vpop.f32.mrf.mxu0
      %v3268 = vadd.f32 %v3043, %v3267
      %v3269 = vpop.f32.mrf.mxu0
      %3270 = vmatprep.mubr.f32.mxu0 %v2406
      %3271 = vmatmul.mubr.f32.gmra.mxu0 %v2294
      %v3272 = vpop.f32.mrf.mxu0
      %v3273 = vadd.f32 %v3048, %v3272
      %v3274 = vpop.f32.mrf.mxu0
      %3275 = vmatprep.mubr.f32.mxu0 %v2408
      %3276 = vmatmul.mubr.f32.gmra.mxu0 %v2296
      %v3277 = vpop.f32.mrf.mxu0
      %v3278 = vadd.f32 %v3053, %v3277
      %v3279 = vpop.f32.mrf.mxu0
      %3280 = vmatprep.mubr.f32.mxu0 %v2411
      %3281 = vmatmul.mubr.f32.gmra.mxu0 %v2299
      %v3282 = vpop.f32.mrf.mxu0
      %v3283 = vadd.f32 %v3058, %v3282
      %v3284 = vpop.f32.mrf.mxu0
      %3285 = vmatprep.mubr.f32.mxu0 %v2413
      %3286 = vmatmul.mubr.f32.gmra.mxu0 %v2301
      %v3287 = vpop.f32.mrf.mxu0
      %v3288 = vadd.f32 %v3063, %v3287
      %v3289 = vpop.f32.mrf.mxu0
      %3290 = vmatprep.mubr.f32.mxu0 %v2416
      %3291 = vmatmul.mubr.f32.gmra.mxu0 %v2304
      %v3292 = vpop.f32.mrf.mxu0
      %v3293 = vadd.f32 %v3068, %v3292
      %v3294 = vpop.f32.mrf.mxu0
      %3295 = vmatprep.mubr.f32.mxu0 %v2418
      %3296 = vmatmul.mubr.f32.gmra.mxu0 %v2306
      %v3297 = vpop.f32.mrf.mxu0
      %v3298 = vadd.f32 %v3073, %v3297
      %v3299 = vpop.f32.mrf.mxu0
      %3300 = vmatprep.mubr.f32.mxu0 %v2463
      %3301 = vmatmul.mubr.f32.gmra.mxu0 %v2456
      %v3302 = vpop.f32.mrf.mxu0
      %v3303 = vadd.f32 %v3078, %v3302
      %v3304 = vpop.f32.mrf.mxu0
      %3305 = vmatprep.mubr.f32.mxu0 %v2465
      %3306 = vmatmul.mubr.f32.gmra.mxu0 %v2458
      %v3307 = vpop.f32.mrf.mxu0
      %v3308 = vadd.f32 %v3083, %v3307
      %v3309 = vpop.f32.mrf.mxu0
      %3310 = vdwg.mxu0
      %3311 = vmatprep.subr.mxu0 0.0
      %3312 = vmatpush1.msra.mxu0 %v2596
      %3313 = vmatprep.subr.mxu0 0.0
      %3314 = vmatpush1.msra.mxu0 %v2595
      %3315 = vmatprep.subr.mxu0 0.0
      %3316 = vmatpush1.msra.mxu0 %v2594
      %3317 = vmatprep.subr.mxu0 0.0
      %3318 = vmatpush1.msra.mxu0 %v2593
      %3319 = vmatprep.subr.mxu0 0.0
      %3320 = vmatpush1.msra.mxu0 %v2592
      %3321 = vmatprep.subr.mxu0 0.0
      %3322 = vmatpush1.msra.mxu0 %v2591
      %3323 = vmatprep.subr.mxu0 0.0
      %3324 = vmatpush1.msra.mxu0 %v2590
      %3325 = vmatprep.subr.mxu0 0.0
      %3326 = vmatpush1.msra.mxu0 %v2589
      %3327 = vmatprep.subr.mxu0 0.0
      %3328 = vmatpush1.msra.mxu0 %v2588
      %3329 = vmatprep.subr.mxu0 0.0
      %3330 = vmatpush1.msra.mxu0 %v2587
      %3331 = vmatprep.subr.mxu0 0.0
      %3332 = vmatpush1.msra.mxu0 %v2586
      %3333 = vmatprep.subr.mxu0 0.0
      %3334 = vmatpush1.msra.mxu0 %v2585
      %3335 = vmatprep.subr.mxu0 0.0
      %3336 = vmatpush1.msra.mxu0 %v2584
      %3337 = vmatprep.subr.mxu0 0.0
      %3338 = vmatpush1.msra.mxu0 %v2583
      %3339 = vmatprep.subr.mxu0 0.0
      %3340 = vmatpush1.msra.mxu0 %v2582
      %3341 = vmatprep.subr.mxu0 0.0
      %3342 = vmatpush1.msra.mxu0 %v2581
      %3343 = vmatprep.subr.mxu0 0.0
      %3344 = vmatpush2.msra.mxu0 %v2612
      %3345 = vmatprep.subr.mxu0 0.0
      %3346 = vmatpush2.msra.mxu0 %v2611
      %3347 = vmatprep.subr.mxu0 0.0
      %3348 = vmatpush2.msra.mxu0 %v2610
      %3349 = vmatprep.subr.mxu0 0.0
      %3350 = vmatpush2.msra.mxu0 %v2609
      %3351 = vmatprep.subr.mxu0 0.0
      %3352 = vmatpush2.msra.mxu0 %v2608
      %3353 = vmatprep.subr.mxu0 0.0
      %3354 = vmatpush2.msra.mxu0 %v2607
      %3355 = vmatprep.subr.mxu0 0.0
      %3356 = vmatpush2.msra.mxu0 %v2606
      %3357 = vmatprep.subr.mxu0 0.0
      %3358 = vmatpush2.msra.mxu0 %v2605
      %3359 = vmatprep.subr.mxu0 0.0
      %3360 = vmatpush2.msra.mxu0 %v2604
      %3361 = vmatprep.subr.mxu0 0.0
      %3362 = vmatpush2.msra.mxu0 %v2603
      %3363 = vmatprep.subr.mxu0 0.0
      %3364 = vmatpush2.msra.mxu0 %v2602
      %3365 = vmatprep.subr.mxu0 0.0
      %3366 = vmatpush2.msra.mxu0 %v2601
      %3367 = vmatprep.subr.mxu0 0.0
      %3368 = vmatpush2.msra.mxu0 %v2600
      %3369 = vmatprep.subr.mxu0 0.0
      %3370 = vmatpush2.msra.mxu0 %v2599
      %3371 = vmatprep.subr.mxu0 0.0
      %3372 = vmatpush2.msra.mxu0 %v2598
      %3373 = vmatprep.subr.mxu0 0.0
      %3374 = vmatpush2.msra.mxu0 %v2597
      %3375 = vmatprep.mubr.f32.mxu0 %v2239
      %3376 = vmatmul.mubr.f32.gmra.mxu0 %v2131
      %v3377 = vpop.f32.mrf.mxu0
      %v3378 = vadd.f32 %v3153, %v3377
      %v3379 = vpop.f32.mrf.mxu0
      %3380 = vmatprep.mubr.f32.mxu0 %v2241
      %3381 = vmatmul.mubr.f32.gmra.mxu0 %v2132
      %v3382 = vpop.f32.mrf.mxu0
      %v3383 = vadd.f32 %v3158, %v3382
      %v3384 = vpop.f32.mrf.mxu0
      %3385 = vmatprep.mubr.f32.mxu0 %v2244
      %3386 = vmatmul.mubr.f32.gmra.mxu0 %v2134
      %v3387 = vpop.f32.mrf.mxu0
      %v3388 = vadd.f32 %v3163, %v3387
      %v3389 = vpop.f32.mrf.mxu0
      %3390 = vmatprep.mubr.f32.mxu0 %v2246
      %3391 = vmatmul.mubr.f32.gmra.mxu0 %v2135
      %v3392 = vpop.f32.mrf.mxu0
      %v3393 = vadd.f32 %v3168, %v3392
      %v3394 = vpop.f32.mrf.mxu0
      %3395 = vmatprep.mubr.f32.mxu0 %v2249
      %3396 = vmatmul.mubr.f32.gmra.mxu0 %v2137
      %v3397 = vpop.f32.mrf.mxu0
      %v3398 = vadd.f32 %v3173, %v3397
      %v3399 = vpop.f32.mrf.mxu0
      %3400 = vmatprep.mubr.f32.mxu0 %v2251
      %3401 = vmatmul.mubr.f32.gmra.mxu0 %v2138
      %v3402 = vpop.f32.mrf.mxu0
      %v3403 = vadd.f32 %v3178, %v3402
      %v3404 = vpop.f32.mrf.mxu0
      %3405 = vmatprep.mubr.f32.mxu0 %v2254
      %3406 = vmatmul.mubr.f32.gmra.mxu0 %v2140
      %v3407 = vpop.f32.mrf.mxu0
      %v3408 = vadd.f32 %v3183, %v3407
      %v3409 = vpop.f32.mrf.mxu0
      %3410 = vmatprep.mubr.f32.mxu0 %v2256
      %3411 = vmatmul.mubr.f32.gmra.mxu0 %v2141
      %v3412 = vpop.f32.mrf.mxu0
      %v3413 = vadd.f32 %v3188, %v3412
      %v3414 = vpop.f32.mrf.mxu0
      %3415 = vmatprep.mubr.f32.mxu0 %v2259
      %3416 = vmatmul.mubr.f32.gmra.mxu0 %v2143
      %v3417 = vpop.f32.mrf.mxu0
      %v3418 = vadd.f32 %v3193, %v3417
      %v3419 = vpop.f32.mrf.mxu0
      %3420 = vmatprep.mubr.f32.mxu0 %v2261
      %3421 = vmatmul.mubr.f32.gmra.mxu0 %v2144
      %v3422 = vpop.f32.mrf.mxu0
      %v3423 = vadd.f32 %v3198, %v3422
      %v3424 = vpop.f32.mrf.mxu0
      %3425 = vmatprep.mubr.f32.mxu0 %v2264
      %3426 = vmatmul.mubr.f32.gmra.mxu0 %v2146
      %v3427 = vpop.f32.mrf.mxu0
      %v3428 = vadd.f32 %v3203, %v3427
      %v3429 = vpop.f32.mrf.mxu0
      %3430 = vmatprep.mubr.f32.mxu0 %v2266
      %3431 = vmatmul.mubr.f32.gmra.mxu0 %v2147
      %v3432 = vpop.f32.mrf.mxu0
      %v3433 = vadd.f32 %v3208, %v3432
      %v3434 = vpop.f32.mrf.mxu0
      %3435 = vmatprep.mubr.f32.mxu0 %v2269
      %3436 = vmatmul.mubr.f32.gmra.mxu0 %v2149
      %v3437 = vpop.f32.mrf.mxu0
      %v3438 = vadd.f32 %v3213, %v3437
      %v3439 = vpop.f32.mrf.mxu0
      %3440 = vmatprep.mubr.f32.mxu0 %v2271
      %3441 = vmatmul.mubr.f32.gmra.mxu0 %v2150
      %v3442 = vpop.f32.mrf.mxu0
      %v3443 = vadd.f32 %v3218, %v3442
      %v3444 = vpop.f32.mrf.mxu0
      %3445 = vmatprep.mubr.f32.mxu0 %v2274
      %3446 = vmatmul.mubr.f32.gmra.mxu0 %v2152
      %v3447 = vpop.f32.mrf.mxu0
      %v3448 = vadd.f32 %v3223, %v3447
      %v3449 = vpop.f32.mrf.mxu0
      %3450 = vmatprep.mubr.f32.mxu0 %v2276
      %3451 = vmatmul.mubr.f32.gmra.mxu0 %v2153
      %v3452 = vpop.f32.mrf.mxu0
      %v3453 = vadd.f32 %v3228, %v3452
      %v3454 = vpop.f32.mrf.mxu0
      %3455 = vmatprep.mubr.f32.mxu0 %v2279
      %3456 = vmatmul.mubr.f32.gmra.mxu0 %v2155
      %v3457 = vpop.f32.mrf.mxu0
      %v3458 = vadd.f32 %v3233, %v3457
      %v3459 = vpop.f32.mrf.mxu0
      %3460 = vmatprep.mubr.f32.mxu0 %v2281
      %3461 = vmatmul.mubr.f32.gmra.mxu0 %v2156
      %v3462 = vpop.f32.mrf.mxu0
      %v3463 = vadd.f32 %v3238, %v3462
      %v3464 = vpop.f32.mrf.mxu0
      %3465 = vmatprep.mubr.f32.mxu0 %v2284
      %3466 = vmatmul.mubr.f32.gmra.mxu0 %v2158
      %v3467 = vpop.f32.mrf.mxu0
      %v3468 = vadd.f32 %v3243, %v3467
      %v3469 = vpop.f32.mrf.mxu0
      %3470 = vmatprep.mubr.f32.mxu0 %v2286
      %3471 = vmatmul.mubr.f32.gmra.mxu0 %v2159
      %v3472 = vpop.f32.mrf.mxu0
      %v3473 = vadd.f32 %v3248, %v3472
      %v3474 = vpop.f32.mrf.mxu0
      %3475 = vmatprep.mubr.f32.mxu0 %v2289
      %3476 = vmatmul.mubr.f32.gmra.mxu0 %v2161
      %v3477 = vpop.f32.mrf.mxu0
      %v3478 = vadd.f32 %v3253, %v3477
      %v3479 = vpop.f32.mrf.mxu0
      %3480 = vmatprep.mubr.f32.mxu0 %v2291
      %3481 = vmatmul.mubr.f32.gmra.mxu0 %v2162
      %v3482 = vpop.f32.mrf.mxu0
      %v3483 = vadd.f32 %v3258, %v3482
      %v3484 = vpop.f32.mrf.mxu0
      %3485 = vmatprep.mubr.f32.mxu0 %v2294
      %3486 = vmatmul.mubr.f32.gmra.mxu0 %v2164
      %v3487 = vpop.f32.mrf.mxu0
      %v3488 = vadd.f32 %v3263, %v3487
      %v3489 = vpop.f32.mrf.mxu0
      %3490 = vmatprep.mubr.f32.mxu0 %v2296
      %3491 = vmatmul.mubr.f32.gmra.mxu0 %v2165
      %v3492 = vpop.f32.mrf.mxu0
      %v3493 = vadd.f32 %v3268, %v3492
      %v3494 = vpop.f32.mrf.mxu0
      %3495 = vmatprep.mubr.f32.mxu0 %v2299
      %3496 = vmatmul.mubr.f32.gmra.mxu0 %v2167
      %v3497 = vpop.f32.mrf.mxu0
      %v3498 = vadd.f32 %v3273, %v3497
      %v3499 = vpop.f32.mrf.mxu0
      %3500 = vmatprep.mubr.f32.mxu0 %v2301
      %3501 = vmatmul.mubr.f32.gmra.mxu0 %v2168
      %v3502 = vpop.f32.mrf.mxu0
      %v3503 = vadd.f32 %v3278, %v3502
      %v3504 = vpop.f32.mrf.mxu0
      %3505 = vmatprep.mubr.f32.mxu0 %v2304
      %3506 = vmatmul.mubr.f32.gmra.mxu0 %v2170
      %v3507 = vpop.f32.mrf.mxu0
      %v3508 = vadd.f32 %v3283, %v3507
      %v3509 = vpop.f32.mrf.mxu0
      %3510 = vmatprep.mubr.f32.mxu0 %v2306
      %3511 = vmatmul.mubr.f32.gmra.mxu0 %v2171
      %v3512 = vpop.f32.mrf.mxu0
      %v3513 = vadd.f32 %v3288, %v3512
      %v3514 = vpop.f32.mrf.mxu0
      %3515 = vmatprep.mubr.f32.mxu0 %v2456
      %3516 = vmatmul.mubr.f32.gmra.mxu0 %v2173
      %v3517 = vpop.f32.mrf.mxu0
      %v3518 = vadd.f32 %v3293, %v3517
      %v3519 = vpop.f32.mrf.mxu0
      %3520 = vmatprep.mubr.f32.mxu0 %v2458
      %3521 = vmatmul.mubr.f32.gmra.mxu0 %v2174
      %v3522 = vpop.f32.mrf.mxu0
      %v3523 = vadd.f32 %v3298, %v3522
      %v3524 = vpop.f32.mrf.mxu0
      %3525 = vmatprep.mubr.f32.mxu0 %v2473
      %3526 = vmatmul.mubr.f32.gmra.mxu0 %v2176
      %v3527 = vpop.f32.mrf.mxu0
      %v3528 = vadd.f32 %v3303, %v3527
      %v3529 = vpop.f32.mrf.mxu0
      %3530 = vmatprep.mubr.f32.mxu0 %v2475
      %3531 = vmatmul.mubr.f32.gmra.mxu0 %v2177
      %v3532 = vpop.f32.mrf.mxu0
      %v3533 = vadd.f32 %v3308, %v3532
      %v3534 = vpop.f32.mrf.mxu0
      %3535 = vdwg.mxu0
      %3536 = vmatprep.subr.mxu0 0.0
      %3537 = vmatpush1.msra.mxu0 %v2628
      %3538 = vmatprep.subr.mxu0 0.0
      %3539 = vmatpush1.msra.mxu0 %v2627
      %3540 = vmatprep.subr.mxu0 0.0
      %3541 = vmatpush1.msra.mxu0 %v2626
      %3542 = vmatprep.subr.mxu0 0.0
      %3543 = vmatpush1.msra.mxu0 %v2625
      %3544 = vmatprep.subr.mxu0 0.0
      %3545 = vmatpush1.msra.mxu0 %v2624
      %3546 = vmatprep.subr.mxu0 0.0
      %3547 = vmatpush1.msra.mxu0 %v2623
      %3548 = vmatprep.subr.mxu0 0.0
      %3549 = vmatpush1.msra.mxu0 %v2622
      %3550 = vmatprep.subr.mxu0 0.0
      %3551 = vmatpush1.msra.mxu0 %v2621
      %3552 = vmatprep.subr.mxu0 0.0
      %3553 = vmatpush1.msra.mxu0 %v2620
      %3554 = vmatprep.subr.mxu0 0.0
      %3555 = vmatpush1.msra.mxu0 %v2619
      %3556 = vmatprep.subr.mxu0 0.0
      %3557 = vmatpush1.msra.mxu0 %v2618
      %3558 = vmatprep.subr.mxu0 0.0
      %3559 = vmatpush1.msra.mxu0 %v2617
      %3560 = vmatprep.subr.mxu0 0.0
      %3561 = vmatpush1.msra.mxu0 %v2616
      %3562 = vmatprep.subr.mxu0 0.0
      %3563 = vmatpush1.msra.mxu0 %v2615
      %3564 = vmatprep.subr.mxu0 0.0
      %3565 = vmatpush1.msra.mxu0 %v2614
      %3566 = vmatprep.subr.mxu0 0.0
      %3567 = vmatpush1.msra.mxu0 %v2613
      %3568 = vmatprep.subr.mxu0 0.0
      %3569 = vmatpush2.msra.mxu0 0.0
      %3570 = vmatprep.subr.mxu0 0.0
      %3571 = vmatpush2.msra.mxu0 0.0
      %3572 = vmatprep.subr.mxu0 0.0
      %3573 = vmatpush2.msra.mxu0 0.0
      %3574 = vmatprep.subr.mxu0 0.0
      %3575 = vmatpush2.msra.mxu0 0.0
      %3576 = vmatprep.subr.mxu0 0.0
      %3577 = vmatpush2.msra.mxu0 0.0
      %3578 = vmatprep.subr.mxu0 0.0
      %3579 = vmatpush2.msra.mxu0 0.0
      %3580 = vmatprep.subr.mxu0 0.0
      %3581 = vmatpush2.msra.mxu0 0.0
      %3582 = vmatprep.subr.mxu0 0.0
      %3583 = vmatpush2.msra.mxu0 0.0
      %3584 = vmatprep.subr.mxu0 0.0
      %3585 = vmatpush2.msra.mxu0 0.0
      %3586 = vmatprep.subr.mxu0 0.0
      %3587 = vmatpush2.msra.mxu0 0.0
      %3588 = vmatprep.subr.mxu0 0.0
      %3589 = vmatpush2.msra.mxu0 0.0
      %3590 = vmatprep.subr.mxu0 0.0
      %3591 = vmatpush2.msra.mxu0 0.0
      %3592 = vmatprep.subr.mxu0 0.0
      %3593 = vmatpush2.msra.mxu0 0.0
      %3594 = vmatprep.subr.mxu0 0.0
      %3595 = vmatpush2.msra.mxu0 0.0
      %3596 = vmatprep.subr.mxu0 0.0
      %3597 = vmatpush2.msra.mxu0 0.0
      %3598 = vmatprep.subr.mxu0 0.0
      %3599 = vmatpush2.msra.mxu0 0.0
      %3600 = vmatprep.mubr.f32.mxu0 0.0
      %3601 = vmatmul.mubr.f32.gmra.mxu0 %v2351
      %v3602 = vpop.f32.mrf.mxu0
      %v3603 = vadd.f32 %v3378, %v3602
      %v3604 = vpop.f32.mrf.mxu0
      %3605 = vmatprep.mubr.f32.mxu0 0.0
      %3606 = vmatmul.mubr.f32.gmra.mxu0 %v2353
      %v3607 = vpop.f32.mrf.mxu0
      %v3608 = vadd.f32 %v3383, %v3607
      %v3609 = vpop.f32.mrf.mxu0
      %3610 = vmatprep.mubr.f32.mxu0 0.0
      %3611 = vmatmul.mubr.f32.gmra.mxu0 %v2356
      %v3612 = vpop.f32.mrf.mxu0
      %v3613 = vadd.f32 %v3388, %v3612
      %v3614 = vpop.f32.mrf.mxu0
      %3615 = vmatprep.mubr.f32.mxu0 0.0
      %3616 = vmatmul.mubr.f32.gmra.mxu0 %v2358
      %v3617 = vpop.f32.mrf.mxu0
      %v3618 = vadd.f32 %v3393, %v3617
      %v3619 = vpop.f32.mrf.mxu0
      %3620 = vmatprep.mubr.f32.mxu0 0.0
      %3621 = vmatmul.mubr.f32.gmra.mxu0 %v2361
      %v3622 = vpop.f32.mrf.mxu0
      %v3623 = vadd.f32 %v3398, %v3622
      %v3624 = vpop.f32.mrf.mxu0
      %3625 = vmatprep.mubr.f32.mxu0 0.0
      %3626 = vmatmul.mubr.f32.gmra.mxu0 %v2363
      %v3627 = vpop.f32.mrf.mxu0
      %v3628 = vadd.f32 %v3403, %v3627
      %v3629 = vpop.f32.mrf.mxu0
      %3630 = vmatprep.mubr.f32.mxu0 0.0
      %3631 = vmatmul.mubr.f32.gmra.mxu0 %v2366
      %v3632 = vpop.f32.mrf.mxu0
      %v3633 = vadd.f32 %v3408, %v3632
      %v3634 = vpop.f32.mrf.mxu0
      %3635 = vmatprep.mubr.f32.mxu0 0.0
      %3636 = vmatmul.mubr.f32.gmra.mxu0 %v2368
      %v3637 = vpop.f32.mrf.mxu0
      %v3638 = vadd.f32 %v3413, %v3637
      %v3639 = vpop.f32.mrf.mxu0
      %3640 = vmatprep.mubr.f32.mxu0 0.0
      %3641 = vmatmul.mubr.f32.gmra.mxu0 %v2371
      %v3642 = vpop.f32.mrf.mxu0
      %v3643 = vadd.f32 %v3418, %v3642
      %v3644 = vpop.f32.mrf.mxu0
      %3645 = vmatprep.mubr.f32.mxu0 0.0
      %3646 = vmatmul.mubr.f32.gmra.mxu0 %v2373
      %v3647 = vpop.f32.mrf.mxu0
      %v3648 = vadd.f32 %v3423, %v3647
      %v3649 = vpop.f32.mrf.mxu0
      %3650 = vmatprep.mubr.f32.mxu0 0.0
      %3651 = vmatmul.mubr.f32.gmra.mxu0 %v2376
      %v3652 = vpop.f32.mrf.mxu0
      %v3653 = vadd.f32 %v3428, %v3652
      %v3654 = vpop.f32.mrf.mxu0
      %3655 = vmatprep.mubr.f32.mxu0 0.0
      %3656 = vmatmul.mubr.f32.gmra.mxu0 %v2378
      %v3657 = vpop.f32.mrf.mxu0
      %v3658 = vadd.f32 %v3433, %v3657
      %v3659 = vpop.f32.mrf.mxu0
      %3660 = vmatprep.mubr.f32.mxu0 0.0
      %3661 = vmatmul.mubr.f32.gmra.mxu0 %v2381
      %v3662 = vpop.f32.mrf.mxu0
      %v3663 = vadd.f32 %v3438, %v3662
      %v3664 = vpop.f32.mrf.mxu0
      %3665 = vmatprep.mubr.f32.mxu0 0.0
      %3666 = vmatmul.mubr.f32.gmra.mxu0 %v2383
      %v3667 = vpop.f32.mrf.mxu0
      %v3668 = vadd.f32 %v3443, %v3667
      %v3669 = vpop.f32.mrf.mxu0
      %3670 = vmatprep.mubr.f32.mxu0 0.0
      %3671 = vmatmul.mubr.f32.gmra.mxu0 %v2386
      %v3672 = vpop.f32.mrf.mxu0
      %v3673 = vadd.f32 %v3448, %v3672
      %v3674 = vpop.f32.mrf.mxu0
      %3675 = vmatprep.mubr.f32.mxu0 0.0
      %3676 = vmatmul.mubr.f32.gmra.mxu0 %v2388
      %v3677 = vpop.f32.mrf.mxu0
      %v3678 = vadd.f32 %v3453, %v3677
      %v3679 = vpop.f32.mrf.mxu0
      %3680 = vmatprep.mubr.f32.mxu0 0.0
      %3681 = vmatmul.mubr.f32.gmra.mxu0 %v2391
      %v3682 = vpop.f32.mrf.mxu0
      %v3683 = vadd.f32 %v3458, %v3682
      %v3684 = vpop.f32.mrf.mxu0
      %3685 = vmatprep.mubr.f32.mxu0 0.0
      %3686 = vmatmul.mubr.f32.gmra.mxu0 %v2393
      %v3687 = vpop.f32.mrf.mxu0
      %v3688 = vadd.f32 %v3463, %v3687
      %v3689 = vpop.f32.mrf.mxu0
      %3690 = vmatprep.mubr.f32.mxu0 0.0
      %3691 = vmatmul.mubr.f32.gmra.mxu0 %v2396
      %v3692 = vpop.f32.mrf.mxu0
      %v3693 = vadd.f32 %v3468, %v3692
      %v3694 = vpop.f32.mrf.mxu0
      %3695 = vmatprep.mubr.f32.mxu0 0.0
      %3696 = vmatmul.mubr.f32.gmra.mxu0 %v2398
      %v3697 = vpop.f32.mrf.mxu0
      %v3698 = vadd.f32 %v3473, %v3697
      %v3699 = vpop.f32.mrf.mxu0
      %3700 = vmatprep.mubr.f32.mxu0 0.0
      %3701 = vmatmul.mubr.f32.gmra.mxu0 %v2401
      %v3702 = vpop.f32.mrf.mxu0
      %v3703 = vadd.f32 %v3478, %v3702
      %v3704 = vpop.f32.mrf.mxu0
      %3705 = vmatprep.mubr.f32.mxu0 0.0
      %3706 = vmatmul.mubr.f32.gmra.mxu0 %v2403
      %v3707 = vpop.f32.mrf.mxu0
      %v3708 = vadd.f32 %v3483, %v3707
      %v3709 = vpop.f32.mrf.mxu0
      %3710 = vmatprep.mubr.f32.mxu0 0.0
      %3711 = vmatmul.mubr.f32.gmra.mxu0 %v2406
      %v3712 = vpop.f32.mrf.mxu0
      %v3713 = vadd.f32 %v3488, %v3712
      %v3714 = vpop.f32.mrf.mxu0
      %3715 = vmatprep.mubr.f32.mxu0 0.0
      %3716 = vmatmul.mubr.f32.gmra.mxu0 %v2408
      %v3717 = vpop.f32.mrf.mxu0
      %v3718 = vadd.f32 %v3493, %v3717
      %v3719 = vpop.f32.mrf.mxu0
      %3720 = vmatprep.mubr.f32.mxu0 0.0
      %3721 = vmatmul.mubr.f32.gmra.mxu0 %v2411
      %v3722 = vpop.f32.mrf.mxu0
      %v3723 = vadd.f32 %v3498, %v3722
      %v3724 = vpop.f32.mrf.mxu0
      %3725 = vmatprep.mubr.f32.mxu0 0.0
      %3726 = vmatmul.mubr.f32.gmra.mxu0 %v2413
      %v3727 = vpop.f32.mrf.mxu0
      %v3728 = vadd.f32 %v3503, %v3727
      %v3729 = vpop.f32.mrf.mxu0
      %3730 = vmatprep.mubr.f32.mxu0 0.0
      %3731 = vmatmul.mubr.f32.gmra.mxu0 %v2416
      %v3732 = vpop.f32.mrf.mxu0
      %v3733 = vadd.f32 %v3508, %v3732
      %v3734 = vpop.f32.mrf.mxu0
      %3735 = vmatprep.mubr.f32.mxu0 0.0
      %3736 = vmatmul.mubr.f32.gmra.mxu0 %v2418
      %v3737 = vpop.f32.mrf.mxu0
      %v3738 = vadd.f32 %v3513, %v3737
      %v3739 = vpop.f32.mrf.mxu0
      %3740 = vmatprep.mubr.f32.mxu0 0.0
      %3741 = vmatmul.mubr.f32.gmra.mxu0 %v2463
      %v3742 = vpop.f32.mrf.mxu0
      %v3743 = vadd.f32 %v3518, %v3742
      %v3744 = vpop.f32.mrf.mxu0
      %3745 = vmatprep.mubr.f32.mxu0 0.0
      %3746 = vmatmul.mubr.f32.gmra.mxu0 %v2465
      %v3747 = vpop.f32.mrf.mxu0
      %v3748 = vadd.f32 %v3523, %v3747
      %v3749 = vpop.f32.mrf.mxu0
      %3750 = vmatprep.mubr.f32.mxu0 0.0
      %3751 = vmatmul.mubr.f32.gmra.mxu0 %v2480
      %v3752 = vpop.f32.mrf.mxu0
      %v3753 = vadd.f32 %v3528, %v3752
      %v3754 = vpop.f32.mrf.mxu0
      %3755 = vmatprep.mubr.f32.mxu0 0.0
      %3756 = vmatmul.mubr.f32.gmra.mxu0 %v2482
      %v3757 = vpop.f32.mrf.mxu0
      %v3758 = vadd.f32 %v3533, %v3757
      %v3759 = vpop.f32.mrf.mxu0
      %3760 = vdwg.mxu0
      %v3761 = vld [vmem:[%s273] sm:$0xff]
      %v3762 = vld [vmem:[%s273 + $0x8] sm:$0xff]
      %v3763 = vld [vmem:[%s273 + $0x10] sm:$0xff]
      %v3764 = vld [vmem:[%s273 + $0x18] sm:$0xff]
      %v3765 = vld [vmem:[%s273 + $0x20] sm:$0xff]
      %v3766 = vld [vmem:[%s273 + $0x28] sm:$0xff]
      %v3767 = vld [vmem:[%s273 + $0x30] sm:$0xff]
      %v3768 = vld [vmem:[%s273 + $0x38] sm:$0xff]
      %v3769 = vld [vmem:[%s273 + $0x40] sm:$0xff]
      %v3770 = vld [vmem:[%s273 + $0x48] sm:$0xff]
      %v3771 = vld [vmem:[%s273 + $0x50] sm:$0xff]
      %v3772 = vld [vmem:[%s273 + $0x58] sm:$0xff]
      %v3773 = vld [vmem:[%s273 + $0x60] sm:$0xff]
      %v3774 = vld [vmem:[%s273 + $0x68] sm:$0xff]
      %v3775 = vld [vmem:[%s273 + $0x70] sm:$0xff]
      %v3776 = vld [vmem:[%s273 + $0x78] sm:$0xff]
      %v3777 = vld [vmem:[%s273 + $0x80] sm:$0xff]
      %v3778 = vld [vmem:[%s273 + $0x88] sm:$0xff]
      %v3779 = vld [vmem:[%s273 + $0x90] sm:$0xff]
      %v3780 = vld [vmem:[%s273 + $0x98] sm:$0xff]
      %v3781 = vld [vmem:[%s273 + $0xa0] sm:$0xff]
      %v3782 = vld [vmem:[%s273 + $0xa8] sm:$0xff]
      %v3783 = vld [vmem:[%s273 + $0xb0] sm:$0xff]
      %v3784 = vld [vmem:[%s273 + $0xb8] sm:$0xff]
      %v3785 = vld [vmem:[%s273 + $0xc0] sm:$0xff]
      %v3786 = vld [vmem:[%s273 + $0xc8] sm:$0xff]
      %v3787 = vld [vmem:[%s273 + $0xd0] sm:$0xff]
      %v3788 = vld [vmem:[%s273 + $0xd8] sm:$0xff]
      %v3789 = vld [vmem:[%s273 + $0xe0] sm:$0xff]
      %v3790 = vld [vmem:[%s273 + $0xe8] sm:$0xff]
      %v3791 = vld [vmem:[%s273 + $0xf0] sm:$0xff]
      %v3792 = vld [vmem:[%s273 + $0xf8] sm:$0xff]
      %v3793 = vld [vmem:[%s5] sm:$0xff]
      %v3794 = vld [vmem:[%s5 + $0x8] sm:$0xff]
      %v3795 = vld [vmem:[%s5 + $0x10] sm:$0xff]
      %v3796 = vld [vmem:[%s5 + $0x18] sm:$0xff]
      %v3797 = vld [vmem:[%s5 + $0x20] sm:$0xff]
      %v3798 = vld [vmem:[%s5 + $0x28] sm:$0xff]
      %v3799 = vld [vmem:[%s5 + $0x30] sm:$0xff]
      %v3800 = vld [vmem:[%s5 + $0x38] sm:$0xff]
      %v3801 = vld [vmem:[%s5 + $0x40] sm:$0xff]
      %v3802 = vld [vmem:[%s5 + $0x48] sm:$0xff]
      %v3803 = vld [vmem:[%s5 + $0x50] sm:$0xff]
      %v3804 = vld [vmem:[%s5 + $0x58] sm:$0xff]
      %v3805 = vld [vmem:[%s5 + $0x60] sm:$0xff]
      %v3806 = vld [vmem:[%s5 + $0x68] sm:$0xff]
      %v3807 = vld [vmem:[%s5 + $0x70] sm:$0xff]
      %v3808 = vld [vmem:[%s5 + $0x78] sm:$0xff]
      %v3809 = vld [vmem:[%s6] sm:$0x1]
      %v3811 = vlaneseq
      %v3812 = vshrl.u32 %v3811, 7
      %v3813 = vsub.s32 0, %v3812
      %v3814 = vrot.slane %v3809, %v3813
      %3816 = vmatprep.subr.mxu0 0.0
      %3817 = vmatpush1.msra.mxu0 %v3808
      %3818 = vmatprep.subr.mxu0 0.0
      %3819 = vmatpush1.msra.mxu0 %v3807
      %3820 = vmatprep.subr.mxu0 0.0
      %3821 = vmatpush1.msra.mxu0 %v3806
      %3822 = vmatprep.subr.mxu0 0.0
      %3823 = vmatpush1.msra.mxu0 %v3805
      %3824 = vmatprep.subr.mxu0 0.0
      %3825 = vmatpush1.msra.mxu0 %v3804
      %3826 = vmatprep.subr.mxu0 0.0
      %3827 = vmatpush1.msra.mxu0 %v3803
      %3828 = vmatprep.subr.mxu0 0.0
      %3829 = vmatpush1.msra.mxu0 %v3802
      %3830 = vmatprep.subr.mxu0 0.0
      %3831 = vmatpush1.msra.mxu0 %v3801
      %3832 = vmatprep.subr.mxu0 0.0
      %3833 = vmatpush1.msra.mxu0 %v3800
      %3834 = vmatprep.subr.mxu0 0.0
      %3835 = vmatpush1.msra.mxu0 %v3799
      %3836 = vmatprep.subr.mxu0 0.0
      %3837 = vmatpush1.msra.mxu0 %v3798
      %3838 = vmatprep.subr.mxu0 0.0
      %3839 = vmatpush1.msra.mxu0 %v3797
      %3840 = vmatprep.subr.mxu0 0.0
      %3841 = vmatpush1.msra.mxu0 %v3796
      %3842 = vmatprep.subr.mxu0 0.0
      %3843 = vmatpush1.msra.mxu0 %v3795
      %3844 = vmatprep.subr.mxu0 0.0
      %3845 = vmatpush1.msra.mxu0 %v3794
      %3846 = vmatprep.subr.mxu0 0.0
      %3847 = vmatpush1.msra.mxu0 %v3793
      %3848 = vmatprep.subr.mxu0 0.0
      %3849 = vmatpush2.msra.mxu0 0.0
      %3850 = vmatprep.subr.mxu0 0.0
      %3851 = vmatpush2.msra.mxu0 0.0
      %3852 = vmatprep.subr.mxu0 0.0
      %3853 = vmatpush2.msra.mxu0 0.0
      %3854 = vmatprep.subr.mxu0 0.0
      %3855 = vmatpush2.msra.mxu0 0.0
      %3856 = vmatprep.subr.mxu0 0.0
      %3857 = vmatpush2.msra.mxu0 0.0
      %3858 = vmatprep.subr.mxu0 0.0
      %3859 = vmatpush2.msra.mxu0 0.0
      %3860 = vmatprep.subr.mxu0 0.0
      %3861 = vmatpush2.msra.mxu0 0.0
      %3862 = vmatprep.subr.mxu0 0.0
      %3863 = vmatpush2.msra.mxu0 0.0
      %3864 = vmatprep.subr.mxu0 0.0
      %3865 = vmatpush2.msra.mxu0 0.0
      %3866 = vmatprep.subr.mxu0 0.0
      %3867 = vmatpush2.msra.mxu0 0.0
      %3868 = vmatprep.subr.mxu0 0.0
      %3869 = vmatpush2.msra.mxu0 0.0
      %3870 = vmatprep.subr.mxu0 0.0
      %3871 = vmatpush2.msra.mxu0 0.0
      %3872 = vmatprep.subr.mxu0 0.0
      %3873 = vmatpush2.msra.mxu0 0.0
      %3874 = vmatprep.subr.mxu0 0.0
      %3875 = vmatpush2.msra.mxu0 0.0
      %3876 = vmatprep.subr.mxu0 0.0
      %3877 = vmatpush2.msra.mxu0 0.0
      %3878 = vmatprep.subr.mxu0 0.0
      %3879 = vmatpush2.msra.mxu0 0.0
      %3880 = vmatprep.mubr.f32.mxu0 0.0
      %3881 = vmatmul.mubr.f32.gmra.mxu0 %v3761
      %v3882 = vpop.f32.mrf.mxu0
      %v3883 = vadd.f32 %v3814, %v3882
      %v3884 = vpop.f32.mrf.mxu0
      %3885 = vmatprep.mubr.f32.mxu0 0.0
      %3886 = vmatmul.mubr.f32.gmra.mxu0 %v3762
      %v3887 = vpop.f32.mrf.mxu0
      %v3888 = vadd.f32 %v3814, %v3887
      %v3889 = vpop.f32.mrf.mxu0
      %3890 = vmatprep.mubr.f32.mxu0 0.0
      %3891 = vmatmul.mubr.f32.gmra.mxu0 %v3763
      %v3892 = vpop.f32.mrf.mxu0
      %v3893 = vadd.f32 %v3814, %v3892
      %v3894 = vpop.f32.mrf.mxu0
      %3895 = vmatprep.mubr.f32.mxu0 0.0
      %3896 = vmatmul.mubr.f32.gmra.mxu0 %v3764
      %v3897 = vpop.f32.mrf.mxu0
      %v3898 = vadd.f32 %v3814, %v3897
      %v3899 = vpop.f32.mrf.mxu0
      %3900 = vmatprep.mubr.f32.mxu0 0.0
      %3901 = vmatmul.mubr.f32.gmra.mxu0 %v3765
      %v3902 = vpop.f32.mrf.mxu0
      %v3903 = vadd.f32 %v3814, %v3902
      %v3904 = vpop.f32.mrf.mxu0
      %3905 = vmatprep.mubr.f32.mxu0 0.0
      %3906 = vmatmul.mubr.f32.gmra.mxu0 %v3766
      %v3907 = vpop.f32.mrf.mxu0
      %v3908 = vadd.f32 %v3814, %v3907
      %v3909 = vpop.f32.mrf.mxu0
      %3910 = vmatprep.mubr.f32.mxu0 0.0
      %3911 = vmatmul.mubr.f32.gmra.mxu0 %v3767
      %v3912 = vpop.f32.mrf.mxu0
      %v3913 = vadd.f32 %v3814, %v3912
      %v3914 = vpop.f32.mrf.mxu0
      %3915 = vmatprep.mubr.f32.mxu0 0.0
      %3916 = vmatmul.mubr.f32.gmra.mxu0 %v3768
      %v3917 = vpop.f32.mrf.mxu0
      %v3918 = vadd.f32 %v3814, %v3917
      %v3919 = vpop.f32.mrf.mxu0
      %3920 = vmatprep.mubr.f32.mxu0 0.0
      %3921 = vmatmul.mubr.f32.gmra.mxu0 %v3769
      %v3922 = vpop.f32.mrf.mxu0
      %v3923 = vadd.f32 %v3814, %v3922
      %v3924 = vpop.f32.mrf.mxu0
      %3925 = vmatprep.mubr.f32.mxu0 0.0
      %3926 = vmatmul.mubr.f32.gmra.mxu0 %v3770
      %v3927 = vpop.f32.mrf.mxu0
      %v3928 = vadd.f32 %v3814, %v3927
      %v3929 = vpop.f32.mrf.mxu0
      %3930 = vmatprep.mubr.f32.mxu0 0.0
      %3931 = vmatmul.mubr.f32.gmra.mxu0 %v3771
      %v3932 = vpop.f32.mrf.mxu0
      %v3933 = vadd.f32 %v3814, %v3932
      %v3934 = vpop.f32.mrf.mxu0
      %3935 = vmatprep.mubr.f32.mxu0 0.0
      %3936 = vmatmul.mubr.f32.gmra.mxu0 %v3772
      %v3937 = vpop.f32.mrf.mxu0
      %v3938 = vadd.f32 %v3814, %v3937
      %v3939 = vpop.f32.mrf.mxu0
      %3940 = vmatprep.mubr.f32.mxu0 0.0
      %3941 = vmatmul.mubr.f32.gmra.mxu0 %v3773
      %v3942 = vpop.f32.mrf.mxu0
      %v3943 = vadd.f32 %v3814, %v3942
      %v3944 = vpop.f32.mrf.mxu0
      %3945 = vmatprep.mubr.f32.mxu0 0.0
      %3946 = vmatmul.mubr.f32.gmra.mxu0 %v3774
      %v3947 = vpop.f32.mrf.mxu0
      %v3948 = vadd.f32 %v3814, %v3947
      %v3949 = vpop.f32.mrf.mxu0
      %3950 = vmatprep.mubr.f32.mxu0 0.0
      %3951 = vmatmul.mubr.f32.gmra.mxu0 %v3775
      %v3952 = vpop.f32.mrf.mxu0
      %v3953 = vadd.f32 %v3814, %v3952
      %v3954 = vpop.f32.mrf.mxu0
      %3955 = vmatprep.mubr.f32.mxu0 0.0
      %3956 = vmatmul.mubr.f32.gmra.mxu0 %v3776
      %v3957 = vpop.f32.mrf.mxu0
      %v3958 = vadd.f32 %v3814, %v3957
      %v3959 = vpop.f32.mrf.mxu0
      %3960 = vmatprep.mubr.f32.mxu0 0.0
      %3961 = vmatmul.mubr.f32.gmra.mxu0 %v3777
      %v3962 = vpop.f32.mrf.mxu0
      %v3963 = vadd.f32 %v3814, %v3962
      %v3964 = vpop.f32.mrf.mxu0
      %3965 = vmatprep.mubr.f32.mxu0 0.0
      %3966 = vmatmul.mubr.f32.gmra.mxu0 %v3778
      %v3967 = vpop.f32.mrf.mxu0
      %v3968 = vadd.f32 %v3814, %v3967
      %v3969 = vpop.f32.mrf.mxu0
      %3970 = vmatprep.mubr.f32.mxu0 0.0
      %3971 = vmatmul.mubr.f32.gmra.mxu0 %v3779
      %v3972 = vpop.f32.mrf.mxu0
      %v3973 = vadd.f32 %v3814, %v3972
      %v3974 = vpop.f32.mrf.mxu0
      %3975 = vmatprep.mubr.f32.mxu0 0.0
      %3976 = vmatmul.mubr.f32.gmra.mxu0 %v3780
      %v3977 = vpop.f32.mrf.mxu0
      %v3978 = vadd.f32 %v3814, %v3977
      %v3979 = vpop.f32.mrf.mxu0
      %3980 = vmatprep.mubr.f32.mxu0 0.0
      %3981 = vmatmul.mubr.f32.gmra.mxu0 %v3781
      %v3982 = vpop.f32.mrf.mxu0
      %v3983 = vadd.f32 %v3814, %v3982
      %v3984 = vpop.f32.mrf.mxu0
      %3985 = vmatprep.mubr.f32.mxu0 0.0
      %3986 = vmatmul.mubr.f32.gmra.mxu0 %v3782
      %v3987 = vpop.f32.mrf.mxu0
      %v3988 = vadd.f32 %v3814, %v3987
      %v3989 = vpop.f32.mrf.mxu0
      %3990 = vmatprep.mubr.f32.mxu0 0.0
      %3991 = vmatmul.mubr.f32.gmra.mxu0 %v3783
      %v3992 = vpop.f32.mrf.mxu0
      %v3993 = vadd.f32 %v3814, %v3992
      %v3994 = vpop.f32.mrf.mxu0
      %3995 = vmatprep.mubr.f32.mxu0 0.0
      %3996 = vmatmul.mubr.f32.gmra.mxu0 %v3784
      %v3997 = vpop.f32.mrf.mxu0
      %v3998 = vadd.f32 %v3814, %v3997
      %v3999 = vpop.f32.mrf.mxu0
      %4000 = vmatprep.mubr.f32.mxu0 0.0
      %4001 = vmatmul.mubr.f32.gmra.mxu0 %v3785
      %v4002 = vpop.f32.mrf.mxu0
      %v4003 = vadd.f32 %v3814, %v4002
      %v4004 = vpop.f32.mrf.mxu0
      %4005 = vmatprep.mubr.f32.mxu0 0.0
      %4006 = vmatmul.mubr.f32.gmra.mxu0 %v3786
      %v4007 = vpop.f32.mrf.mxu0
      %v4008 = vadd.f32 %v3814, %v4007
      %v4009 = vpop.f32.mrf.mxu0
      %4010 = vmatprep.mubr.f32.mxu0 0.0
      %4011 = vmatmul.mubr.f32.gmra.mxu0 %v3787
      %v4012 = vpop.f32.mrf.mxu0
      %v4013 = vadd.f32 %v3814, %v4012
      %v4014 = vpop.f32.mrf.mxu0
      %4015 = vmatprep.mubr.f32.mxu0 0.0
      %4016 = vmatmul.mubr.f32.gmra.mxu0 %v3788
      %v4017 = vpop.f32.mrf.mxu0
      %v4018 = vadd.f32 %v3814, %v4017
      %v4019 = vpop.f32.mrf.mxu0
      %4020 = vmatprep.mubr.f32.mxu0 0.0
      %4021 = vmatmul.mubr.f32.gmra.mxu0 %v3789
      %v4022 = vpop.f32.mrf.mxu0
      %v4023 = vadd.f32 %v3814, %v4022
      %v4024 = vpop.f32.mrf.mxu0
      %4025 = vmatprep.mubr.f32.mxu0 0.0
      %4026 = vmatmul.mubr.f32.gmra.mxu0 %v3790
      %v4027 = vpop.f32.mrf.mxu0
      %v4028 = vadd.f32 %v3814, %v4027
      %v4029 = vpop.f32.mrf.mxu0
      %4030 = vmatprep.mubr.f32.mxu0 0.0
      %4031 = vmatmul.mubr.f32.gmra.mxu0 %v3791
      %v4032 = vpop.f32.mrf.mxu0
      %v4033 = vadd.f32 %v3814, %v4032
      %v4034 = vpop.f32.mrf.mxu0
      %4035 = vmatprep.mubr.f32.mxu0 0.0
      %4036 = vmatmul.mubr.f32.gmra.mxu0 %v3792
      %v4037 = vpop.f32.mrf.mxu0
      %v4038 = vadd.f32 %v3814, %v4037
      %v4039 = vpop.f32.mrf.mxu0
      %4040 = vdwg.mxu0
      %v4041 = vadd.f32 %v3603, %v3883
      %v4042 = vadd.f32 %v3608, %v3888
      %v4043 = vadd.f32 %v3613, %v3893
      %v4044 = vadd.f32 %v3618, %v3898
      %v4045 = vadd.f32 %v3623, %v3903
      %v4046 = vadd.f32 %v3628, %v3908
      %v4047 = vadd.f32 %v3633, %v3913
      %v4048 = vadd.f32 %v3638, %v3918
      %v4049 = vadd.f32 %v3643, %v3923
      %v4050 = vadd.f32 %v3648, %v3928
      %v4051 = vadd.f32 %v3653, %v3933
      %v4052 = vadd.f32 %v3658, %v3938
      %v4053 = vadd.f32 %v3663, %v3943
      %v4054 = vadd.f32 %v3668, %v3948
      %v4055 = vadd.f32 %v3673, %v3953
      %v4056 = vadd.f32 %v3678, %v3958
      %v4057 = vadd.f32 %v3683, %v3963
      %v4058 = vadd.f32 %v3688, %v3968
      %v4059 = vadd.f32 %v3693, %v3973
      %v4060 = vadd.f32 %v3698, %v3978
      %v4061 = vadd.f32 %v3703, %v3983
      %v4062 = vadd.f32 %v3708, %v3988
      %v4063 = vadd.f32 %v3713, %v3993
      %v4064 = vadd.f32 %v3718, %v3998
      %v4065 = vadd.f32 %v3723, %v4003
      %v4066 = vadd.f32 %v3728, %v4008
      %v4067 = vadd.f32 %v3733, %v4013
      %v4068 = vadd.f32 %v3738, %v4018
      %v4069 = vadd.f32 %v3743, %v4023
      %v4070 = vadd.f32 %v3748, %v4028
      %v4071 = vadd.f32 %v3753, %v4033
      %v4072 = vadd.f32 %v3758, %v4038
      %v4073 = vmax.f32 %v4041, 0.0
      %v4074 = vmax.f32 %v4042, 0.0
      %v4075 = vmax.f32 %v4043, 0.0
      %v4076 = vmax.f32 %v4044, 0.0
      %v4077 = vmax.f32 %v4045, 0.0
      %v4078 = vmax.f32 %v4046, 0.0
      %v4079 = vmax.f32 %v4047, 0.0
      %v4080 = vmax.f32 %v4048, 0.0
      %v4081 = vmax.f32 %v4049, 0.0
      %v4082 = vmax.f32 %v4050, 0.0
      %v4083 = vmax.f32 %v4051, 0.0
      %v4084 = vmax.f32 %v4052, 0.0
      %v4085 = vmax.f32 %v4053, 0.0
      %v4086 = vmax.f32 %v4054, 0.0
      %v4087 = vmax.f32 %v4055, 0.0
      %v4088 = vmax.f32 %v4056, 0.0
      %v4089 = vmax.f32 %v4057, 0.0
      %v4090 = vmax.f32 %v4058, 0.0
      %v4091 = vmax.f32 %v4059, 0.0
      %v4092 = vmax.f32 %v4060, 0.0
      %v4093 = vmax.f32 %v4061, 0.0
      %v4094 = vmax.f32 %v4062, 0.0
      %v4095 = vmax.f32 %v4063, 0.0
      %v4096 = vmax.f32 %v4064, 0.0
      %v4097 = vmax.f32 %v4065, 0.0
      %v4098 = vmax.f32 %v4066, 0.0
      %v4099 = vmax.f32 %v4067, 0.0
      %v4100 = vmax.f32 %v4068, 0.0
      %v4101 = vmax.f32 %v4069, 0.0
      %v4102 = vmax.f32 %v4070, 0.0
      %v4103 = vmax.f32 %v4071, 0.0
      %v4104 = vmax.f32 %v4072, 0.0
      %4105 = vst [vmem:[%s278] sm:$0xff] %v4073
      %4106 = vst [vmem:[%s278 + $0x8] sm:$0xff] %v4074
      %4107 = vst [vmem:[%s278 + $0x10] sm:$0xff] %v4075
      %4108 = vst [vmem:[%s278 + $0x18] sm:$0xff] %v4076
      %4109 = vst [vmem:[%s278 + $0x20] sm:$0xff] %v4077
      %4110 = vst [vmem:[%s278 + $0x28] sm:$0xff] %v4078
      %4111 = vst [vmem:[%s278 + $0x30] sm:$0xff] %v4079
      %4112 = vst [vmem:[%s278 + $0x38] sm:$0xff] %v4080
      %4113 = vst [vmem:[%s278 + $0x40] sm:$0xff] %v4081
      %4114 = vst [vmem:[%s278 + $0x48] sm:$0xff] %v4082
      %4115 = vst [vmem:[%s278 + $0x50] sm:$0xff] %v4083
      %4116 = vst [vmem:[%s278 + $0x58] sm:$0xff] %v4084
      %4117 = vst [vmem:[%s278 + $0x60] sm:$0xff] %v4085
      %4118 = vst [vmem:[%s278 + $0x68] sm:$0xff] %v4086
      %4119 = vst [vmem:[%s278 + $0x70] sm:$0xff] %v4087
      %4120 = vst [vmem:[%s278 + $0x78] sm:$0xff] %v4088
      %4121 = vst [vmem:[%s278 + $0x80] sm:$0xff] %v4089
      %4122 = vst [vmem:[%s278 + $0x88] sm:$0xff] %v4090
      %4123 = vst [vmem:[%s278 + $0x90] sm:$0xff] %v4091
      %4124 = vst [vmem:[%s278 + $0x98] sm:$0xff] %v4092
      %4125 = vst [vmem:[%s278 + $0xa0] sm:$0xff] %v4093
      %4126 = vst [vmem:[%s278 + $0xa8] sm:$0xff] %v4094
      %4127 = vst [vmem:[%s278 + $0xb0] sm:$0xff] %v4095
      %4128 = vst [vmem:[%s278 + $0xb8] sm:$0xff] %v4096
      %4129 = vst [vmem:[%s278 + $0xc0] sm:$0xff] %v4097
      %4130 = vst [vmem:[%s278 + $0xc8] sm:$0xff] %v4098
      %4131 = vst [vmem:[%s278 + $0xd0] sm:$0xff] %v4099
      %4132 = vst [vmem:[%s278 + $0xd8] sm:$0xff] %v4100
      %4133 = vst [vmem:[%s278 + $0xe0] sm:$0xff] %v4101
      %4134 = vst [vmem:[%s278 + $0xe8] sm:$0xff] %v4102
      %4135 = vst [vmem:[%s278 + $0xf0] sm:$0xff] %v4103
      %4136 = vst [vmem:[%s278 + $0xf8] sm:$0xff] %v4104
      %p4137 = scmp.lt.s32.totalorder %s18, 1
      %s4138 = scalar_select %p4137, %s18, 1
      %s4139 = smul.addr %s4138, 32
      %s4140 = smul.addr %s4139, 8
      %s4141 = scalar_lea.vmem %s7, %s4140
      // Predicated region
      $region49: #{residual_block.1} parent=47 // pred_check
        %p4142 = pneg %p188
      $region50: #{residual_block.1} parent=47 // pred_check_branch
        %4144 = sbr.rel (%p4142) target = $region52
      $region51: #{residual_block.1} parent=47 // pred_region
        _
      $region52: #{residual_block.1} parent=47 // pred_fallthru
        _
    $region48: #{residual_block.1} parent=5 // pred_fallthru
      _
    %p4145 = scmp.le.s32.totalorder 2, %s13
    // Predicated region
    $region53: #{residual_block.1} parent=5 // pred_check
      %p4146 = pneg %p4145
    $region54: #{residual_block.1} parent=5 // pred_check_branch
      %4148 = sbr.rel (%p4146) target = $region56
    $region55: #{residual_block.1} parent=5 // pred_region
      %s4149 = ssub.s32 %s13, 2
      // Predicated region
      $region57: #{residual_block.1} parent=55 // pred_check
        %p4150 = pneg %p194
      $region58: #{residual_block.1} parent=55 // pred_check_branch
        %4152 = sbr.rel (%p4150) target = $region60
      $region59: #{residual_block.1} parent=55 // pred_region
        %p4153 = scmp.lt.s32.totalorder %s19, 1
        %s4154 = scalar_select %p4153, %s19, 1
        %s4155 = smul.addr %s4154, 32
        %s4156 = smul.addr %s4155, 8
        %s4157 = scalar_lea.vmem %s7, %s4156
      $region60: #{residual_block.1} parent=55 // pred_fallthru
        _
    $region56: #{residual_block.1} parent=5 // pred_fallthru
      _
  $region6: #{residual_block.1} parent=0 // loop_footer
    %s17 = sadd.s32 1, %s13
  $region7: #{residual_block.1} parent=0 // loop_footer_branch
    %12 = sbr.rel target = $region3
  $region8: #{residual_block.1} parent=0 // loop_exit
    _

</llo_original>
